<compile_context>
chip_gen: v7x
topology: tpu7x:2x2x1
jax: 0.10.0
libtpu: 0.0.40
codegen_flags: <defaults>
</compile_context>

<pallas_src>
import functools

import jax
import jax.numpy as jnp
from jax.experimental import pallas as pl
from jax.experimental.pallas import tpu as pltpu

_NEG_INF = -1e30  # finite "masked" score; identical constant used in the reference


def _layer_norm(y, g, b, eps):
    mu = jnp.mean(y, axis=-1, keepdims=True)
    var = jnp.mean((y - mu) ** 2, axis=-1, keepdims=True)
    return (y - mu) * jax.lax.rsqrt(var + eps) * g + b


# ---------------------------------------------------------------------------
# Fused kernel: QKV proj -> masked softmax attention -> O proj -> residual +
# LayerNorm -> *mask -> Conv1d -> ReLU -> Conv1d -> residual + LayerNorm ->
# *mask.  One batch element per grid step; attention output stays in VMEM.
# ---------------------------------------------------------------------------
def _layer_kernel(x_ref, mk_ref, mr_ref,
                  wqkv_ref, bqkv_ref, wo_ref, g1_ref, beta1_ref,
                  w1_ref, b1_ref, w2_ref, b2_ref, g2_ref, beta2_ref,
                  o_ref,
                  ctx_ref, ypad_ref, hpad_ref,
                  *, n_head, d_head, scale, K, base, eps):
    T = x_ref.shape[1]
    D = x_ref.shape[2]
    H, Dh = n_head, d_head
    hd = H * Dh
    pad = K // 2
    d_inner = w1_ref.shape[2]
    cdt = ctx_ref.dtype          # MXU compute dtype (bf16 when model is bf16, else f32)

    x = x_ref[0]                                                       # (T, D)

    # ---- QKV projection: one MXU matmul, f32 accumulation ------------------
    qkv = jnp.dot(x, wqkv_ref[...], preferred_element_type=jnp.float32)
    qkv = qkv + bqkv_ref[...]                                          # (T, 3*H*Dh) f32

    # ---- key mask as an additive bias, computed ONCE (not per head) --------
    key_bias = jnp.where(mk_ref[0] > 0, 0.0, _NEG_INF).astype(jnp.float32)   # (1, T)

    # ---- per-head attention; contexts land in a (T, H*Dh) VMEM buffer ------
    for h in range(H):                                                 # H small & static
        q = (qkv[:, h * Dh:(h + 1) * Dh] * scale).astype(cdt)          # scale folded into q
        kmat = qkv[:, hd + h * Dh: hd + (h + 1) * Dh].astype(cdt)
        v = qkv[:, 2 * hd + h * Dh: 2 * hd + (h + 1) * Dh].astype(cdt)

        s = jax.lax.dot_general(q, kmat, (((1,), (1,)), ((), ())),
                                preferred_element_type=jnp.float32)    # (T, T)
        s = s + key_bias                                               # cheap add per head
        m = jnp.max(s, axis=-1, keepdims=True)
        p = jnp.exp(s - m)                                             # unnormalized
        inv = pl.reciprocal(jnp.sum(p, axis=-1, keepdims=True), approx=True)   # EUP
        ctx = jnp.dot(p.astype(cdt), v, preferred_element_type=jnp.float32) * inv
        ctx_ref[:, h * Dh:(h + 1) * Dh] = ctx.astype(cdt)

    # ---- single O-projection with K = H*Dh ----------------------------------
    attn_out = jnp.dot(ctx_ref[...], wo_ref[...],
                       preferred_element_type=jnp.float32)             # (T, D)

    y = x.astype(jnp.float32) + attn_out                               # residual
    y = _layer_norm(y, g1_ref[...], beta1_ref[...], eps)               # post-norm
    y = y * mr_ref[0]                                                  # output *= mask (T,1)

    # ---- PositionwiseConvFF, fused (no HBM round-trip) ----------------------
    # conv1 halo: valid rows at 8-aligned offset `base`; only halo rows zeroed.
    if pad > 0:
        ypad_ref[pl.ds(base - pad, pad), :] = jnp.zeros((pad, D), ypad_ref.dtype)
        ypad_ref[pl.ds(base + T, pad), :] = jnp.zeros((pad, D), ypad_ref.dtype)
    ypad_ref[pl.ds(base, T), :] = y.astype(ypad_ref.dtype)

    acc1 = jnp.zeros((T, d_inner), jnp.float32)
    for ki in range(K):                                                # K per-tap MXU matmuls
        acc1 = acc1 + jnp.dot(ypad_ref[pl.ds(base - pad + ki, T), :], w1_ref[ki],
                              preferred_element_type=jnp.float32)
    hid = jnp.maximum(acc1 + b1_ref[...], 0.0)                         # bias + ReLU

    if pad > 0:
        hpad_ref[pl.ds(base - pad, pad), :] = jnp.zeros((pad, d_inner), hpad_ref.dtype)
        hpad_ref[pl.ds(base + T, pad), :] = jnp.zeros((pad, d_inner), hpad_ref.dtype)
    hpad_ref[pl.ds(base, T), :] = hid.astype(hpad_ref.dtype)

    acc2 = jnp.zeros((T, D), jnp.float32)
    for ki in range(K):
        acc2 = acc2 + jnp.dot(hpad_ref[pl.ds(base - pad + ki, T), :], w2_ref[ki],
                              preferred_element_type=jnp.float32)
    acc2 = acc2 + b2_ref[...]

    out = _layer_norm(y + acc2, g2_ref[...], beta2_ref[...], eps)      # residual + LN2
    out = out * mr_ref[0]                                              # output *= mask
    o_ref[0] = out.astype(o_ref.dtype)


# ---------------------------------------------------------------------------
# Wrapper
# ---------------------------------------------------------------------------
def _round_up(a, m):
    return ((a + m - 1) // m) * m


def _tile_bytes(shape, dtype):
    """Bytes of one VMEM buffer, padded to the (8,128) layout tile."""
    item = jnp.dtype(dtype).itemsize
    dims = list(shape)
    dims[-1] = _round_up(dims[-1], 128)
    if len(dims) >= 2:
        dims[-2] = _round_up(dims[-2], 8 * max(1, 4 // item))
    n = 1
    for d in dims:
        n *= d
    return n * item


def transformer_layer_forward(x, mask, params, *, n_head, d_head, kernel_size,
                              eps=1e-5):
    """TransformerLayer.forward. x: (B, T, d_model); mask: (B, T, 1), True/1 = valid."""
    B, T, D = x.shape
    H, Dh = n_head, d_head
    hd = H * Dh
    hd3 = 3 * hd
    K = kernel_size
    pad = K // 2
    d_inner = params["w1_kio"].shape[2]
    assert K % 2 == 1, "PositionwiseConvFF assumes odd kernel_size"

    maskf = mask.astype(x.dtype)                       # (B, T, 1)  row mask
    mask_key = jnp.transpose(maskf, (0, 2, 1))         # (B, 1, T)  key mask
    scale = 1.0 / (d_head ** 0.5)
    base = _round_up(pad, 8) if pad > 0 else 0         # 8-aligned start row in scratches

    # bf16 MXU path when the model runs in bf16; otherwise f32.
    compute_dtype = jnp.bfloat16 if x.dtype == jnp.bfloat16 else jnp.float32

    kernel = functools.partial(_layer_kernel, n_head=H, d_head=Dh, scale=scale,
                               K=K, base=base, eps=eps)

    # ---- explicit VMEM budget from the real block/scratch footprint ---------
    block_defs = [
        ((1, T, D), x.dtype), ((1, 1, T), maskf.dtype), ((1, T, 1), maskf.dtype),
        ((D, hd3), params["wqkv_t"].dtype), ((1, hd3), params["bqkv"].dtype),
        ((hd, D), params["wo_t"].dtype),
        ((1, D), params["ln1_g"].dtype), ((1, D), params["ln1_b"].dtype),
        ((K, D, d_inner), params["w1_kio"].dtype), ((1, d_inner), params["b1"].dtype),
        ((K, d_inner, D), params["w2_kio"].dtype), ((1, D), params["b2"].dtype),
        ((1, D), params["ln2_g"].dtype), ((1, D), params["ln2_b"].dtype),
        ((1, T, D), x.dtype),                           # output block
    ]
    scratch_defs = [((T, hd), compute_dtype),
                    ((base + T + pad, D), compute_dtype),
                    ((base + T + pad, d_inner), compute_dtype)]
    vmem_limit = (2 * sum(_tile_bytes(s, d) for s, d in block_defs)     # double-buffered
                  + sum(_tile_bytes(s, d) for s, d in scratch_defs)
                  + (4 << 20))                                          # headroom
    vmem_limit = int(min(vmem_limit, 64 << 20))                         # <= v7x physical

    # ---- advisory cost estimate (real dtypes, all operands) -----------------
    operands = (x, mask_key, maskf, params["wqkv_t"], params["bqkv"], params["wo_t"],
                params["ln1_g"], params["ln1_b"], params["w1_kio"], params["b1"],
                params["w2_kio"], params["b2"], params["ln2_g"], params["ln2_b"])
    bytes_accessed = sum(int(a.size) * jnp.dtype(a.dtype).itemsize for a in operands)
    bytes_accessed += B * T * D * jnp.dtype(x.dtype).itemsize           # output
    flops = (2 * B * T * D * hd3 + 4 * B * H * T * T * Dh + 2 * B * T * hd * D
             + 4 * B * T * K * D * d_inner)
    transcendentals = B * H * T * T + B * H * T + 2 * B * T

    out = pl.pallas_call(
        kernel,
        out_shape=jax.ShapeDtypeStruct((B, T, D), x.dtype),
        grid_spec=pltpu.PrefetchScalarGridSpec(
            num_scalar_prefetch=0,
            grid=(B,),                                  # v7x: keep B >= 2 for both TCs
            in_specs=[
                pl.BlockSpec((1, T, D), lambda b: (b, 0, 0)),        # x
                pl.BlockSpec((1, 1, T), lambda b: (b, 0, 0)),        # key mask
                pl.BlockSpec((1, T, 1), lambda b: (b, 0, 0)),        # row mask
                pl.BlockSpec((D, hd3), lambda b: (0, 0)),            # Wqkv^T
                pl.BlockSpec((1, hd3), lambda b: (0, 0)),            # bqkv
                pl.BlockSpec((hd, D), lambda b: (0, 0)),             # Wo^T
                pl.BlockSpec((1, D), lambda b: (0, 0)),              # ln1 gamma
                pl.BlockSpec((1, D), lambda b: (0, 0)),              # ln1 beta
                pl.BlockSpec((K, D, d_inner), lambda b: (0, 0, 0)),  # W1 (K, Cin, Cout)
                pl.BlockSpec((1, d_inner), lambda b: (0, 0)),        # b1
                pl.BlockSpec((K, d_inner, D), lambda b: (0, 0, 0)),  # W2 (K, Cin, Cout)
                pl.BlockSpec((1, D), lambda b: (0, 0)),              # b2
                pl.BlockSpec((1, D), lambda b: (0, 0)),              # ln2 gamma
                pl.BlockSpec((1, D), lambda b: (0, 0)),              # ln2 beta
            ],
            out_specs=pl.BlockSpec((1, T, D), lambda b: (b, 0, 0)),
            scratch_shapes=[
                pltpu.VMEM((T, hd), compute_dtype),                        # per-head ctx
                pltpu.VMEM((base + T + pad, D), compute_dtype),            # padded attn out
                pltpu.VMEM((base + T + pad, d_inner), compute_dtype),      # padded hidden
            ],
        ),
        compiler_params=pltpu.CompilerParams(
            dimension_semantics=("parallel",),
            vmem_limit_bytes=vmem_limit,
        ),
        cost_estimate=pl.CostEstimate(flops=flops, transcendentals=transcendentals,
                                      bytes_accessed=bytes_accessed),
    )(x, mask_key, maskf, params["wqkv_t"], params["bqkv"], params["wo_t"],
      params["ln1_g"], params["ln1_b"], params["w1_kio"], params["b1"],
      params["w2_kio"], params["b2"], params["ln2_g"], params["ln2_b"])
    return out


# ---------------------------------------------------------------------------
# Pure-JAX reference (mirrors the PyTorch forward, post-norm, eval mode)
# ---------------------------------------------------------------------------
def _reference(x, mask, p, *, n_head, d_head, kernel_size, eps=1e-5):
    B, T, D = x.shape
    H, Dh = n_head, d_head
    maskf = mask.astype(x.dtype)                          # (B, T, 1)
    scale = 1.0 / (d_head ** 0.5)

    qkv = x @ p["wqkv_t"] + p["bqkv"]
    q, k, v = jnp.split(qkv, 3, axis=-1)
    heads = lambda a: a.reshape(B, T, H, Dh).transpose(0, 2, 1, 3)
    qh, kh, vh = heads(q), heads(k), heads(v)
    s = jnp.einsum("bhqd,bhkd->bhqk", qh, kh) * scale
    key_m = maskf[:, :, 0][:, None, None, :]              # (B, 1, 1, T)
    s = jnp.where(key_m > 0, s, _NEG_INF)
    pr = jax.nn.softmax(s, axis=-1)
    ctx = jnp.einsum("bhqk,bhkd->bhqd", pr, vh)
    ctx = ctx.transpose(0, 2, 1, 3).reshape(B, T, H * Dh)
    attn_out = ctx @ p["wo_t"]
    y = _layer_norm(x + attn_out, p["ln1_g"], p["ln1_b"], eps) * maskf

    pad = kernel_size // 2
    h = jax.lax.conv_general_dilated(y, p["w1_kio"], window_strides=(1,),
                                     padding=[(pad, pad)],
                                     dimension_numbers=("NWC", "WIO", "NWC")) + p["b1"]
    h = jnp.maximum(h, 0.0)
    c = jax.lax.conv_general_dilated(h, p["w2_kio"], window_strides=(1,),
                                     padding=[(pad, pad)],
                                     dimension_numbers=("NWC", "WIO", "NWC")) + p["b2"]
    return _layer_norm(y + c, p["ln2_g"], p["ln2_b"], eps) * maskf


if __name__ == "__main__":
    key = jax.random.PRNGKey(0)
    ks = jax.random.split(key, 12)

    # Small but lane-dense shapes: d_model = H*Dh = 128, d_inner = 256, K = 3.
    B, T = 2, 16
    n_head, d_head = 4, 32
    d_model, d_inner, kernel_size = 128, 256, 3
    H, Dh = n_head, d_head
    hd3 = 3 * H * Dh

    x = jax.random.normal(ks[0], (B, T, d_model), dtype=jnp.float32)
    lengths = jnp.array([16, 11])
    mask = (jnp.arange(T)[None, :] < lengths[:, None])[:, :, None]    # (B, T, 1) bool

    def uni(k, shape, fan_in):
        b = (1.0 / fan_in) ** 0.5
        return jax.random.uniform(k, shape, jnp.float32, -b, b)

    params = {
        "wqkv_t": uni(ks[1], (d_model, hd3), d_model),                 # Linear weight^T
        "bqkv":   uni(ks[2], (1, hd3), d_model),
        "wo_t":   uni(ks[3], (H * Dh, d_model), H * Dh),               # o_net (no bias)
        "ln1_g":  1.0 + 0.1 * jax.random.normal(ks[8], (1, d_model), jnp.float32),
        "ln1_b":  0.1 * jax.random.normal(ks[9], (1, d_model), jnp.float32),
        # Conv weights pre-transposed to (K, C_in, C_out): K off the lane axis.
        "w1_kio": uni(ks[4], (kernel_size, d_model, d_inner), d_model * kernel_size),
        "b1":     uni(ks[5], (1, d_inner), d_model * kernel_size),
        "w2_kio": uni(ks[6], (kernel_size, d_inner, d_model), d_inner * kernel_size),
        "b2":     uni(ks[7], (1, d_model), d_inner * kernel_size),
        "ln2_g":  1.0 + 0.1 * jax.random.normal(ks[10], (1, d_model), jnp.float32),
        "ln2_b":  0.1 * jax.random.normal(ks[11], (1, d_model), jnp.float32),
    }

    fwd = jax.jit(functools.partial(transformer_layer_forward, n_head=n_head,
                                    d_head=d_head, kernel_size=kernel_size))
    out = jax.block_until_ready(fwd(x, mask, params))

    ref = _reference(x, mask, params, n_head=n_head, d_head=d_head,
                     kernel_size=kernel_size)
    # Tolerance loosened slightly because the kernel uses the EUP approx reciprocal
    # for the (deferred) softmax normalization.
    if not jnp.allclose(out, ref, atol=2e-3, rtol=2e-3):
        raise AssertionError("Pallas TransformerLayer mismatch vs reference")

    print("KERNEL_OK")
</pallas_src>

<mosaic_0001>
module attributes {stable_mosaic.version = 11 : i64} {
  func.func @_layer_kernel(%arg0: i32, %arg1: memref<1x16x128xf32, #tpu.memory_space<vmem>>, %arg2: memref<1x1x16xf32, #tpu.memory_space<vmem>>, %arg3: memref<1x16x1xf32, #tpu.memory_space<vmem>>, %arg4: memref<128x384xf32, #tpu.memory_space<vmem>>, %arg5: memref<1x384xf32, #tpu.memory_space<vmem>>, %arg6: memref<128x128xf32, #tpu.memory_space<vmem>>, %arg7: memref<1x128xf32, #tpu.memory_space<vmem>>, %arg8: memref<1x128xf32, #tpu.memory_space<vmem>>, %arg9: memref<3x128x256xf32, #tpu.memory_space<vmem>>, %arg10: memref<1x256xf32, #tpu.memory_space<vmem>>, %arg11: memref<3x256x128xf32, #tpu.memory_space<vmem>>, %arg12: memref<1x128xf32, #tpu.memory_space<vmem>>, %arg13: memref<1x128xf32, #tpu.memory_space<vmem>>, %arg14: memref<1x128xf32, #tpu.memory_space<vmem>>, %arg15: memref<1x16x128xf32, #tpu.memory_space<vmem>>, %arg16: memref<16x128xf32, #tpu.memory_space<vmem>>, %arg17: memref<25x128xf32, #tpu.memory_space<vmem>>, %arg18: memref<25x256xf32, #tpu.memory_space<vmem>>) attributes {dimension_semantics = [#tpu.dimension_semantics<parallel>], iteration_bounds = array<i64: 2>, scalar_prefetch = 0 : i64, scratch_operands = 3 : i64, tpu.core_type = #tpu.core_type<tc>, window_params = [{transform_indices = @transform_0, window_bounds = array<i64: 1, 16, 128>}, {transform_indices = @transform_1, window_bounds = array<i64: 1, 1, 16>}, {transform_indices = @transform_2, window_bounds = array<i64: 1, 16, 1>}, {pipeline_mode = #tpu.pipeline_mode<synchronous>, transform_indices = @transform_3, window_bounds = array<i64: 128, 384>}, {pipeline_mode = #tpu.pipeline_mode<synchronous>, transform_indices = @transform_4, window_bounds = array<i64: 1, 384>}, {pipeline_mode = #tpu.pipeline_mode<synchronous>, transform_indices = @transform_5, window_bounds = array<i64: 128, 128>}, {pipeline_mode = #tpu.pipeline_mode<synchronous>, transform_indices = @transform_6, window_bounds = array<i64: 1, 128>}, {pipeline_mode = #tpu.pipeline_mode<synchronous>, transform_indices = @transform_7, window_bounds = array<i64: 1, 128>}, {pipeline_mode = #tpu.pipeline_mode<synchronous>, transform_indices = @transform_8, window_bounds = array<i64: 3, 128, 256>}, {pipeline_mode = #tpu.pipeline_mode<synchronous>, transform_indices = @transform_9, window_bounds = array<i64: 1, 256>}, {pipeline_mode = #tpu.pipeline_mode<synchronous>, transform_indices = @transform_10, window_bounds = array<i64: 3, 256, 128>}, {pipeline_mode = #tpu.pipeline_mode<synchronous>, transform_indices = @transform_11, window_bounds = array<i64: 1, 128>}, {pipeline_mode = #tpu.pipeline_mode<synchronous>, transform_indices = @transform_12, window_bounds = array<i64: 1, 128>}, {pipeline_mode = #tpu.pipeline_mode<synchronous>, transform_indices = @transform_13, window_bounds = array<i64: 1, 128>}, {transform_indices = @transform_14, window_bounds = array<i64: 1, 16, 128>}]} {
    %c0 = arith.constant 0 : index
    %c0_0 = arith.constant 0 : index
    %c0_1 = arith.constant 0 : index
    %0 = vector.load %arg1[%c0, %c0_0, %c0_1] : memref<1x16x128xf32, #tpu.memory_space<vmem>>, vector<1x16x128xf32>
    %1 = vector.shape_cast %0 : vector<1x16x128xf32> to vector<16x128xf32>
    %c0_2 = arith.constant 0 : index
    %c0_3 = arith.constant 0 : index
    %2 = vector.load %arg4[%c0_2, %c0_3] : memref<128x384xf32, #tpu.memory_space<vmem>>, vector<128x384xf32>
    %cst = arith.constant dense<0.000000e+00> : vector<16x384xf32>
    %3 = tpu.matmul %1, %2, %cst {dimension_numbers = #tpu.dot_dimension_numbers<[1], [0], [0], [1], [0, 0, 1, 1], [], []>} : vector<16x128xf32>, vector<128x384xf32>, vector<16x384xf32> -> vector<16x384xf32>
    %c0_4 = arith.constant 0 : index
    %c0_5 = arith.constant 0 : index
    %4 = vector.load %arg5[%c0_4, %c0_5] : memref<1x384xf32, #tpu.memory_space<vmem>>, vector<1x384xf32>
    %5 = vector.broadcast %4 : vector<1x384xf32> to vector<16x384xf32>
    %6 = arith.addf %3, %5 : vector<16x384xf32>
    %c0_6 = arith.constant 0 : index
    %c0_7 = arith.constant 0 : index
    %c0_8 = arith.constant 0 : index
    %7 = vector.load %arg2[%c0_6, %c0_7, %c0_8] : memref<1x1x16xf32, #tpu.memory_space<vmem>>, vector<1x1x16xf32>
    %8 = vector.shape_cast %7 : vector<1x1x16xf32> to vector<1x16xf32>
    %cst_9 = arith.constant 0.000000e+00 : f32
    %9 = vector.broadcast %cst_9 : f32 to vector<1x16xf32>
    %10 = arith.cmpf ogt, %8, %9 : vector<1x16xf32>
    %cst_10 = arith.constant 0.000000e+00 : f32
    %cst_11 = arith.constant -1.000000e+30 : f32
    %11 = vector.broadcast %cst_10 : f32 to vector<1x16xf32>
    %12 = vector.broadcast %cst_11 : f32 to vector<1x16xf32>
    %13 = arith.select %10, %11, %12 : vector<1x16xi1>, vector<1x16xf32>
    %14 = vector.extract_strided_slice %6 {offsets = [0, 0], sizes = [16, 32], strides = [1, 1]} : vector<16x384xf32> to vector<16x32xf32>
    %cst_12 = arith.constant 0.176776692 : f32
    %15 = vector.broadcast %cst_12 : f32 to vector<16x32xf32>
    %16 = arith.mulf %14, %15 : vector<16x32xf32>
    %17 = vector.extract_strided_slice %6 {offsets = [0, 128], sizes = [16, 32], strides = [1, 1]} : vector<16x384xf32> to vector<16x32xf32>
    %18 = vector.extract_strided_slice %6 {offsets = [0, 256], sizes = [16, 32], strides = [1, 1]} : vector<16x384xf32> to vector<16x32xf32>
    %cst_13 = arith.constant dense<0.000000e+00> : vector<16x16xf32>
    %19 = tpu.matmul %16, %17, %cst_13 {dimension_numbers = #tpu.dot_dimension_numbers<[1], [1], [0], [0], [0, 0, 1, 0], [], []>} : vector<16x32xf32>, vector<16x32xf32>, vector<16x16xf32> -> vector<16x16xf32>
    %20 = vector.broadcast %13 : vector<1x16xf32> to vector<16x16xf32>
    %21 = arith.addf %19, %20 : vector<16x16xf32>
    %cst_14 = arith.constant dense<0xFF800000> : vector<16xf32>
    %22 = vector.multi_reduction <maximumf>, %21, %cst_14 [1] : vector<16x16xf32> to vector<16xf32>
    %23 = vector.shape_cast %22 : vector<16xf32> to vector<16x1xf32>
    %24 = vector.broadcast %23 : vector<16x1xf32> to vector<16x16xf32>
    %25 = arith.subf %21, %24 : vector<16x16xf32>
    %26 = math.exp %25 : vector<16x16xf32>
    %cst_15 = arith.constant dense<0.000000e+00> : vector<16xf32>
    %27 = vector.multi_reduction <add>, %26, %cst_15 [1] : vector<16x16xf32> to vector<16xf32>
    %28 = vector.shape_cast %27 : vector<16xf32> to vector<16x1xf32>
    %29 = tpu.reciprocal %28 {approx = true} : vector<16x1xf32> -> vector<16x1xf32>
    %cst_16 = arith.constant dense<0.000000e+00> : vector<16x32xf32>
    %30 = tpu.matmul %26, %18, %cst_16 {dimension_numbers = #tpu.dot_dimension_numbers<[1], [0], [0], [1], [0, 0, 1, 1], [], []>} : vector<16x16xf32>, vector<16x32xf32>, vector<16x32xf32> -> vector<16x32xf32>
    %31 = vector.broadcast %29 : vector<16x1xf32> to vector<16x32xf32>
    %32 = arith.mulf %30, %31 : vector<16x32xf32>
    %c0_17 = arith.constant 0 : index
    %c0_18 = arith.constant 0 : index
    %33 = vector.load %arg16[%c0_17, %c0_18] : memref<16x128xf32, #tpu.memory_space<vmem>>, vector<16x32xf32>
    tpu.vector_store %arg16[%c0_17, %c0_18], %32 {strides = array<i32>} : memref<16x128xf32, #tpu.memory_space<vmem>>, vector<16x32xf32>,
    %34 = vector.extract_strided_slice %6 {offsets = [0, 32], sizes = [16, 32], strides = [1, 1]} : vector<16x384xf32> to vector<16x32xf32>
    %cst_19 = arith.constant 0.176776692 : f32
    %35 = vector.broadcast %cst_19 : f32 to vector<16x32xf32>
    %36 = arith.mulf %34, %35 : vector<16x32xf32>
    %37 = vector.extract_strided_slice %6 {offsets = [0, 160], sizes = [16, 32], strides = [1, 1]} : vector<16x384xf32> to vector<16x32xf32>
    %38 = vector.extract_strided_slice %6 {offsets = [0, 288], sizes = [16, 32], strides = [1, 1]} : vector<16x384xf32> to vector<16x32xf32>
    %cst_20 = arith.constant dense<0.000000e+00> : vector<16x16xf32>
    %39 = tpu.matmul %36, %37, %cst_20 {dimension_numbers = #tpu.dot_dimension_numbers<[1], [1], [0], [0], [0, 0, 1, 0], [], []>} : vector<16x32xf32>, vector<16x32xf32>, vector<16x16xf32> -> vector<16x16xf32>
    %40 = vector.broadcast %13 : vector<1x16xf32> to vector<16x16xf32>
    %41 = arith.addf %39, %40 : vector<16x16xf32>
    %cst_21 = arith.constant dense<0xFF800000> : vector<16xf32>
    %42 = vector.multi_reduction <maximumf>, %41, %cst_21 [1] : vector<16x16xf32> to vector<16xf32>
    %43 = vector.shape_cast %42 : vector<16xf32> to vector<16x1xf32>
    %44 = vector.broadcast %43 : vector<16x1xf32> to vector<16x16xf32>
    %45 = arith.subf %41, %44 : vector<16x16xf32>
    %46 = math.exp %45 : vector<16x16xf32>
    %cst_22 = arith.constant dense<0.000000e+00> : vector<16xf32>
    %47 = vector.multi_reduction <add>, %46, %cst_22 [1] : vector<16x16xf32> to vector<16xf32>
    %48 = vector.shape_cast %47 : vector<16xf32> to vector<16x1xf32>
    %49 = tpu.reciprocal %48 {approx = true} : vector<16x1xf32> -> vector<16x1xf32>
    %cst_23 = arith.constant dense<0.000000e+00> : vector<16x32xf32>
    %50 = tpu.matmul %46, %38, %cst_23 {dimension_numbers = #tpu.dot_dimension_numbers<[1], [0], [0], [1], [0, 0, 1, 1], [], []>} : vector<16x16xf32>, vector<16x32xf32>, vector<16x32xf32> -> vector<16x32xf32>
    %51 = vector.broadcast %49 : vector<16x1xf32> to vector<16x32xf32>
    %52 = arith.mulf %50, %51 : vector<16x32xf32>
    %c0_24 = arith.constant 0 : index
    %c32 = arith.constant 32 : index
    %53 = vector.load %arg16[%c0_24, %c32] : memref<16x128xf32, #tpu.memory_space<vmem>>, vector<16x32xf32>
    tpu.vector_store %arg16[%c0_24, %c32], %52 {strides = array<i32>} : memref<16x128xf32, #tpu.memory_space<vmem>>, vector<16x32xf32>,
    %54 = vector.extract_strided_slice %6 {offsets = [0, 64], sizes = [16, 32], strides = [1, 1]} : vector<16x384xf32> to vector<16x32xf32>
    %cst_25 = arith.constant 0.176776692 : f32
    %55 = vector.broadcast %cst_25 : f32 to vector<16x32xf32>
    %56 = arith.mulf %54, %55 : vector<16x32xf32>
    %57 = vector.extract_strided_slice %6 {offsets = [0, 192], sizes = [16, 32], strides = [1, 1]} : vector<16x384xf32> to vector<16x32xf32>
    %58 = vector.extract_strided_slice %6 {offsets = [0, 320], sizes = [16, 32], strides = [1, 1]} : vector<16x384xf32> to vector<16x32xf32>
    %cst_26 = arith.constant dense<0.000000e+00> : vector<16x16xf32>
    %59 = tpu.matmul %56, %57, %cst_26 {dimension_numbers = #tpu.dot_dimension_numbers<[1], [1], [0], [0], [0, 0, 1, 0], [], []>} : vector<16x32xf32>, vector<16x32xf32>, vector<16x16xf32> -> vector<16x16xf32>
    %60 = vector.broadcast %13 : vector<1x16xf32> to vector<16x16xf32>
    %61 = arith.addf %59, %60 : vector<16x16xf32>
    %cst_27 = arith.constant dense<0xFF800000> : vector<16xf32>
    %62 = vector.multi_reduction <maximumf>, %61, %cst_27 [1] : vector<16x16xf32> to vector<16xf32>
    %63 = vector.shape_cast %62 : vector<16xf32> to vector<16x1xf32>
    %64 = vector.broadcast %63 : vector<16x1xf32> to vector<16x16xf32>
    %65 = arith.subf %61, %64 : vector<16x16xf32>
    %66 = math.exp %65 : vector<16x16xf32>
    %cst_28 = arith.constant dense<0.000000e+00> : vector<16xf32>
    %67 = vector.multi_reduction <add>, %66, %cst_28 [1] : vector<16x16xf32> to vector<16xf32>
    %68 = vector.shape_cast %67 : vector<16xf32> to vector<16x1xf32>
    %69 = tpu.reciprocal %68 {approx = true} : vector<16x1xf32> -> vector<16x1xf32>
    %cst_29 = arith.constant dense<0.000000e+00> : vector<16x32xf32>
    %70 = tpu.matmul %66, %58, %cst_29 {dimension_numbers = #tpu.dot_dimension_numbers<[1], [0], [0], [1], [0, 0, 1, 1], [], []>} : vector<16x16xf32>, vector<16x32xf32>, vector<16x32xf32> -> vector<16x32xf32>
    %71 = vector.broadcast %69 : vector<16x1xf32> to vector<16x32xf32>
    %72 = arith.mulf %70, %71 : vector<16x32xf32>
    %c0_30 = arith.constant 0 : index
    %c64 = arith.constant 64 : index
    %73 = vector.load %arg16[%c0_30, %c64] : memref<16x128xf32, #tpu.memory_space<vmem>>, vector<16x32xf32>
    tpu.vector_store %arg16[%c0_30, %c64], %72 {strides = array<i32>} : memref<16x128xf32, #tpu.memory_space<vmem>>, vector<16x32xf32>,
    %74 = vector.extract_strided_slice %6 {offsets = [0, 96], sizes = [16, 32], strides = [1, 1]} : vector<16x384xf32> to vector<16x32xf32>
    %cst_31 = arith.constant 0.176776692 : f32
    %75 = vector.broadcast %cst_31 : f32 to vector<16x32xf32>
    %76 = arith.mulf %74, %75 : vector<16x32xf32>
    %77 = vector.extract_strided_slice %6 {offsets = [0, 224], sizes = [16, 32], strides = [1, 1]} : vector<16x384xf32> to vector<16x32xf32>
    %78 = vector.extract_strided_slice %6 {offsets = [0, 352], sizes = [16, 32], strides = [1, 1]} : vector<16x384xf32> to vector<16x32xf32>
    %cst_32 = arith.constant dense<0.000000e+00> : vector<16x16xf32>
    %79 = tpu.matmul %76, %77, %cst_32 {dimension_numbers = #tpu.dot_dimension_numbers<[1], [1], [0], [0], [0, 0, 1, 0], [], []>} : vector<16x32xf32>, vector<16x32xf32>, vector<16x16xf32> -> vector<16x16xf32>
    %80 = vector.broadcast %13 : vector<1x16xf32> to vector<16x16xf32>
    %81 = arith.addf %79, %80 : vector<16x16xf32>
    %cst_33 = arith.constant dense<0xFF800000> : vector<16xf32>
    %82 = vector.multi_reduction <maximumf>, %81, %cst_33 [1] : vector<16x16xf32> to vector<16xf32>
    %83 = vector.shape_cast %82 : vector<16xf32> to vector<16x1xf32>
    %84 = vector.broadcast %83 : vector<16x1xf32> to vector<16x16xf32>
    %85 = arith.subf %81, %84 : vector<16x16xf32>
    %86 = math.exp %85 : vector<16x16xf32>
    %cst_34 = arith.constant dense<0.000000e+00> : vector<16xf32>
    %87 = vector.multi_reduction <add>, %86, %cst_34 [1] : vector<16x16xf32> to vector<16xf32>
    %88 = vector.shape_cast %87 : vector<16xf32> to vector<16x1xf32>
    %89 = tpu.reciprocal %88 {approx = true} : vector<16x1xf32> -> vector<16x1xf32>
    %cst_35 = arith.constant dense<0.000000e+00> : vector<16x32xf32>
    %90 = tpu.matmul %86, %78, %cst_35 {dimension_numbers = #tpu.dot_dimension_numbers<[1], [0], [0], [1], [0, 0, 1, 1], [], []>} : vector<16x16xf32>, vector<16x32xf32>, vector<16x32xf32> -> vector<16x32xf32>
    %91 = vector.broadcast %89 : vector<16x1xf32> to vector<16x32xf32>
    %92 = arith.mulf %90, %91 : vector<16x32xf32>
    %c0_36 = arith.constant 0 : index
    %c96 = arith.constant 96 : index
    %93 = vector.load %arg16[%c0_36, %c96] : memref<16x128xf32, #tpu.memory_space<vmem>>, vector<16x32xf32>
    tpu.vector_store %arg16[%c0_36, %c96], %92 {strides = array<i32>} : memref<16x128xf32, #tpu.memory_space<vmem>>, vector<16x32xf32>,
    %c0_37 = arith.constant 0 : index
    %c0_38 = arith.constant 0 : index
    %94 = vector.load %arg16[%c0_37, %c0_38] : memref<16x128xf32, #tpu.memory_space<vmem>>, vector<16x128xf32>
    %c0_39 = arith.constant 0 : index
    %c0_40 = arith.constant 0 : index
    %95 = vector.load %arg6[%c0_39, %c0_40] : memref<128x128xf32, #tpu.memory_space<vmem>>, vector<128x128xf32>
    %cst_41 = arith.constant dense<0.000000e+00> : vector<16x128xf32>
    %96 = tpu.matmul %94, %95, %cst_41 {dimension_numbers = #tpu.dot_dimension_numbers<[1], [0], [0], [1], [0, 0, 1, 1], [], []>} : vector<16x128xf32>, vector<128x128xf32>, vector<16x128xf32> -> vector<16x128xf32>
    %97 = arith.addf %1, %96 : vector<16x128xf32>
    %c0_42 = arith.constant 0 : index
    %c0_43 = arith.constant 0 : index
    %98 = vector.load %arg7[%c0_42, %c0_43] : memref<1x128xf32, #tpu.memory_space<vmem>>, vector<1x128xf32>
    %c0_44 = arith.constant 0 : index
    %c0_45 = arith.constant 0 : index
    %99 = vector.load %arg8[%c0_44, %c0_45] : memref<1x128xf32, #tpu.memory_space<vmem>>, vector<1x128xf32>
    %cst_46 = arith.constant dense<0.000000e+00> : vector<16xf32>
    %100 = vector.multi_reduction <add>, %97, %cst_46 [1] : vector<16x128xf32> to vector<16xf32>
    %101 = vector.shape_cast %100 : vector<16xf32> to vector<16x1xf32>
    %cst_47 = arith.constant 1.280000e+02 : f32
    %102 = vector.broadcast %cst_47 : f32 to vector<16x1xf32>
    %103 = arith.divf %101, %102 : vector<16x1xf32>
    %104 = vector.broadcast %103 : vector<16x1xf32> to vector<16x128xf32>
    %105 = arith.subf %97, %104 : vector<16x128xf32>
    %106 = arith.mulf %105, %105 : vector<16x128xf32>
    %cst_48 = arith.constant dense<0.000000e+00> : vector<16xf32>
    %107 = vector.multi_reduction <add>, %106, %cst_48 [1] : vector<16x128xf32> to vector<16xf32>
    %108 = vector.shape_cast %107 : vector<16xf32> to vector<16x1xf32>
    %cst_49 = arith.constant 1.280000e+02 : f32
    %109 = vector.broadcast %cst_49 : f32 to vector<16x1xf32>
    %110 = arith.divf %108, %109 : vector<16x1xf32>
    %111 = vector.broadcast %103 : vector<16x1xf32> to vector<16x128xf32>
    %112 = arith.subf %97, %111 : vector<16x128xf32>
    %cst_50 = arith.constant 9.99999974E-6 : f32
    %113 = vector.broadcast %cst_50 : f32 to vector<16x1xf32>
    %114 = arith.addf %110, %113 : vector<16x1xf32>
    %115 = math.rsqrt %114 : vector<16x1xf32>
    %116 = vector.broadcast %115 : vector<16x1xf32> to vector<16x128xf32>
    %117 = arith.mulf %112, %116 : vector<16x128xf32>
    %118 = vector.broadcast %98 : vector<1x128xf32> to vector<16x128xf32>
    %119 = arith.mulf %117, %118 : vector<16x128xf32>
    %120 = vector.broadcast %99 : vector<1x128xf32> to vector<16x128xf32>
    %121 = arith.addf %119, %120 : vector<16x128xf32>
    %c0_51 = arith.constant 0 : index
    %c0_52 = arith.constant 0 : index
    %c0_53 = arith.constant 0 : index
    %122 = vector.load %arg3[%c0_51, %c0_52, %c0_53] : memref<1x16x1xf32, #tpu.memory_space<vmem>>, vector<1x16x1xf32>
    %123 = vector.shape_cast %122 : vector<1x16x1xf32> to vector<16x1xf32>
    %124 = vector.broadcast %123 : vector<16x1xf32> to vector<16x128xf32>
    %125 = arith.mulf %121, %124 : vector<16x128xf32>
    %cst_54 = arith.constant 0.000000e+00 : f32
    %126 = vector.broadcast %cst_54 : f32 to vector<1x128xf32>
    %c7 = arith.constant 7 : index
    %c0_55 = arith.constant 0 : index
    %127 = vector.load %arg17[%c7, %c0_55] : memref<25x128xf32, #tpu.memory_space<vmem>>, vector<1x128xf32>
    tpu.vector_store %arg17[%c7, %c0_55], %126 {strides = array<i32>} : memref<25x128xf32, #tpu.memory_space<vmem>>, vector<1x128xf32>,
    %cst_56 = arith.constant 0.000000e+00 : f32
    %128 = vector.broadcast %cst_56 : f32 to vector<1x128xf32>
    %c24 = arith.constant 24 : index
    %c0_57 = arith.constant 0 : index
    %129 = vector.load %arg17[%c24, %c0_57] : memref<25x128xf32, #tpu.memory_space<vmem>>, vector<1x128xf32>
    tpu.vector_store %arg17[%c24, %c0_57], %128 {strides = array<i32>} : memref<25x128xf32, #tpu.memory_space<vmem>>, vector<1x128xf32>,
    %c8 = arith.constant 8 : index
    %c0_58 = arith.constant 0 : index
    %130 = vector.load %arg17[%c8, %c0_58] : memref<25x128xf32, #tpu.memory_space<vmem>>, vector<16x128xf32>
    tpu.vector_store %arg17[%c8, %c0_58], %125 {strides = array<i32>} : memref<25x128xf32, #tpu.memory_space<vmem>>, vector<16x128xf32>,
    %cst_59 = arith.constant 0.000000e+00 : f32
    %131 = vector.broadcast %cst_59 : f32 to vector<16x256xf32>
    %c7_60 = arith.constant 7 : index
    %c0_61 = arith.constant 0 : index
    %132 = vector.load %arg17[%c7_60, %c0_61] : memref<25x128xf32, #tpu.memory_space<vmem>>, vector<16x128xf32>
    %c0_62 = arith.constant 0 : index
    %c0_63 = arith.constant 0 : index
    %c0_64 = arith.constant 0 : index
    %133 = vector.load %arg9[%c0_62, %c0_63, %c0_64] : memref<3x128x256xf32, #tpu.memory_space<vmem>>, vector<1x128x256xf32>
    %134 = vector.shape_cast %133 : vector<1x128x256xf32> to vector<128x256xf32>
    %cst_65 = arith.constant dense<0.000000e+00> : vector<16x256xf32>
    %135 = tpu.matmul %132, %134, %cst_65 {dimension_numbers = #tpu.dot_dimension_numbers<[1], [0], [0], [1], [0, 0, 1, 1], [], []>} : vector<16x128xf32>, vector<128x256xf32>, vector<16x256xf32> -> vector<16x256xf32>
    %136 = arith.addf %131, %135 : vector<16x256xf32>
    %c8_66 = arith.constant 8 : index
    %c0_67 = arith.constant 0 : index
    %137 = vector.load %arg17[%c8_66, %c0_67] : memref<25x128xf32, #tpu.memory_space<vmem>>, vector<16x128xf32>
    %c1 = arith.constant 1 : index
    %c0_68 = arith.constant 0 : index
    %c0_69 = arith.constant 0 : index
    %138 = vector.load %arg9[%c1, %c0_68, %c0_69] : memref<3x128x256xf32, #tpu.memory_space<vmem>>, vector<1x128x256xf32>
    %139 = vector.shape_cast %138 : vector<1x128x256xf32> to vector<128x256xf32>
    %cst_70 = arith.constant dense<0.000000e+00> : vector<16x256xf32>
    %140 = tpu.matmul %137, %139, %cst_70 {dimension_numbers = #tpu.dot_dimension_numbers<[1], [0], [0], [1], [0, 0, 1, 1], [], []>} : vector<16x128xf32>, vector<128x256xf32>, vector<16x256xf32> -> vector<16x256xf32>
    %141 = arith.addf %136, %140 : vector<16x256xf32>
    %c9 = arith.constant 9 : index
    %c0_71 = arith.constant 0 : index
    %142 = vector.load %arg17[%c9, %c0_71] : memref<25x128xf32, #tpu.memory_space<vmem>>, vector<16x128xf32>
    %c2 = arith.constant 2 : index
    %c0_72 = arith.constant 0 : index
    %c0_73 = arith.constant 0 : index
    %143 = vector.load %arg9[%c2, %c0_72, %c0_73] : memref<3x128x256xf32, #tpu.memory_space<vmem>>, vector<1x128x256xf32>
    %144 = vector.shape_cast %143 : vector<1x128x256xf32> to vector<128x256xf32>
    %cst_74 = arith.constant dense<0.000000e+00> : vector<16x256xf32>
    %145 = tpu.matmul %142, %144, %cst_74 {dimension_numbers = #tpu.dot_dimension_numbers<[1], [0], [0], [1], [0, 0, 1, 1], [], []>} : vector<16x128xf32>, vector<128x256xf32>, vector<16x256xf32> -> vector<16x256xf32>
    %146 = arith.addf %141, %145 : vector<16x256xf32>
    %c0_75 = arith.constant 0 : index
    %c0_76 = arith.constant 0 : index
    %147 = vector.load %arg10[%c0_75, %c0_76] : memref<1x256xf32, #tpu.memory_space<vmem>>, vector<1x256xf32>
    %148 = vector.broadcast %147 : vector<1x256xf32> to vector<16x256xf32>
    %149 = arith.addf %146, %148 : vector<16x256xf32>
    %cst_77 = arith.constant 0.000000e+00 : f32
    %150 = vector.broadcast %cst_77 : f32 to vector<16x256xf32>
    %151 = arith.maximumf %149, %150 : vector<16x256xf32>
    %cst_78 = arith.constant 0.000000e+00 : f32
    %152 = vector.broadcast %cst_78 : f32 to vector<1x256xf32>
    %c7_79 = arith.constant 7 : index
    %c0_80 = arith.constant 0 : index
    %153 = vector.load %arg18[%c7_79, %c0_80] : memref<25x256xf32, #tpu.memory_space<vmem>>, vector<1x256xf32>
    tpu.vector_store %arg18[%c7_79, %c0_80], %152 {strides = array<i32>} : memref<25x256xf32, #tpu.memory_space<vmem>>, vector<1x256xf32>,
    %cst_81 = arith.constant 0.000000e+00 : f32
    %154 = vector.broadcast %cst_81 : f32 to vector<1x256xf32>
    %c24_82 = arith.constant 24 : index
    %c0_83 = arith.constant 0 : index
    %155 = vector.load %arg18[%c24_82, %c0_83] : memref<25x256xf32, #tpu.memory_space<vmem>>, vector<1x256xf32>
    tpu.vector_store %arg18[%c24_82, %c0_83], %154 {strides = array<i32>} : memref<25x256xf32, #tpu.memory_space<vmem>>, vector<1x256xf32>,
    %c8_84 = arith.constant 8 : index
    %c0_85 = arith.constant 0 : index
    %156 = vector.load %arg18[%c8_84, %c0_85] : memref<25x256xf32, #tpu.memory_space<vmem>>, vector<16x256xf32>
    tpu.vector_store %arg18[%c8_84, %c0_85], %151 {strides = array<i32>} : memref<25x256xf32, #tpu.memory_space<vmem>>, vector<16x256xf32>,
    %cst_86 = arith.constant 0.000000e+00 : f32
    %157 = vector.broadcast %cst_86 : f32 to vector<16x128xf32>
    %c7_87 = arith.constant 7 : index
    %c0_88 = arith.constant 0 : index
    %158 = vector.load %arg18[%c7_87, %c0_88] : memref<25x256xf32, #tpu.memory_space<vmem>>, vector<16x256xf32>
    %c0_89 = arith.constant 0 : index
    %c0_90 = arith.constant 0 : index
    %c0_91 = arith.constant 0 : index
    %159 = vector.load %arg11[%c0_89, %c0_90, %c0_91] : memref<3x256x128xf32, #tpu.memory_space<vmem>>, vector<1x256x128xf32>
    %160 = vector.shape_cast %159 : vector<1x256x128xf32> to vector<256x128xf32>
    %cst_92 = arith.constant dense<0.000000e+00> : vector<16x128xf32>
    %161 = tpu.matmul %158, %160, %cst_92 {dimension_numbers = #tpu.dot_dimension_numbers<[1], [0], [0], [1], [0, 0, 1, 1], [], []>} : vector<16x256xf32>, vector<256x128xf32>, vector<16x128xf32> -> vector<16x128xf32>
    %162 = arith.addf %157, %161 : vector<16x128xf32>
    %c8_93 = arith.constant 8 : index
    %c0_94 = arith.constant 0 : index
    %163 = vector.load %arg18[%c8_93, %c0_94] : memref<25x256xf32, #tpu.memory_space<vmem>>, vector<16x256xf32>
    %c1_95 = arith.constant 1 : index
    %c0_96 = arith.constant 0 : index
    %c0_97 = arith.constant 0 : index
    %164 = vector.load %arg11[%c1_95, %c0_96, %c0_97] : memref<3x256x128xf32, #tpu.memory_space<vmem>>, vector<1x256x128xf32>
    %165 = vector.shape_cast %164 : vector<1x256x128xf32> to vector<256x128xf32>
    %cst_98 = arith.constant dense<0.000000e+00> : vector<16x128xf32>
    %166 = tpu.matmul %163, %165, %cst_98 {dimension_numbers = #tpu.dot_dimension_numbers<[1], [0], [0], [1], [0, 0, 1, 1], [], []>} : vector<16x256xf32>, vector<256x128xf32>, vector<16x128xf32> -> vector<16x128xf32>
    %167 = arith.addf %162, %166 : vector<16x128xf32>
    %c9_99 = arith.constant 9 : index
    %c0_100 = arith.constant 0 : index
    %168 = vector.load %arg18[%c9_99, %c0_100] : memref<25x256xf32, #tpu.memory_space<vmem>>, vector<16x256xf32>
    %c2_101 = arith.constant 2 : index
    %c0_102 = arith.constant 0 : index
    %c0_103 = arith.constant 0 : index
    %169 = vector.load %arg11[%c2_101, %c0_102, %c0_103] : memref<3x256x128xf32, #tpu.memory_space<vmem>>, vector<1x256x128xf32>
    %170 = vector.shape_cast %169 : vector<1x256x128xf32> to vector<256x128xf32>
    %cst_104 = arith.constant dense<0.000000e+00> : vector<16x128xf32>
    %171 = tpu.matmul %168, %170, %cst_104 {dimension_numbers = #tpu.dot_dimension_numbers<[1], [0], [0], [1], [0, 0, 1, 1], [], []>} : vector<16x256xf32>, vector<256x128xf32>, vector<16x128xf32> -> vector<16x128xf32>
    %172 = arith.addf %167, %171 : vector<16x128xf32>
    %c0_105 = arith.constant 0 : index
    %c0_106 = arith.constant 0 : index
    %173 = vector.load %arg12[%c0_105, %c0_106] : memref<1x128xf32, #tpu.memory_space<vmem>>, vector<1x128xf32>
    %174 = vector.broadcast %173 : vector<1x128xf32> to vector<16x128xf32>
    %175 = arith.addf %172, %174 : vector<16x128xf32>
    %176 = arith.addf %125, %175 : vector<16x128xf32>
    %c0_107 = arith.constant 0 : index
    %c0_108 = arith.constant 0 : index
    %177 = vector.load %arg13[%c0_107, %c0_108] : memref<1x128xf32, #tpu.memory_space<vmem>>, vector<1x128xf32>
    %c0_109 = arith.constant 0 : index
    %c0_110 = arith.constant 0 : index
    %178 = vector.load %arg14[%c0_109, %c0_110] : memref<1x128xf32, #tpu.memory_space<vmem>>, vector<1x128xf32>
    %cst_111 = arith.constant dense<0.000000e+00> : vector<16xf32>
    %179 = vector.multi_reduction <add>, %176, %cst_111 [1] : vector<16x128xf32> to vector<16xf32>
    %180 = vector.shape_cast %179 : vector<16xf32> to vector<16x1xf32>
    %cst_112 = arith.constant 1.280000e+02 : f32
    %181 = vector.broadcast %cst_112 : f32 to vector<16x1xf32>
    %182 = arith.divf %180, %181 : vector<16x1xf32>
    %183 = vector.broadcast %182 : vector<16x1xf32> to vector<16x128xf32>
    %184 = arith.subf %176, %183 : vector<16x128xf32>
    %185 = arith.mulf %184, %184 : vector<16x128xf32>
    %cst_113 = arith.constant dense<0.000000e+00> : vector<16xf32>
    %186 = vector.multi_reduction <add>, %185, %cst_113 [1] : vector<16x128xf32> to vector<16xf32>
    %187 = vector.shape_cast %186 : vector<16xf32> to vector<16x1xf32>
    %cst_114 = arith.constant 1.280000e+02 : f32
    %188 = vector.broadcast %cst_114 : f32 to vector<16x1xf32>
    %189 = arith.divf %187, %188 : vector<16x1xf32>
    %190 = vector.broadcast %182 : vector<16x1xf32> to vector<16x128xf32>
    %191 = arith.subf %176, %190 : vector<16x128xf32>
    %cst_115 = arith.constant 9.99999974E-6 : f32
    %192 = vector.broadcast %cst_115 : f32 to vector<16x1xf32>
    %193 = arith.addf %189, %192 : vector<16x1xf32>
    %194 = math.rsqrt %193 : vector<16x1xf32>
    %195 = vector.broadcast %194 : vector<16x1xf32> to vector<16x128xf32>
    %196 = arith.mulf %191, %195 : vector<16x128xf32>
    %197 = vector.broadcast %177 : vector<1x128xf32> to vector<16x128xf32>
    %198 = arith.mulf %196, %197 : vector<16x128xf32>
    %199 = vector.broadcast %178 : vector<1x128xf32> to vector<16x128xf32>
    %200 = arith.addf %198, %199 : vector<16x128xf32>
    %c0_116 = arith.constant 0 : index
    %c0_117 = arith.constant 0 : index
    %c0_118 = arith.constant 0 : index
    %201 = vector.load %arg3[%c0_116, %c0_117, %c0_118] : memref<1x16x1xf32, #tpu.memory_space<vmem>>, vector<1x16x1xf32>
    %202 = vector.shape_cast %201 : vector<1x16x1xf32> to vector<16x1xf32>
    %203 = vector.broadcast %202 : vector<16x1xf32> to vector<16x128xf32>
    %204 = arith.mulf %200, %203 : vector<16x128xf32>
    %c0_119 = arith.constant 0 : index
    %c0_120 = arith.constant 0 : index
    %c0_121 = arith.constant 0 : index
    %205 = vector.load %arg15[%c0_119, %c0_120, %c0_121] : memref<1x16x128xf32, #tpu.memory_space<vmem>>, vector<1x16x128xf32>
    %206 = vector.shape_cast %205 : vector<1x16x128xf32> to vector<16x128xf32>
    %207 = vector.shape_cast %204 : vector<16x128xf32> to vector<1x16x128xf32>
    tpu.vector_store %arg15[%c0_119, %c0_120, %c0_121], %207 {strides = array<i32>} : memref<1x16x128xf32, #tpu.memory_space<vmem>>, vector<1x16x128xf32>,
    return
  }
  func.func @transform_0(%arg0: i32) -> (i32, i32, i32) {
    %c0_i32 = arith.constant 0 : i32
    %c0_i32_0 = arith.constant 0 : i32
    %c0_i32_1 = arith.constant 0 : i32
    return %arg0, %c0_i32, %c0_i32_0 : i32, i32, i32
  }
  func.func @transform_1(%arg0: i32) -> (i32, i32, i32) {
    %c0_i32 = arith.constant 0 : i32
    %c0_i32_0 = arith.constant 0 : i32
    %c0_i32_1 = arith.constant 0 : i32
    return %arg0, %c0_i32, %c0_i32_0 : i32, i32, i32
  }
  func.func @transform_2(%arg0: i32) -> (i32, i32, i32) {
    %c0_i32 = arith.constant 0 : i32
    %c0_i32_0 = arith.constant 0 : i32
    %c0_i32_1 = arith.constant 0 : i32
    return %arg0, %c0_i32, %c0_i32_0 : i32, i32, i32
  }
  func.func @transform_3(%arg0: i32) -> (i32, i32) {
    %c0_i32 = arith.constant 0 : i32
    %c0_i32_0 = arith.constant 0 : i32
    %c0_i32_1 = arith.constant 0 : i32
    return %c0_i32, %c0_i32_0 : i32, i32
  }
  func.func @transform_4(%arg0: i32) -> (i32, i32) {
    %c0_i32 = arith.constant 0 : i32
    %c0_i32_0 = arith.constant 0 : i32
    %c0_i32_1 = arith.constant 0 : i32
    return %c0_i32, %c0_i32_0 : i32, i32
  }
  func.func @transform_5(%arg0: i32) -> (i32, i32) {
    %c0_i32 = arith.constant 0 : i32
    %c0_i32_0 = arith.constant 0 : i32
    %c0_i32_1 = arith.constant 0 : i32
    return %c0_i32, %c0_i32_0 : i32, i32
  }
  func.func @transform_6(%arg0: i32) -> (i32, i32) {
    %c0_i32 = arith.constant 0 : i32
    %c0_i32_0 = arith.constant 0 : i32
    %c0_i32_1 = arith.constant 0 : i32
    return %c0_i32, %c0_i32_0 : i32, i32
  }
  func.func @transform_7(%arg0: i32) -> (i32, i32) {
    %c0_i32 = arith.constant 0 : i32
    %c0_i32_0 = arith.constant 0 : i32
    %c0_i32_1 = arith.constant 0 : i32
    return %c0_i32, %c0_i32_0 : i32, i32
  }
  func.func @transform_8(%arg0: i32) -> (i32, i32, i32) {
    %c0_i32 = arith.constant 0 : i32
    %c0_i32_0 = arith.constant 0 : i32
    %c0_i32_1 = arith.constant 0 : i32
    %c0_i32_2 = arith.constant 0 : i32
    return %c0_i32, %c0_i32_0, %c0_i32_1 : i32, i32, i32
  }
  func.func @transform_9(%arg0: i32) -> (i32, i32) {
    %c0_i32 = arith.constant 0 : i32
    %c0_i32_0 = arith.constant 0 : i32
    %c0_i32_1 = arith.constant 0 : i32
    return %c0_i32, %c0_i32_0 : i32, i32
  }
  func.func @transform_10(%arg0: i32) -> (i32, i32, i32) {
    %c0_i32 = arith.constant 0 : i32
    %c0_i32_0 = arith.constant 0 : i32
    %c0_i32_1 = arith.constant 0 : i32
    %c0_i32_2 = arith.constant 0 : i32
    return %c0_i32, %c0_i32_0, %c0_i32_1 : i32, i32, i32
  }
  func.func @transform_11(%arg0: i32) -> (i32, i32) {
    %c0_i32 = arith.constant 0 : i32
    %c0_i32_0 = arith.constant 0 : i32
    %c0_i32_1 = arith.constant 0 : i32
    return %c0_i32, %c0_i32_0 : i32, i32
  }
  func.func @transform_12(%arg0: i32) -> (i32, i32) {
    %c0_i32 = arith.constant 0 : i32
    %c0_i32_0 = arith.constant 0 : i32
    %c0_i32_1 = arith.constant 0 : i32
    return %c0_i32, %c0_i32_0 : i32, i32
  }
  func.func @transform_13(%arg0: i32) -> (i32, i32) {
    %c0_i32 = arith.constant 0 : i32
    %c0_i32_0 = arith.constant 0 : i32
    %c0_i32_1 = arith.constant 0 : i32
    return %c0_i32, %c0_i32_0 : i32, i32
  }
  func.func @transform_14(%arg0: i32) -> (i32, i32, i32) {
    %c0_i32 = arith.constant 0 : i32
    %c0_i32_0 = arith.constant 0 : i32
    %c0_i32_1 = arith.constant 0 : i32
    return %arg0, %c0_i32, %c0_i32_0 : i32, i32, i32
  }
}

</mosaic_0001>

<llo_original>
// kernel: transformer_layer_forward.1
$region0: #{transformer_layer_forward.1}
  #allocation0 [shape = 'u32[]', space=smem, size = 0x4, offset = 0x4, fixed_abs, tag = 'smem constant byte address 0x4 - core index']
  #allocation1 [shape = 'u32[144,128]{1,0:T(1,128)}', space=vmem, size = 0x12000, scoped, tag = 'internal scratch']
  #allocation2 [shape = 'f32[16,128]{1,0:T(8,128)}', space=vmem, size = 0x2000, scoped, tag = 'scratch operand']
  #allocation3 [shape = 'f32[25,128]{1,0:T(8,128)}', space=vmem, size = 0x4000, scoped, tag = 'scratch operand']
  #allocation4 [shape = 'f32[25,256]{1,0:T(8,128)}', space=vmem, size = 0x8000, scoped, tag = 'scratch operand']
  %s0 = inlined_call_operand.vmem [shape: f32[2,16,128], index: 0, kind: input, shape index: {}]
  %s1 = inlined_call_operand.vmem [shape: f32[2,1,16], index: 1, kind: input, shape index: {}]
  %s2 = inlined_call_operand.vmem [shape: f32[2,16,1], index: 2, kind: input, shape index: {}]
  %s3 = inlined_call_operand.hbm [shape: f32[128,384], index: 3, kind: input, shape index: {}]
  %s4 = inlined_call_operand.vmem [shape: f32[1,384], index: 4, kind: input, shape index: {}]
  %s5 = inlined_call_operand.hbm [shape: f32[128,128], index: 5, kind: input, shape index: {}]
  %s6 = inlined_call_operand.vmem [shape: f32[1,128], index: 6, kind: input, shape index: {}]
  %s7 = inlined_call_operand.vmem [shape: f32[1,128], index: 7, kind: input, shape index: {}]
  %s8 = inlined_call_operand.hbm [shape: f32[3,128,256], index: 8, kind: input, shape index: {}]
  %s9 = inlined_call_operand.vmem [shape: f32[1,256], index: 9, kind: input, shape index: {}]
  %s10 = inlined_call_operand.hbm [shape: f32[3,256,128], index: 10, kind: input, shape index: {}]
  %s11 = inlined_call_operand.vmem [shape: f32[1,128], index: 11, kind: input, shape index: {}]
  %s12 = inlined_call_operand.vmem [shape: f32[1,128], index: 12, kind: input, shape index: {}]
  %s13 = inlined_call_operand.vmem [shape: f32[1,128], index: 13, kind: input, shape index: {}]
  %s14 = inlined_call_operand.hbm [shape: f32[2,16,128], index: 14, kind: output, shape index: {}]
  %s15 = sld [smem:[#allocation0]]
  $region105: #{transformer_layer_forward.1} parent=0
    _
  %s17 = ssub.s32 1, %s15
  %s18 = scalar_select 0, %s17, %s15
  $region1: #{transformer_layer_forward.1} parent=0
    #allocation5 [shape = 'u8[196608]{0}', space=vmem, size = 0x30000, scoped, tag = 'input window, operand 3, single buffered']
    #allocation6 [shape = 's32[2]{0}', space=sflag, size = 0x8, scoped, tag = 'scoped memory for transformer_layer_forward.1']
    #allocation7 [shape = 's32[2]{0}', space=sflag, size = 0x8, scoped, tag = 'scoped memory for transformer_layer_forward.1']
    #allocation8 [shape = 'u8[65536]{0}', space=vmem, size = 0x10000, scoped, tag = 'input window, operand 5, single buffered']
    #allocation9 [shape = 's32[1]{0}', space=sflag, size = 0x4, scoped, tag = 'scoped memory for transformer_layer_forward.1']
    #allocation10 [shape = 'u8[393216]{0}', space=vmem, size = 0x60000, scoped, tag = 'input window, operand 8, single buffered']
    #allocation11 [shape = 'u8[393216]{0}', space=vmem, size = 0x60000, scoped, tag = 'input window, operand 10, single buffered']
    #allocation12 [shape = 's32[1]{0}', space=sflag, size = 0x4, scoped, tag = 'scoped memory for transformer_layer_forward.1']
    #allocation13 [shape = 'u8[16384]{0}', space=vmem, size = 0x4000, scoped, tag = 'output window, operand 0']
    %19 = vsyncpa [#allocation6], 0
    %20 = vsyncpa [#allocation9], 0
    %21 = vsyncpa [#allocation12], 0
    %22 = vsyncpa [#allocation7], 0
    %s23 = scalar_lea.sflag [#allocation7], 1
    %24 = vsyncpa %s23, 0
    loop: start=0, step=1, limit=4
    $region2: #{transformer_layer_forward.1} parent=1 // loop_pre_header
      _
    $region3: #{transformer_layer_forward.1} parent=1 // loop_header
      %s26 = sphi 0, %s30
      %p27 = scmp.ge.s32.totalorder %s26, 4
      %s36 = sphi 0, %s38
      %s39 = sphi 0, %s36
      %s40 = sphi 0, %s39
      %s56 = sphi 0, %s40
      %s62 = sphi 0, %s64
      %s65 = sphi 0, %s62
      %s66 = sphi 0, %s65
      %s82 = sphi 0, %s66
      %s88 = sphi 0, %s90
      %s91 = sphi 0, %s88
      %s92 = sphi 0, %s91
      %s108 = sphi 0, %s92
      %s112 = sphi 0, %s112
      %s114 = sphi 0, %s112
      %s115 = sphi 0, %s114
      %s129 = sphi 0, %s115
      %s133 = sphi 0, %s133
      %s135 = sphi 0, %s133
      %s136 = sphi 0, %s135
      %s150 = sphi 0, %s136
      %s154 = sphi 0, %s154
      %s156 = sphi 0, %s154
      %s157 = sphi 0, %s156
      %s171 = sphi 0, %s157
      %s175 = sphi 0, %s175
      %s177 = sphi 0, %s175
      %s178 = sphi 0, %s177
      %s192 = sphi 0, %s178
      %s196 = sphi 0, %s196
      %s198 = sphi 0, %s196
      %s199 = sphi 0, %s198
      %s213 = sphi 0, %s199
      %s217 = sphi 0, %s217
      %s219 = sphi 0, %s217
      %s220 = sphi 0, %s219
      %s234 = sphi 0, %s220
      %s238 = sphi 0, %s238
      %s240 = sphi 0, %s238
      %s241 = sphi 0, %s240
      %s255 = sphi 0, %s241
      %s259 = sphi 0, %s259
      %s261 = sphi 0, %s259
      %s262 = sphi 0, %s261
      %s276 = sphi 0, %s262
      %s280 = sphi 0, %s280
      %s282 = sphi 0, %s280
      %s283 = sphi 0, %s282
      %s297 = sphi 0, %s283
      %s301 = sphi 0, %s301
      %s303 = sphi 0, %s301
      %s304 = sphi 0, %s303
      %s318 = sphi 0, %s304
      %s322 = sphi 0, %s322
      %s324 = sphi 0, %s322
      %s325 = sphi 0, %s324
      %s339 = sphi 0, %s325
      %s345 = sphi 0, %s347
      %s348 = sphi 0, %s345
      %s349 = sphi 0, %s348
      %s365 = sphi 0, %s349
    $region4: #{transformer_layer_forward.1} parent=1 // loop_header_branch
      %29 = sbr.rel (%p27) target = $region8
    $region5: #{transformer_layer_forward.1} parent=1 // loop_body
      %s31 = ssub.s32 %s26, 1
      %s32 = ssub.s32 %s26, 2
      %s33 = sadd.s32 %s26, 1
      %s34 = ssub.s32 %s26, %s33
      %p35 = scmp.eq.s32.totalorder %s34, 0
      %s37 = sadd.s32 %s36, 1
      %s38 = scalar_select %p35, %s36, %s37
      %p41 = pneg %p35
      %p42 = scmp.eq.s32.totalorder %s26, 1
      %p43 = por %p41, %p42
      %p44 = scmp.ne.s32.totalorder %s36, %s39
      %p45 = scmp.eq.s32.totalorder %s26, 0
      %p46 = por %p44, %p45
      %p47 = scmp.ne.s32.totalorder %s36, %s39
      %p48 = scmp.eq.s32.totalorder %s31, 1
      %p49 = por %p47, %p48
      %p50 = scmp.ne.s32.totalorder %s39, %s40
      %p51 = scmp.eq.s32.totalorder %s31, 0
      %p52 = por %p50, %p51
      %p53 = scmp.ne.s32.totalorder %s39, %s40
      %p54 = scmp.eq.s32.totalorder %s32, 1
      %p55 = por %p53, %p54
      %p57 = scmp.ne.s32.totalorder %s40, %s56
      %p58 = scmp.eq.s32.totalorder %s32, 0
      %p59 = por %p57, %p58
      %s60 = ssub.s32 %s26, %s33
      %p61 = scmp.eq.s32.totalorder %s60, 0
      %s63 = sadd.s32 %s62, 1
      %s64 = scalar_select %p61, %s62, %s63
      %p67 = pneg %p61
      %p68 = scmp.eq.s32.totalorder %s26, 1
      %p69 = por %p67, %p68
      %p70 = scmp.ne.s32.totalorder %s62, %s65
      %p71 = scmp.eq.s32.totalorder %s26, 0
      %p72 = por %p70, %p71
      %p73 = scmp.ne.s32.totalorder %s62, %s65
      %p74 = scmp.eq.s32.totalorder %s31, 1
      %p75 = por %p73, %p74
      %p76 = scmp.ne.s32.totalorder %s65, %s66
      %p77 = scmp.eq.s32.totalorder %s31, 0
      %p78 = por %p76, %p77
      %p79 = scmp.ne.s32.totalorder %s65, %s66
      %p80 = scmp.eq.s32.totalorder %s32, 1
      %p81 = por %p79, %p80
      %p83 = scmp.ne.s32.totalorder %s66, %s82
      %p84 = scmp.eq.s32.totalorder %s32, 0
      %p85 = por %p83, %p84
      %s86 = ssub.s32 %s26, %s33
      %p87 = scmp.eq.s32.totalorder %s86, 0
      %s89 = sadd.s32 %s88, 1
      %s90 = scalar_select %p87, %s88, %s89
      %p93 = pneg %p87
      %p94 = scmp.eq.s32.totalorder %s26, 1
      %p95 = por %p93, %p94
      %p96 = scmp.ne.s32.totalorder %s88, %s91
      %p97 = scmp.eq.s32.totalorder %s26, 0
      %p98 = por %p96, %p97
      %p99 = scmp.ne.s32.totalorder %s88, %s91
      %p100 = scmp.eq.s32.totalorder %s31, 1
      %p101 = por %p99, %p100
      %p102 = scmp.ne.s32.totalorder %s91, %s92
      %p103 = scmp.eq.s32.totalorder %s31, 0
      %p104 = por %p102, %p103
      %p105 = scmp.ne.s32.totalorder %s91, %s92
      %p106 = scmp.eq.s32.totalorder %s32, 1
      %p107 = por %p105, %p106
      %p109 = scmp.ne.s32.totalorder %s92, %s108
      %p110 = scmp.eq.s32.totalorder %s32, 0
      %p111 = por %p109, %p110
      %s113 = sadd.s32 %s112, 1
      %p116 = scmp.eq.s32.totalorder %s26, 1
      %p117 = scmp.ne.s32.totalorder %s112, %s114
      %p118 = scmp.eq.s32.totalorder %s26, 0
      %p119 = por %p117, %p118
      %p120 = scmp.ne.s32.totalorder %s112, %s114
      %p121 = scmp.eq.s32.totalorder %s31, 1
      %p122 = por %p120, %p121
      %p123 = scmp.ne.s32.totalorder %s114, %s115
      %p124 = scmp.eq.s32.totalorder %s31, 0
      %p125 = por %p123, %p124
      %p126 = scmp.ne.s32.totalorder %s114, %s115
      %p127 = scmp.eq.s32.totalorder %s32, 1
      %p128 = por %p126, %p127
      %p130 = scmp.ne.s32.totalorder %s115, %s129
      %p131 = scmp.eq.s32.totalorder %s32, 0
      %p132 = por %p130, %p131
      %s134 = sadd.s32 %s133, 1
      %p137 = scmp.eq.s32.totalorder %s26, 1
      %p138 = scmp.ne.s32.totalorder %s133, %s135
      %p139 = scmp.eq.s32.totalorder %s26, 0
      %p140 = por %p138, %p139
      %p141 = scmp.ne.s32.totalorder %s133, %s135
      %p142 = scmp.eq.s32.totalorder %s31, 1
      %p143 = por %p141, %p142
      %p144 = scmp.ne.s32.totalorder %s135, %s136
      %p145 = scmp.eq.s32.totalorder %s31, 0
      %p146 = por %p144, %p145
      %p147 = scmp.ne.s32.totalorder %s135, %s136
      %p148 = scmp.eq.s32.totalorder %s32, 1
      %p149 = por %p147, %p148
      %p151 = scmp.ne.s32.totalorder %s136, %s150
      %p152 = scmp.eq.s32.totalorder %s32, 0
      %p153 = por %p151, %p152
      %s155 = sadd.s32 %s154, 1
      %p158 = scmp.eq.s32.totalorder %s26, 1
      %p159 = scmp.ne.s32.totalorder %s154, %s156
      %p160 = scmp.eq.s32.totalorder %s26, 0
      %p161 = por %p159, %p160
      %p162 = scmp.ne.s32.totalorder %s154, %s156
      %p163 = scmp.eq.s32.totalorder %s31, 1
      %p164 = por %p162, %p163
      %p165 = scmp.ne.s32.totalorder %s156, %s157
      %p166 = scmp.eq.s32.totalorder %s31, 0
      %p167 = por %p165, %p166
      %p168 = scmp.ne.s32.totalorder %s156, %s157
      %p169 = scmp.eq.s32.totalorder %s32, 1
      %p170 = por %p168, %p169
      %p172 = scmp.ne.s32.totalorder %s157, %s171
      %p173 = scmp.eq.s32.totalorder %s32, 0
      %p174 = por %p172, %p173
      %s176 = sadd.s32 %s175, 1
      %p179 = scmp.eq.s32.totalorder %s26, 1
      %p180 = scmp.ne.s32.totalorder %s175, %s177
      %p181 = scmp.eq.s32.totalorder %s26, 0
      %p182 = por %p180, %p181
      %p183 = scmp.ne.s32.totalorder %s175, %s177
      %p184 = scmp.eq.s32.totalorder %s31, 1
      %p185 = por %p183, %p184
      %p186 = scmp.ne.s32.totalorder %s177, %s178
      %p187 = scmp.eq.s32.totalorder %s31, 0
      %p188 = por %p186, %p187
      %p189 = scmp.ne.s32.totalorder %s177, %s178
      %p190 = scmp.eq.s32.totalorder %s32, 1
      %p191 = por %p189, %p190
      %p193 = scmp.ne.s32.totalorder %s178, %s192
      %p194 = scmp.eq.s32.totalorder %s32, 0
      %p195 = por %p193, %p194
      %s197 = sadd.s32 %s196, 1
      %p200 = scmp.eq.s32.totalorder %s26, 1
      %p201 = scmp.ne.s32.totalorder %s196, %s198
      %p202 = scmp.eq.s32.totalorder %s26, 0
      %p203 = por %p201, %p202
      %p204 = scmp.ne.s32.totalorder %s196, %s198
      %p205 = scmp.eq.s32.totalorder %s31, 1
      %p206 = por %p204, %p205
      %p207 = scmp.ne.s32.totalorder %s198, %s199
      %p208 = scmp.eq.s32.totalorder %s31, 0
      %p209 = por %p207, %p208
      %p210 = scmp.ne.s32.totalorder %s198, %s199
      %p211 = scmp.eq.s32.totalorder %s32, 1
      %p212 = por %p210, %p211
      %p214 = scmp.ne.s32.totalorder %s199, %s213
      %p215 = scmp.eq.s32.totalorder %s32, 0
      %p216 = por %p214, %p215
      %s218 = sadd.s32 %s217, 1
      %p221 = scmp.eq.s32.totalorder %s26, 1
      %p222 = scmp.ne.s32.totalorder %s217, %s219
      %p223 = scmp.eq.s32.totalorder %s26, 0
      %p224 = por %p222, %p223
      %p225 = scmp.ne.s32.totalorder %s217, %s219
      %p226 = scmp.eq.s32.totalorder %s31, 1
      %p227 = por %p225, %p226
      %p228 = scmp.ne.s32.totalorder %s219, %s220
      %p229 = scmp.eq.s32.totalorder %s31, 0
      %p230 = por %p228, %p229
      %p231 = scmp.ne.s32.totalorder %s219, %s220
      %p232 = scmp.eq.s32.totalorder %s32, 1
      %p233 = por %p231, %p232
      %p235 = scmp.ne.s32.totalorder %s220, %s234
      %p236 = scmp.eq.s32.totalorder %s32, 0
      %p237 = por %p235, %p236
      %s239 = sadd.s32 %s238, 1
      %p242 = scmp.eq.s32.totalorder %s26, 1
      %p243 = scmp.ne.s32.totalorder %s238, %s240
      %p244 = scmp.eq.s32.totalorder %s26, 0
      %p245 = por %p243, %p244
      %p246 = scmp.ne.s32.totalorder %s238, %s240
      %p247 = scmp.eq.s32.totalorder %s31, 1
      %p248 = por %p246, %p247
      %p249 = scmp.ne.s32.totalorder %s240, %s241
      %p250 = scmp.eq.s32.totalorder %s31, 0
      %p251 = por %p249, %p250
      %p252 = scmp.ne.s32.totalorder %s240, %s241
      %p253 = scmp.eq.s32.totalorder %s32, 1
      %p254 = por %p252, %p253
      %p256 = scmp.ne.s32.totalorder %s241, %s255
      %p257 = scmp.eq.s32.totalorder %s32, 0
      %p258 = por %p256, %p257
      %s260 = sadd.s32 %s259, 1
      %p263 = scmp.eq.s32.totalorder %s26, 1
      %p264 = scmp.ne.s32.totalorder %s259, %s261
      %p265 = scmp.eq.s32.totalorder %s26, 0
      %p266 = por %p264, %p265
      %p267 = scmp.ne.s32.totalorder %s259, %s261
      %p268 = scmp.eq.s32.totalorder %s31, 1
      %p269 = por %p267, %p268
      %p270 = scmp.ne.s32.totalorder %s261, %s262
      %p271 = scmp.eq.s32.totalorder %s31, 0
      %p272 = por %p270, %p271
      %p273 = scmp.ne.s32.totalorder %s261, %s262
      %p274 = scmp.eq.s32.totalorder %s32, 1
      %p275 = por %p273, %p274
      %p277 = scmp.ne.s32.totalorder %s262, %s276
      %p278 = scmp.eq.s32.totalorder %s32, 0
      %p279 = por %p277, %p278
      %s281 = sadd.s32 %s280, 1
      %p284 = scmp.eq.s32.totalorder %s26, 1
      %p285 = scmp.ne.s32.totalorder %s280, %s282
      %p286 = scmp.eq.s32.totalorder %s26, 0
      %p287 = por %p285, %p286
      %p288 = scmp.ne.s32.totalorder %s280, %s282
      %p289 = scmp.eq.s32.totalorder %s31, 1
      %p290 = por %p288, %p289
      %p291 = scmp.ne.s32.totalorder %s282, %s283
      %p292 = scmp.eq.s32.totalorder %s31, 0
      %p293 = por %p291, %p292
      %p294 = scmp.ne.s32.totalorder %s282, %s283
      %p295 = scmp.eq.s32.totalorder %s32, 1
      %p296 = por %p294, %p295
      %p298 = scmp.ne.s32.totalorder %s283, %s297
      %p299 = scmp.eq.s32.totalorder %s32, 0
      %p300 = por %p298, %p299
      %s302 = sadd.s32 %s301, 1
      %p305 = scmp.eq.s32.totalorder %s26, 1
      %p306 = scmp.ne.s32.totalorder %s301, %s303
      %p307 = scmp.eq.s32.totalorder %s26, 0
      %p308 = por %p306, %p307
      %p309 = scmp.ne.s32.totalorder %s301, %s303
      %p310 = scmp.eq.s32.totalorder %s31, 1
      %p311 = por %p309, %p310
      %p312 = scmp.ne.s32.totalorder %s303, %s304
      %p313 = scmp.eq.s32.totalorder %s31, 0
      %p314 = por %p312, %p313
      %p315 = scmp.ne.s32.totalorder %s303, %s304
      %p316 = scmp.eq.s32.totalorder %s32, 1
      %p317 = por %p315, %p316
      %p319 = scmp.ne.s32.totalorder %s304, %s318
      %p320 = scmp.eq.s32.totalorder %s32, 0
      %p321 = por %p319, %p320
      %s323 = sadd.s32 %s322, 1
      %p326 = scmp.eq.s32.totalorder %s26, 1
      %p327 = scmp.ne.s32.totalorder %s322, %s324
      %p328 = scmp.eq.s32.totalorder %s26, 0
      %p329 = por %p327, %p328
      %p330 = scmp.ne.s32.totalorder %s322, %s324
      %p331 = scmp.eq.s32.totalorder %s31, 1
      %p332 = por %p330, %p331
      %p333 = scmp.ne.s32.totalorder %s324, %s325
      %p334 = scmp.eq.s32.totalorder %s31, 0
      %p335 = por %p333, %p334
      %p336 = scmp.ne.s32.totalorder %s324, %s325
      %p337 = scmp.eq.s32.totalorder %s32, 1
      %p338 = por %p336, %p337
      %p340 = scmp.ne.s32.totalorder %s325, %s339
      %p341 = scmp.eq.s32.totalorder %s32, 0
      %p342 = por %p340, %p341
      %s343 = ssub.s32 %s26, %s33
      %p344 = scmp.eq.s32.totalorder %s343, 0
      %s346 = sadd.s32 %s345, 1
      %s347 = scalar_select %p344, %s345, %s346
      %p350 = pneg %p344
      %p351 = scmp.eq.s32.totalorder %s26, 1
      %p352 = por %p350, %p351
      %p353 = scmp.ne.s32.totalorder %s345, %s348
      %p354 = scmp.eq.s32.totalorder %s26, 0
      %p355 = por %p353, %p354
      %p356 = scmp.ne.s32.totalorder %s345, %s348
      %p357 = scmp.eq.s32.totalorder %s31, 1
      %p358 = por %p356, %p357
      %p359 = scmp.ne.s32.totalorder %s348, %s349
      %p360 = scmp.eq.s32.totalorder %s31, 0
      %p361 = por %p359, %p360
      %p362 = scmp.ne.s32.totalorder %s348, %s349
      %p363 = scmp.eq.s32.totalorder %s32, 1
      %p364 = por %p362, %p363
      %p366 = scmp.ne.s32.totalorder %s349, %s365
      %p367 = scmp.eq.s32.totalorder %s32, 0
      %p368 = por %p366, %p367
      %p369 = scmp.le.s32.totalorder 1, %s26
      %p370 = scmp.lt.s32.totalorder %s26, 3
      %p371 = pnand %p369, %p370
      %p372 = pneg %p371
      // Predicated region
      $region9: #{transformer_layer_forward.1} parent=5 // pred_check
        _
      $region10: #{transformer_layer_forward.1} parent=5 // pred_check_branch
        %374 = sbr.rel (%p371) target = $region12
      $region11: #{transformer_layer_forward.1} parent=5 // pred_region
        %s375 = ssub.s32 %s26, 1
        // Predicated region
        $region13: #{transformer_layer_forward.1} parent=11 // pred_check
          %p376 = pneg %p125
        $region14: #{transformer_layer_forward.1} parent=11 // pred_check_branch
          %378 = sbr.rel (%p376) target = $region16
        $region15: #{transformer_layer_forward.1} parent=11 // pred_region
          %s380 = ssub.s32 6144, 6144
          %381 = vsyncadd [#allocation6], %s380
          %s382 = sshll.u32 [#allocation5], 4
          %s383 = int_to_ptr.vmem [resolvable:$true] %s382
          %388 = dma.hbm_to_vmem [thread:$0]  %s3, 6144, %s383, [#allocation6], 384, 384, 24
        $region16: #{transformer_layer_forward.1} parent=11 // pred_fallthru
          _
        // Predicated region
        $region17: #{transformer_layer_forward.1} parent=11 // pred_check
          %p389 = pneg %p146
        $region18: #{transformer_layer_forward.1} parent=11 // pred_check_branch
          %391 = sbr.rel (%p389) target = $region20
        $region19: #{transformer_layer_forward.1} parent=11 // pred_region
          _
        $region20: #{transformer_layer_forward.1} parent=11 // pred_fallthru
          _
        // Predicated region
        $region21: #{transformer_layer_forward.1} parent=11 // pred_check
          %p392 = pneg %p167
        $region22: #{transformer_layer_forward.1} parent=11 // pred_check_branch
          %394 = sbr.rel (%p392) target = $region24
        $region23: #{transformer_layer_forward.1} parent=11 // pred_region
          %s396 = ssub.s32 2048, 2048
          %397 = vsyncadd [#allocation9], %s396
          %s398 = sshll.u32 [#allocation8], 4
          %s399 = int_to_ptr.vmem [resolvable:$true] %s398
          %404 = dma.hbm_to_vmem [thread:$0]  %s5, 2048, %s399, [#allocation9], 128, 128, 8
        $region24: #{transformer_layer_forward.1} parent=11 // pred_fallthru
          _
        // Predicated region
        $region25: #{transformer_layer_forward.1} parent=11 // pred_check
          %p405 = pneg %p188
        $region26: #{transformer_layer_forward.1} parent=11 // pred_check_branch
          %407 = sbr.rel (%p405) target = $region28
        $region27: #{transformer_layer_forward.1} parent=11 // pred_region
          _
        $region28: #{transformer_layer_forward.1} parent=11 // pred_fallthru
          _
        // Predicated region
        $region29: #{transformer_layer_forward.1} parent=11 // pred_check
          %p408 = pneg %p209
        $region30: #{transformer_layer_forward.1} parent=11 // pred_check_branch
          %410 = sbr.rel (%p408) target = $region32
        $region31: #{transformer_layer_forward.1} parent=11 // pred_region
          _
        $region32: #{transformer_layer_forward.1} parent=11 // pred_fallthru
          _
        // Predicated region
        $region33: #{transformer_layer_forward.1} parent=11 // pred_check
          %p411 = pneg %p230
        $region34: #{transformer_layer_forward.1} parent=11 // pred_check_branch
          %413 = sbr.rel (%p411) target = $region36
        $region35: #{transformer_layer_forward.1} parent=11 // pred_region
          %s415 = ssub.s32 12288, 12288
          %416 = vsyncadd [#allocation9], %s415
          %s417 = sshll.u32 [#allocation10], 4
          %s418 = int_to_ptr.vmem [resolvable:$true] %s417
          %423 = dma.hbm_to_vmem [thread:$0]  %s8, 12288, %s418, [#allocation9], 256, 256, 16
        $region36: #{transformer_layer_forward.1} parent=11 // pred_fallthru
          _
        // Predicated region
        $region37: #{transformer_layer_forward.1} parent=11 // pred_check
          %p424 = pneg %p251
        $region38: #{transformer_layer_forward.1} parent=11 // pred_check_branch
          %426 = sbr.rel (%p424) target = $region40
        $region39: #{transformer_layer_forward.1} parent=11 // pred_region
          _
        $region40: #{transformer_layer_forward.1} parent=11 // pred_fallthru
          _
        // Predicated region
        $region41: #{transformer_layer_forward.1} parent=11 // pred_check
          %p427 = pneg %p272
        $region42: #{transformer_layer_forward.1} parent=11 // pred_check_branch
          %429 = sbr.rel (%p427) target = $region44
        $region43: #{transformer_layer_forward.1} parent=11 // pred_region
          %s431 = ssub.s32 12288, 12288
          %432 = vsyncadd [#allocation12], %s431
          %s433 = sshll.u32 [#allocation11], 4
          %s434 = int_to_ptr.vmem [resolvable:$true] %s433
          %439 = dma.hbm_to_vmem [thread:$0]  %s10, 12288, %s434, [#allocation12], 128, 128, 8
        $region44: #{transformer_layer_forward.1} parent=11 // pred_fallthru
          _
        // Predicated region
        $region45: #{transformer_layer_forward.1} parent=11 // pred_check
          %p440 = pneg %p293
        $region46: #{transformer_layer_forward.1} parent=11 // pred_check_branch
          %442 = sbr.rel (%p440) target = $region48
        $region47: #{transformer_layer_forward.1} parent=11 // pred_region
          _
        $region48: #{transformer_layer_forward.1} parent=11 // pred_fallthru
          _
        // Predicated region
        $region49: #{transformer_layer_forward.1} parent=11 // pred_check
          %p443 = pneg %p314
        $region50: #{transformer_layer_forward.1} parent=11 // pred_check_branch
          %445 = sbr.rel (%p443) target = $region52
        $region51: #{transformer_layer_forward.1} parent=11 // pred_region
          _
        $region52: #{transformer_layer_forward.1} parent=11 // pred_fallthru
          _
        // Predicated region
        $region53: #{transformer_layer_forward.1} parent=11 // pred_check
          %p446 = pneg %p335
        $region54: #{transformer_layer_forward.1} parent=11 // pred_check_branch
          %448 = sbr.rel (%p446) target = $region56
        $region55: #{transformer_layer_forward.1} parent=11 // pred_region
          _
        $region56: #{transformer_layer_forward.1} parent=11 // pred_fallthru
          _
      $region12: #{transformer_layer_forward.1} parent=5 // pred_fallthru
        _
      %p449 = scmp.lt.s32.totalorder %s26, 2
      // Predicated region
      $region57: #{transformer_layer_forward.1} parent=5 // pred_check
        %p450 = pneg %p449
      $region58: #{transformer_layer_forward.1} parent=5 // pred_check_branch
        %452 = sbr.rel (%p450) target = $region60
      $region59: #{transformer_layer_forward.1} parent=5 // pred_region
        // Predicated region
        $region61: #{transformer_layer_forward.1} parent=59 // pred_check
          %p453 = pneg %p46
        $region62: #{transformer_layer_forward.1} parent=59 // pred_check_branch
          %455 = sbr.rel (%p453) target = $region64
        $region63: #{transformer_layer_forward.1} parent=59 // pred_region
          %p456 = scmp.lt.s32.totalorder %s26, 1
          %s457 = scalar_select %p456, %s26, 1
          %s458 = smul.addr %s457, 2
          %s459 = smul.addr %s458, 8
          %s460 = scalar_lea.vmem %s0, %s459
        $region64: #{transformer_layer_forward.1} parent=59 // pred_fallthru
          _
        // Predicated region
        $region65: #{transformer_layer_forward.1} parent=59 // pred_check
          %p461 = pneg %p72
        $region66: #{transformer_layer_forward.1} parent=59 // pred_check_branch
          %463 = sbr.rel (%p461) target = $region68
        $region67: #{transformer_layer_forward.1} parent=59 // pred_region
          %p464 = scmp.lt.s32.totalorder %s26, 1
          %s465 = scalar_select %p464, %s26, 1
          %s466 = scalar_lea.vmem %s1, %s465
        $region68: #{transformer_layer_forward.1} parent=59 // pred_fallthru
          _
        // Predicated region
        $region69: #{transformer_layer_forward.1} parent=59 // pred_check
          %p467 = pneg %p98
        $region70: #{transformer_layer_forward.1} parent=59 // pred_check_branch
          %469 = sbr.rel (%p467) target = $region72
        $region71: #{transformer_layer_forward.1} parent=59 // pred_region
          %p470 = scmp.lt.s32.totalorder %s26, 1
          %s471 = scalar_select %p470, %s26, 1
          %s472 = smul.addr %s471, 2
          %s473 = smul.addr %s472, 8
          %s474 = scalar_lea.vmem %s2, %s473
        $region72: #{transformer_layer_forward.1} parent=59 // pred_fallthru
          _
      $region60: #{transformer_layer_forward.1} parent=5 // pred_fallthru
        _
      %p475 = scmp.le.s32.totalorder 1, %s26
      %p476 = scmp.lt.s32.totalorder %s26, 3
      %p477 = pnand %p475, %p476
      %p478 = pneg %p477
      // Predicated region
      $region73: #{transformer_layer_forward.1} parent=5 // pred_check
        _
      $region74: #{transformer_layer_forward.1} parent=5 // pred_check_branch
        %480 = sbr.rel (%p477) target = $region76
      $region75: #{transformer_layer_forward.1} parent=5 // pred_region
        %s481 = ssub.s32 %s26, 1
        // Predicated region
        $region77: #{transformer_layer_forward.1} parent=75 // pred_check
          %p482 = pneg %p125
        $region78: #{transformer_layer_forward.1} parent=75 // pred_check_branch
          %484 = sbr.rel (%p482) target = $region80
        $region79: #{transformer_layer_forward.1} parent=75 // pred_region
          %485 = dma.done [#allocation6], 6144
        $region80: #{transformer_layer_forward.1} parent=75 // pred_fallthru
          _
        // Predicated region
        $region81: #{transformer_layer_forward.1} parent=75 // pred_check
          %p486 = pneg %p167
        $region82: #{transformer_layer_forward.1} parent=75 // pred_check_branch
          %488 = sbr.rel (%p486) target = $region84
        $region83: #{transformer_layer_forward.1} parent=75 // pred_region
          %489 = dma.done [#allocation9], 2048
        $region84: #{transformer_layer_forward.1} parent=75 // pred_fallthru
          _
        // Predicated region
        $region85: #{transformer_layer_forward.1} parent=75 // pred_check
          %p490 = pneg %p230
        $region86: #{transformer_layer_forward.1} parent=75 // pred_check_branch
          %492 = sbr.rel (%p490) target = $region88
        $region87: #{transformer_layer_forward.1} parent=75 // pred_region
          %493 = dma.done [#allocation9], 12288
        $region88: #{transformer_layer_forward.1} parent=75 // pred_fallthru
          _
        // Predicated region
        $region89: #{transformer_layer_forward.1} parent=75 // pred_check
          %p494 = pneg %p272
        $region90: #{transformer_layer_forward.1} parent=75 // pred_check_branch
          %496 = sbr.rel (%p494) target = $region92
        $region91: #{transformer_layer_forward.1} parent=75 // pred_region
          %497 = dma.done [#allocation12], 12288
        $region92: #{transformer_layer_forward.1} parent=75 // pred_fallthru
          _
        %p498 = scmp.lt.s32.totalorder %s31, 1
        %s499 = scalar_select %p498, %s31, 1
        %s500 = smul.addr %s499, 2
        %s501 = smul.addr %s500, 8
        %s502 = scalar_lea.vmem %s0, %s501
        %p503 = pneg %p52
        %p504 = pneg %p49
        %p505 = scmp.lt.s32.totalorder %s31, 1
        %s506 = scalar_select %p505, %s31, 1
        %s507 = scalar_lea.vmem %s1, %s506
        %p508 = pneg %p78
        %p509 = pneg %p75
        %p510 = scmp.lt.s32.totalorder %s31, 1
        %s511 = scalar_select %p510, %s31, 1
        %s512 = smul.addr %s511, 2
        %s513 = smul.addr %s512, 8
        %s514 = scalar_lea.vmem %s2, %s513
        %p515 = pneg %p104
        %p516 = pneg %p101
        %p517 = pneg %p125
        %p518 = pneg %p122
        %p519 = pneg %p146
        %p520 = pneg %p143
        %p521 = pneg %p167
        %p522 = pneg %p164
        %p523 = pneg %p188
        %p524 = pneg %p185
        %p525 = pneg %p209
        %p526 = pneg %p206
        %p527 = pneg %p230
        %p528 = pneg %p227
        %p529 = pneg %p251
        %p530 = pneg %p248
        %p531 = pneg %p272
        %p532 = pneg %p269
        %p533 = pneg %p293
        %p534 = pneg %p290
        %p535 = pneg %p314
        %p536 = pneg %p311
        %p537 = pneg %p335
        %p538 = pneg %p332
        %p539 = pneg %p361
        %p540 = pneg %p358
        %s541 = sand.u32 %s348, 1
        %s542 = scalar_lea.sflag [#allocation7], %s541
        %s543 = sand.u32 %s348, 1
        %s544 = smul.addr %s543, 16
        %s545 = scalar_lea.vmem [#allocation13], %s544
        %p546 = scmp.lt.s32.totalorder %s31, 1
        %s547 = scalar_select %p546, %s31, 1
        %s548 = smul.addr %s547, 2
        %s549 = smul.addr %s548, 8
        %s550 = scalar_lea.vmem %s0, %s549
        %p551 = scmp.lt.s32.totalorder %s31, 1
        %s552 = scalar_select %p551, %s31, 1
        %s553 = scalar_lea.vmem %s1, %s552
        %p554 = scmp.lt.s32.totalorder %s31, 1
        %s555 = scalar_select %p554, %s31, 1
        %s556 = smul.addr %s555, 2
        %s557 = smul.addr %s556, 8
        %s558 = scalar_lea.vmem %s2, %s557
        %v559 = vld [vmem:[%s550] sm:$0xff]
        %v560 = vld [vmem:[%s550 + $0x8] sm:$0xff]
        %v561 = vld [vmem:[#allocation5] sm:$0xff]
        %v562 = vld [vmem:[#allocation5 + $0x8] sm:$0xff]
        %v563 = vld [vmem:[#allocation5 + $0x10] sm:$0xff]
        %v564 = vld [vmem:[#allocation5 + $0x18] sm:$0xff]
        %v565 = vld [vmem:[#allocation5 + $0x20] sm:$0xff]
        %v566 = vld [vmem:[#allocation5 + $0x28] sm:$0xff]
        %v567 = vld [vmem:[#allocation5 + $0x30] sm:$0xff]
        %v568 = vld [vmem:[#allocation5 + $0x38] sm:$0xff]
        %v569 = vld [vmem:[#allocation5 + $0x40] sm:$0xff]
        %v570 = vld [vmem:[#allocation5 + $0x48] sm:$0xff]
        %v571 = vld [vmem:[#allocation5 + $0x50] sm:$0xff]
        %v572 = vld [vmem:[#allocation5 + $0x58] sm:$0xff]
        %v573 = vld [vmem:[#allocation5 + $0x60] sm:$0xff]
        %v574 = vld [vmem:[#allocation5 + $0x68] sm:$0xff]
        %v575 = vld [vmem:[#allocation5 + $0x70] sm:$0xff]
        %v576 = vld [vmem:[#allocation5 + $0x78] sm:$0xff]
        %v577 = vld [vmem:[#allocation5 + $0x80] sm:$0xff]
        %v578 = vld [vmem:[#allocation5 + $0x88] sm:$0xff]
        %v579 = vld [vmem:[#allocation5 + $0x90] sm:$0xff]
        %v580 = vld [vmem:[#allocation5 + $0x98] sm:$0xff]
        %v581 = vld [vmem:[#allocation5 + $0xa0] sm:$0xff]
        %v582 = vld [vmem:[#allocation5 + $0xa8] sm:$0xff]
        %v583 = vld [vmem:[#allocation5 + $0xb0] sm:$0xff]
        %v584 = vld [vmem:[#allocation5 + $0xb8] sm:$0xff]
        %v585 = vld [vmem:[#allocation5 + $0xc0] sm:$0xff]
        %v586 = vld [vmem:[#allocation5 + $0xc8] sm:$0xff]
        %v587 = vld [vmem:[#allocation5 + $0xd0] sm:$0xff]
        %v588 = vld [vmem:[#allocation5 + $0xd8] sm:$0xff]
        %v589 = vld [vmem:[#allocation5 + $0xe0] sm:$0xff]
        %v590 = vld [vmem:[#allocation5 + $0xe8] sm:$0xff]
        %v591 = vld [vmem:[#allocation5 + $0xf0] sm:$0xff]
        %v592 = vld [vmem:[#allocation5 + $0xf8] sm:$0xff]
        %v593 = vld [vmem:[#allocation5 + $0x100] sm:$0xff]
        %v594 = vld [vmem:[#allocation5 + $0x108] sm:$0xff]
        %v595 = vld [vmem:[#allocation5 + $0x110] sm:$0xff]
        %v596 = vld [vmem:[#allocation5 + $0x118] sm:$0xff]
        %v597 = vld [vmem:[#allocation5 + $0x120] sm:$0xff]
        %v598 = vld [vmem:[#allocation5 + $0x128] sm:$0xff]
        %v599 = vld [vmem:[#allocation5 + $0x130] sm:$0xff]
        %v600 = vld [vmem:[#allocation5 + $0x138] sm:$0xff]
        %v601 = vld [vmem:[#allocation5 + $0x140] sm:$0xff]
        %v602 = vld [vmem:[#allocation5 + $0x148] sm:$0xff]
        %v603 = vld [vmem:[#allocation5 + $0x150] sm:$0xff]
        %v604 = vld [vmem:[#allocation5 + $0x158] sm:$0xff]
        %v605 = vld [vmem:[#allocation5 + $0x160] sm:$0xff]
        %v606 = vld [vmem:[#allocation5 + $0x168] sm:$0xff]
        %v607 = vld [vmem:[#allocation5 + $0x170] sm:$0xff]
        %v608 = vld [vmem:[#allocation5 + $0x178] sm:$0xff]
        %v609 = vld [vmem:[%s4] sm:$0x7]
        %v611 = vlaneseq
        %v612 = vshrl.u32 %v611, 7
        %v613 = vsub.s32 0, %v612
        %v614 = vrot.slane %v609, %v613
        %v615 = vlaneseq
        %v616 = vshrl.u32 %v615, 7
        %v617 = vsub.s32 1, %v616
        %v618 = vrot.slane %v609, %v617
        %v619 = vlaneseq
        %v620 = vshrl.u32 %v619, 7
        %v621 = vsub.s32 2, %v620
        %v622 = vrot.slane %v609, %v621
        %626 = vmatprep.subr.mxu0 %v562
        %627 = vmatpush1.msra.mxu0 %v561
        %628 = vmatprep.subr.mxu0 %v565
        %629 = vmatpush1.msra.mxu0 %v564
        %630 = vmatprep.subr.mxu0 %v568
        %631 = vmatpush1.msra.mxu0 %v567
        %632 = vmatprep.subr.mxu0 %v571
        %633 = vmatpush1.msra.mxu0 %v570
        %634 = vmatprep.subr.mxu0 %v574
        %635 = vmatpush1.msra.mxu0 %v573
        %636 = vmatprep.subr.mxu0 %v577
        %637 = vmatpush1.msra.mxu0 %v576
        %638 = vmatprep.subr.mxu0 %v580
        %639 = vmatpush1.msra.mxu0 %v579
        %640 = vmatprep.subr.mxu0 %v583
        %641 = vmatpush1.msra.mxu0 %v582
        %642 = vmatprep.subr.mxu0 %v586
        %643 = vmatpush1.msra.mxu0 %v585
        %644 = vmatprep.subr.mxu0 %v589
        %645 = vmatpush1.msra.mxu0 %v588
        %646 = vmatprep.subr.mxu0 %v592
        %647 = vmatpush1.msra.mxu0 %v591
        %648 = vmatprep.subr.mxu0 %v595
        %649 = vmatpush1.msra.mxu0 %v594
        %650 = vmatprep.subr.mxu0 %v598
        %651 = vmatpush1.msra.mxu0 %v597
        %652 = vmatprep.subr.mxu0 %v601
        %653 = vmatpush1.msra.mxu0 %v600
        %654 = vmatprep.subr.mxu0 %v604
        %655 = vmatpush1.msra.mxu0 %v603
        %656 = vmatprep.subr.mxu0 %v607
        %657 = vmatpush1.msra.mxu0 %v606
        %658 = vmatprep.subr.mxu0 0.0
        %659 = vmatpush1.msra.mxu0 0.0
        %660 = vmatprep.subr.mxu0 0.0
        %661 = vmatpush1.msra.mxu0 0.0
        %662 = vmatprep.subr.mxu0 0.0
        %663 = vmatpush1.msra.mxu0 0.0
        %664 = vmatprep.subr.mxu0 0.0
        %665 = vmatpush1.msra.mxu0 0.0
        %666 = vmatprep.subr.mxu0 0.0
        %667 = vmatpush1.msra.mxu0 0.0
        %668 = vmatprep.subr.mxu0 0.0
        %669 = vmatpush1.msra.mxu0 0.0
        %670 = vmatprep.subr.mxu0 0.0
        %671 = vmatpush1.msra.mxu0 0.0
        %672 = vmatprep.subr.mxu0 0.0
        %673 = vmatpush1.msra.mxu0 0.0
        %674 = vmatprep.subr.mxu0 0.0
        %675 = vmatpush1.msra.mxu0 0.0
        %676 = vmatprep.subr.mxu0 0.0
        %677 = vmatpush1.msra.mxu0 0.0
        %678 = vmatprep.subr.mxu0 0.0
        %679 = vmatpush1.msra.mxu0 0.0
        %680 = vmatprep.subr.mxu0 0.0
        %681 = vmatpush1.msra.mxu0 0.0
        %682 = vmatprep.subr.mxu0 0.0
        %683 = vmatpush1.msra.mxu0 0.0
        %684 = vmatprep.subr.mxu0 0.0
        %685 = vmatpush1.msra.mxu0 0.0
        %686 = vmatprep.subr.mxu0 0.0
        %687 = vmatpush1.msra.mxu0 0.0
        %688 = vmatprep.subr.mxu0 0.0
        %689 = vmatpush1.msra.mxu0 0.0
        %690 = vmatprep.mubr.f32.mxu0 0.0
        %691 = vmatmul.mubr.f32.gmra.mrb[0].mxu0 %v559
        %v692 = vpop.f32.mrb[0].mxu0
        %v693 = vadd.f32 %v614, %v692
        %v694 = vpop.f32.mrb[0].mxu0
        %v695 = vadd.f32 %v618, %v694
        %696 = vmatprep.mubr.f32.mxu0 0.0
        %697 = vmatmul.mubr.f32.gmra.mrb[0].mxu0 %v560
        %v698 = vpop.f32.mrb[0].mxu0
        %v699 = vadd.f32 %v614, %v698
        %v700 = vpop.f32.mrb[0].mxu0
        %v701 = vadd.f32 %v618, %v700
        %702 = vdwg.mxu0
        %703 = vmatprep.subr.mxu0 0.0
        %704 = vmatpush1.msra.mxu0 %v563
        %705 = vmatprep.subr.mxu0 0.0
        %706 = vmatpush1.msra.mxu0 %v566
        %707 = vmatprep.subr.mxu0 0.0
        %708 = vmatpush1.msra.mxu0 %v569
        %709 = vmatprep.subr.mxu0 0.0
        %710 = vmatpush1.msra.mxu0 %v572
        %711 = vmatprep.subr.mxu0 0.0
        %712 = vmatpush1.msra.mxu0 %v575
        %713 = vmatprep.subr.mxu0 0.0
        %714 = vmatpush1.msra.mxu0 %v578
        %715 = vmatprep.subr.mxu0 0.0
        %716 = vmatpush1.msra.mxu0 %v581
        %717 = vmatprep.subr.mxu0 0.0
        %718 = vmatpush1.msra.mxu0 %v584
        %719 = vmatprep.subr.mxu0 0.0
        %720 = vmatpush1.msra.mxu0 %v587
        %721 = vmatprep.subr.mxu0 0.0
        %722 = vmatpush1.msra.mxu0 %v590
        %723 = vmatprep.subr.mxu0 0.0
        %724 = vmatpush1.msra.mxu0 %v593
        %725 = vmatprep.subr.mxu0 0.0
        %726 = vmatpush1.msra.mxu0 %v596
        %727 = vmatprep.subr.mxu0 0.0
        %728 = vmatpush1.msra.mxu0 %v599
        %729 = vmatprep.subr.mxu0 0.0
        %730 = vmatpush1.msra.mxu0 %v602
        %731 = vmatprep.subr.mxu0 0.0
        %732 = vmatpush1.msra.mxu0 %v605
        %733 = vmatprep.subr.mxu0 0.0
        %734 = vmatpush1.msra.mxu0 %v608
        %735 = vmatprep.subr.mxu0 0.0
        %736 = vmatpush1.msra.mxu0 0.0
        %737 = vmatprep.subr.mxu0 0.0
        %738 = vmatpush1.msra.mxu0 0.0
        %739 = vmatprep.subr.mxu0 0.0
        %740 = vmatpush1.msra.mxu0 0.0
        %741 = vmatprep.subr.mxu0 0.0
        %742 = vmatpush1.msra.mxu0 0.0
        %743 = vmatprep.subr.mxu0 0.0
        %744 = vmatpush1.msra.mxu0 0.0
        %745 = vmatprep.subr.mxu0 0.0
        %746 = vmatpush1.msra.mxu0 0.0
        %747 = vmatprep.subr.mxu0 0.0
        %748 = vmatpush1.msra.mxu0 0.0
        %749 = vmatprep.subr.mxu0 0.0
        %750 = vmatpush1.msra.mxu0 0.0
        %751 = vmatprep.subr.mxu0 0.0
        %752 = vmatpush1.msra.mxu0 0.0
        %753 = vmatprep.subr.mxu0 0.0
        %754 = vmatpush1.msra.mxu0 0.0
        %755 = vmatprep.subr.mxu0 0.0
        %756 = vmatpush1.msra.mxu0 0.0
        %757 = vmatprep.subr.mxu0 0.0
        %758 = vmatpush1.msra.mxu0 0.0
        %759 = vmatprep.subr.mxu0 0.0
        %760 = vmatpush1.msra.mxu0 0.0
        %761 = vmatprep.subr.mxu0 0.0
        %762 = vmatpush1.msra.mxu0 0.0
        %763 = vmatprep.subr.mxu0 0.0
        %764 = vmatpush1.msra.mxu0 0.0
        %765 = vmatprep.subr.mxu0 0.0
        %766 = vmatpush1.msra.mxu0 0.0
        %767 = vmatprep.mubr.f32.mxu0 0.0
        %768 = vmatmul.mubr.f32.gmra.mrb[0].mxu0 %v559
        %v769 = vpop.f32.mrb[0].mxu0
        %v770 = vadd.f32 %v622, %v769
        %v771 = vpop.f32.mrb[0].mxu0
        %772 = vmatprep.mubr.f32.mxu0 0.0
        %773 = vmatmul.mubr.f32.gmra.mrb[0].mxu0 %v560
        %v774 = vpop.f32.mrb[0].mxu0
        %v775 = vadd.f32 %v622, %v774
        %v776 = vpop.f32.mrb[0].mxu0
        %777 = vdwg.mxu0
        %v778 = vld [vmem:[%s553] sm:$0x1]
        %vm779 = vcmp.gt.f32.partialorder %v778, 0.0
        %v780 = vsel %vm779, 0.0, -1e+30
        %v781 = vmul.f32 %v693, 0.17677669
        %v782 = vmul.f32 %v699, 0.17677669
        %v784 = vlaneseq
        %v785 = vshrl.u32 %v784, 7
        %v786 = vsub.s32 0, %v785
        %v787 = vrot.slane %v780, %v786
        %vm789 = vcmask 261120
        %v791 = vsel %vm789, %v781, 0
        %v794 = vsel %vm789, %v782, 0
        %v797 = vsel %vm789, %v695, 0
        %v800 = vsel %vm789, %v701, 0
        %802 = vmatprep.subr.mxu0 0.0
        %803 = vmatpush1.xpose.msra.mxu0 %v797
        %804 = vmatprep.subr.mxu0 0.0
        %805 = vmatpush1.xpose.msra.mxu0 %v800
        %806 = vmatprep.subr.mxu0 0.0
        %807 = vmatpush1.xpose.msra.mxu0 0.0
        %808 = vmatprep.subr.mxu0 0.0
        %809 = vmatpush1.xpose.msra.mxu0 0.0
        %810 = vmatprep.subr.mxu0 0.0
        %811 = vmatpush1.xpose.msra.mxu0 0.0
        %812 = vmatprep.subr.mxu0 0.0
        %813 = vmatpush1.xpose.msra.mxu0 0.0
        %814 = vmatprep.subr.mxu0 0.0
        %815 = vmatpush1.xpose.msra.mxu0 0.0
        %816 = vmatprep.subr.mxu0 0.0
        %817 = vmatpush1.xpose.msra.mxu0 0.0
        %818 = vmatprep.subr.mxu0 0.0
        %819 = vmatpush1.xpose.msra.mxu0 0.0
        %820 = vmatprep.subr.mxu0 0.0
        %821 = vmatpush1.xpose.msra.mxu0 0.0
        %822 = vmatprep.subr.mxu0 0.0
        %823 = vmatpush1.xpose.msra.mxu0 0.0
        %824 = vmatprep.subr.mxu0 0.0
        %825 = vmatpush1.xpose.msra.mxu0 0.0
        %826 = vmatprep.subr.mxu0 0.0
        %827 = vmatpush1.xpose.msra.mxu0 0.0
        %828 = vmatprep.subr.mxu0 0.0
        %829 = vmatpush1.xpose.msra.mxu0 0.0
        %830 = vmatprep.subr.mxu0 0.0
        %831 = vmatpush1.xpose.msra.mxu0 0.0
        %832 = vmatprep.subr.mxu0 0.0
        %833 = vmatpush1.xpose.msra.mxu0 0.0
        %834 = vmatprep.subr.mxu0 0.0
        %835 = vmatpush1.xpose.msra.mxu0 0.0
        %836 = vmatprep.subr.mxu0 0.0
        %837 = vmatpush1.xpose.msra.mxu0 0.0
        %838 = vmatprep.subr.mxu0 0.0
        %839 = vmatpush1.xpose.msra.mxu0 0.0
        %840 = vmatprep.subr.mxu0 0.0
        %841 = vmatpush1.xpose.msra.mxu0 0.0
        %842 = vmatprep.subr.mxu0 0.0
        %843 = vmatpush1.xpose.msra.mxu0 0.0
        %844 = vmatprep.subr.mxu0 0.0
        %845 = vmatpush1.xpose.msra.mxu0 0.0
        %846 = vmatprep.subr.mxu0 0.0
        %847 = vmatpush1.xpose.msra.mxu0 0.0
        %848 = vmatprep.subr.mxu0 0.0
        %849 = vmatpush1.xpose.msra.mxu0 0.0
        %850 = vmatprep.subr.mxu0 0.0
        %851 = vmatpush1.xpose.msra.mxu0 0.0
        %852 = vmatprep.subr.mxu0 0.0
        %853 = vmatpush1.xpose.msra.mxu0 0.0
        %854 = vmatprep.subr.mxu0 0.0
        %855 = vmatpush1.xpose.msra.mxu0 0.0
        %856 = vmatprep.subr.mxu0 0.0
        %857 = vmatpush1.xpose.msra.mxu0 0.0
        %858 = vmatprep.subr.mxu0 0.0
        %859 = vmatpush1.xpose.msra.mxu0 0.0
        %860 = vmatprep.subr.mxu0 0.0
        %861 = vmatpush1.xpose.msra.mxu0 0.0
        %862 = vmatprep.subr.mxu0 0.0
        %863 = vmatpush1.xpose.msra.mxu0 0.0
        %864 = vmatprep.subr.mxu0 0.0
        %865 = vmatpush1.xpose.msra.mxu0 0.0
        %866 = vmatprep.mubr.f32.mxu0 0.0
        %867 = vmatmul.mubr.f32.gmra.mrb[0].mxu0 %v791
        %v868 = vpop.f32.mrb[0].mxu0
        %v869 = vadd.f32 %v787, %v868
        %v870 = vpop.f32.mrb[0].mxu0
        %871 = vmatprep.mubr.f32.mxu0 0.0
        %872 = vmatmul.mubr.f32.gmra.mrb[0].mxu0 %v794
        %v873 = vpop.f32.mrb[0].mxu0
        %v874 = vadd.f32 %v787, %v873
        %v875 = vpop.f32.mrb[0].mxu0
        %876 = vdwg.mxu0
        %vm877 = vcmask 130048
        %v878 = vsel %vm877, %v869, -inf
        %879 = vmax.xlane.f32.xlu0 %v878
        %v880 = vpop.xlane.xlu0 %879
        %v881 = vsel %vm877, %v874, -inf
        %882 = vmax.xlane.f32.xlu0 %v881
        %v883 = vpop.xlane.xlu0 %882
        %v884 = vsub.f32 %v869, %v880
        %v885 = vsub.f32 %v874, %v883
        %v886 = vmul.f32 %v884, 1.442695
        %v887 = vpow.pop %v886
        %v888 = vmul.f32 %v885, 1.442695
        %v889 = vpow.pop %v888
        %v890 = vsel %vm877, %v887, 0.0
        %891 = vadd.xlane.f32.xlu0 %v890
        %v892 = vpop.xlane.xlu0 %891
        %v893 = vsel %vm877, %v889, 0.0
        %894 = vadd.xlane.f32.xlu0 %v893
        %v895 = vpop.xlane.xlu0 %894
        %v896 = vrcp.pop %v892
        %v897 = vrcp.pop %v895
        %v899 = vsel %vm877, %v887, 0
        %v902 = vsel %vm877, %v889, 0
        %904 = vmatprep.subr.mxu0 0.0
        %905 = vmatpush1.msra.mxu0 %v770
        %906 = vmatprep.subr.mxu0 0.0
        %907 = vmatpush1.msra.mxu0 %v775
        %908 = vmatprep.subr.mxu0 0.0
        %909 = vmatpush1.msra.mxu0 0.0
        %910 = vmatprep.subr.mxu0 0.0
        %911 = vmatpush1.msra.mxu0 0.0
        %912 = vmatprep.subr.mxu0 0.0
        %913 = vmatpush1.msra.mxu0 0.0
        %914 = vmatprep.subr.mxu0 0.0
        %915 = vmatpush1.msra.mxu0 0.0
        %916 = vmatprep.subr.mxu0 0.0
        %917 = vmatpush1.msra.mxu0 0.0
        %918 = vmatprep.subr.mxu0 0.0
        %919 = vmatpush1.msra.mxu0 0.0
        %920 = vmatprep.subr.mxu0 0.0
        %921 = vmatpush1.msra.mxu0 0.0
        %922 = vmatprep.subr.mxu0 0.0
        %923 = vmatpush1.msra.mxu0 0.0
        %924 = vmatprep.subr.mxu0 0.0
        %925 = vmatpush1.msra.mxu0 0.0
        %926 = vmatprep.subr.mxu0 0.0
        %927 = vmatpush1.msra.mxu0 0.0
        %928 = vmatprep.subr.mxu0 0.0
        %929 = vmatpush1.msra.mxu0 0.0
        %930 = vmatprep.subr.mxu0 0.0
        %931 = vmatpush1.msra.mxu0 0.0
        %932 = vmatprep.subr.mxu0 0.0
        %933 = vmatpush1.msra.mxu0 0.0
        %934 = vmatprep.subr.mxu0 0.0
        %935 = vmatpush1.msra.mxu0 0.0
        %936 = vmatprep.subr.mxu0 0.0
        %937 = vmatpush1.msra.mxu0 0.0
        %938 = vmatprep.subr.mxu0 0.0
        %939 = vmatpush1.msra.mxu0 0.0
        %940 = vmatprep.subr.mxu0 0.0
        %941 = vmatpush1.msra.mxu0 0.0
        %942 = vmatprep.subr.mxu0 0.0
        %943 = vmatpush1.msra.mxu0 0.0
        %944 = vmatprep.subr.mxu0 0.0
        %945 = vmatpush1.msra.mxu0 0.0
        %946 = vmatprep.subr.mxu0 0.0
        %947 = vmatpush1.msra.mxu0 0.0
        %948 = vmatprep.subr.mxu0 0.0
        %949 = vmatpush1.msra.mxu0 0.0
        %950 = vmatprep.subr.mxu0 0.0
        %951 = vmatpush1.msra.mxu0 0.0
        %952 = vmatprep.subr.mxu0 0.0
        %953 = vmatpush1.msra.mxu0 0.0
        %954 = vmatprep.subr.mxu0 0.0
        %955 = vmatpush1.msra.mxu0 0.0
        %956 = vmatprep.subr.mxu0 0.0
        %957 = vmatpush1.msra.mxu0 0.0
        %958 = vmatprep.subr.mxu0 0.0
        %959 = vmatpush1.msra.mxu0 0.0
        %960 = vmatprep.subr.mxu0 0.0
        %961 = vmatpush1.msra.mxu0 0.0
        %962 = vmatprep.subr.mxu0 0.0
        %963 = vmatpush1.msra.mxu0 0.0
        %964 = vmatprep.subr.mxu0 0.0
        %965 = vmatpush1.msra.mxu0 0.0
        %966 = vmatprep.subr.mxu0 0.0
        %967 = vmatpush1.msra.mxu0 0.0
        %968 = vmatprep.mubr.f32.mxu0 0.0
        %969 = vmatmul.mubr.f32.gmra.mrb[0].mxu0 %v899
        %v970 = vpop.f32.mrb[0].mxu0
        %v971 = vadd.f32 0.0, %v970
        %v972 = vpop.f32.mrb[0].mxu0
        %973 = vmatprep.mubr.f32.mxu0 0.0
        %974 = vmatmul.mubr.f32.gmra.mrb[0].mxu0 %v902
        %v975 = vpop.f32.mrb[0].mxu0
        %v976 = vadd.f32 0.0, %v975
        %v977 = vpop.f32.mrb[0].mxu0
        %978 = vdwg.mxu0
        %v979 = vmul.f32 %v971, %v896
        %v980 = vmul.f32 %v976, %v897
        %981 = vst.msk [vmem:[#allocation2] sm:$0xff] %vm789, %v979
        %982 = vst.msk [vmem:[#allocation2 + $0x8] sm:$0xff] %vm789, %v980
        %983 = vrot.lane.b32.xlu0 %v781, 96
        %v984 = vpop.permute.xlu0 %983
        %985 = vrot.lane.b32.xlu0 %v782, 96
        %v986 = vpop.permute.xlu0 %985
        %987 = vrot.lane.b32.xlu0 %v695, 96
        %v988 = vpop.permute.xlu0 %987
        %989 = vrot.lane.b32.xlu0 %v701, 96
        %v990 = vpop.permute.xlu0 %989
        %v991 = vsel %vm789, %v984, 0
        %v993 = vsel %vm789, %v986, 0
        %v995 = vsel %vm789, %v988, 0
        %v997 = vsel %vm789, %v990, 0
        %999 = vmatprep.subr.mxu0 0.0
        %1000 = vmatpush1.xpose.msra.mxu0 %v995
        %1001 = vmatprep.subr.mxu0 0.0
        %1002 = vmatpush1.xpose.msra.mxu0 %v997
        %1003 = vmatprep.subr.mxu0 0.0
        %1004 = vmatpush1.xpose.msra.mxu0 0.0
        %1005 = vmatprep.subr.mxu0 0.0
        %1006 = vmatpush1.xpose.msra.mxu0 0.0
        %1007 = vmatprep.subr.mxu0 0.0
        %1008 = vmatpush1.xpose.msra.mxu0 0.0
        %1009 = vmatprep.subr.mxu0 0.0
        %1010 = vmatpush1.xpose.msra.mxu0 0.0
        %1011 = vmatprep.subr.mxu0 0.0
        %1012 = vmatpush1.xpose.msra.mxu0 0.0
        %1013 = vmatprep.subr.mxu0 0.0
        %1014 = vmatpush1.xpose.msra.mxu0 0.0
        %1015 = vmatprep.subr.mxu0 0.0
        %1016 = vmatpush1.xpose.msra.mxu0 0.0
        %1017 = vmatprep.subr.mxu0 0.0
        %1018 = vmatpush1.xpose.msra.mxu0 0.0
        %1019 = vmatprep.subr.mxu0 0.0
        %1020 = vmatpush1.xpose.msra.mxu0 0.0
        %1021 = vmatprep.subr.mxu0 0.0
        %1022 = vmatpush1.xpose.msra.mxu0 0.0
        %1023 = vmatprep.subr.mxu0 0.0
        %1024 = vmatpush1.xpose.msra.mxu0 0.0
        %1025 = vmatprep.subr.mxu0 0.0
        %1026 = vmatpush1.xpose.msra.mxu0 0.0
        %1027 = vmatprep.subr.mxu0 0.0
        %1028 = vmatpush1.xpose.msra.mxu0 0.0
        %1029 = vmatprep.subr.mxu0 0.0
        %1030 = vmatpush1.xpose.msra.mxu0 0.0
        %1031 = vmatprep.subr.mxu0 0.0
        %1032 = vmatpush1.xpose.msra.mxu0 0.0
        %1033 = vmatprep.subr.mxu0 0.0
        %1034 = vmatpush1.xpose.msra.mxu0 0.0
        %1035 = vmatprep.subr.mxu0 0.0
        %1036 = vmatpush1.xpose.msra.mxu0 0.0
        %1037 = vmatprep.subr.mxu0 0.0
        %1038 = vmatpush1.xpose.msra.mxu0 0.0
        %1039 = vmatprep.subr.mxu0 0.0
        %1040 = vmatpush1.xpose.msra.mxu0 0.0
        %1041 = vmatprep.subr.mxu0 0.0
        %1042 = vmatpush1.xpose.msra.mxu0 0.0
        %1043 = vmatprep.subr.mxu0 0.0
        %1044 = vmatpush1.xpose.msra.mxu0 0.0
        %1045 = vmatprep.subr.mxu0 0.0
        %1046 = vmatpush1.xpose.msra.mxu0 0.0
        %1047 = vmatprep.subr.mxu0 0.0
        %1048 = vmatpush1.xpose.msra.mxu0 0.0
        %1049 = vmatprep.subr.mxu0 0.0
        %1050 = vmatpush1.xpose.msra.mxu0 0.0
        %1051 = vmatprep.subr.mxu0 0.0
        %1052 = vmatpush1.xpose.msra.mxu0 0.0
        %1053 = vmatprep.subr.mxu0 0.0
        %1054 = vmatpush1.xpose.msra.mxu0 0.0
        %1055 = vmatprep.subr.mxu0 0.0
        %1056 = vmatpush1.xpose.msra.mxu0 0.0
        %1057 = vmatprep.subr.mxu0 0.0
        %1058 = vmatpush1.xpose.msra.mxu0 0.0
        %1059 = vmatprep.subr.mxu0 0.0
        %1060 = vmatpush1.xpose.msra.mxu0 0.0
        %1061 = vmatprep.subr.mxu0 0.0
        %1062 = vmatpush1.xpose.msra.mxu0 0.0
        %1063 = vmatprep.mubr.f32.mxu0 0.0
        %1064 = vmatmul.mubr.f32.gmra.mrb[0].mxu0 %v991
        %v1065 = vpop.f32.mrb[0].mxu0
        %v1066 = vadd.f32 %v787, %v1065
        %v1067 = vpop.f32.mrb[0].mxu0
        %1068 = vmatprep.mubr.f32.mxu0 0.0
        %1069 = vmatmul.mubr.f32.gmra.mrb[0].mxu0 %v993
        %v1070 = vpop.f32.mrb[0].mxu0
        %v1071 = vadd.f32 %v787, %v1070
        %v1072 = vpop.f32.mrb[0].mxu0
        %1073 = vdwg.mxu0
        %v1074 = vsel %vm877, %v1066, -inf
        %1075 = vmax.xlane.f32.xlu0 %v1074
        %v1076 = vpop.xlane.xlu0 %1075
        %v1077 = vsel %vm877, %v1071, -inf
        %1078 = vmax.xlane.f32.xlu0 %v1077
        %v1079 = vpop.xlane.xlu0 %1078
        %v1080 = vsub.f32 %v1066, %v1076
        %v1081 = vsub.f32 %v1071, %v1079
        %v1082 = vmul.f32 %v1080, 1.442695
        %v1083 = vpow.pop %v1082
        %v1084 = vmul.f32 %v1081, 1.442695
        %v1085 = vpow.pop %v1084
        %v1086 = vsel %vm877, %v1083, 0.0
        %1087 = vadd.xlane.f32.xlu0 %v1086
        %v1088 = vpop.xlane.xlu0 %1087
        %v1089 = vsel %vm877, %v1085, 0.0
        %1090 = vadd.xlane.f32.xlu0 %v1089
        %v1091 = vpop.xlane.xlu0 %1090
        %v1092 = vrcp.pop %v1088
        %v1093 = vrcp.pop %v1091
        %1096 = vrot.lane.b32.xlu0 %v770, 96
        %v1097 = vpop.permute.xlu0 %1096
        %1098 = vrot.lane.b32.xlu0 %v775, 96
        %v1099 = vpop.permute.xlu0 %1098
        %v1103 = vsel %vm877, %v1083, 0
        %v1106 = vsel %vm877, %v1085, 0
        %1108 = vmatprep.subr.mxu0 0.0
        %1109 = vmatpush1.msra.mxu0 %v1097
        %1110 = vmatprep.subr.mxu0 0.0
        %1111 = vmatpush1.msra.mxu0 %v1099
        %1112 = vmatprep.subr.mxu0 0.0
        %1113 = vmatpush1.msra.mxu0 0.0
        %1114 = vmatprep.subr.mxu0 0.0
        %1115 = vmatpush1.msra.mxu0 0.0
        %1116 = vmatprep.subr.mxu0 0.0
        %1117 = vmatpush1.msra.mxu0 0.0
        %1118 = vmatprep.subr.mxu0 0.0
        %1119 = vmatpush1.msra.mxu0 0.0
        %1120 = vmatprep.subr.mxu0 0.0
        %1121 = vmatpush1.msra.mxu0 0.0
        %1122 = vmatprep.subr.mxu0 0.0
        %1123 = vmatpush1.msra.mxu0 0.0
        %1124 = vmatprep.subr.mxu0 0.0
        %1125 = vmatpush1.msra.mxu0 0.0
        %1126 = vmatprep.subr.mxu0 0.0
        %1127 = vmatpush1.msra.mxu0 0.0
        %1128 = vmatprep.subr.mxu0 0.0
        %1129 = vmatpush1.msra.mxu0 0.0
        %1130 = vmatprep.subr.mxu0 0.0
        %1131 = vmatpush1.msra.mxu0 0.0
        %1132 = vmatprep.subr.mxu0 0.0
        %1133 = vmatpush1.msra.mxu0 0.0
        %1134 = vmatprep.subr.mxu0 0.0
        %1135 = vmatpush1.msra.mxu0 0.0
        %1136 = vmatprep.subr.mxu0 0.0
        %1137 = vmatpush1.msra.mxu0 0.0
        %1138 = vmatprep.subr.mxu0 0.0
        %1139 = vmatpush1.msra.mxu0 0.0
        %1140 = vmatprep.subr.mxu0 0.0
        %1141 = vmatpush1.msra.mxu0 0.0
        %1142 = vmatprep.subr.mxu0 0.0
        %1143 = vmatpush1.msra.mxu0 0.0
        %1144 = vmatprep.subr.mxu0 0.0
        %1145 = vmatpush1.msra.mxu0 0.0
        %1146 = vmatprep.subr.mxu0 0.0
        %1147 = vmatpush1.msra.mxu0 0.0
        %1148 = vmatprep.subr.mxu0 0.0
        %1149 = vmatpush1.msra.mxu0 0.0
        %1150 = vmatprep.subr.mxu0 0.0
        %1151 = vmatpush1.msra.mxu0 0.0
        %1152 = vmatprep.subr.mxu0 0.0
        %1153 = vmatpush1.msra.mxu0 0.0
        %1154 = vmatprep.subr.mxu0 0.0
        %1155 = vmatpush1.msra.mxu0 0.0
        %1156 = vmatprep.subr.mxu0 0.0
        %1157 = vmatpush1.msra.mxu0 0.0
        %1158 = vmatprep.subr.mxu0 0.0
        %1159 = vmatpush1.msra.mxu0 0.0
        %1160 = vmatprep.subr.mxu0 0.0
        %1161 = vmatpush1.msra.mxu0 0.0
        %1162 = vmatprep.subr.mxu0 0.0
        %1163 = vmatpush1.msra.mxu0 0.0
        %1164 = vmatprep.subr.mxu0 0.0
        %1165 = vmatpush1.msra.mxu0 0.0
        %1166 = vmatprep.subr.mxu0 0.0
        %1167 = vmatpush1.msra.mxu0 0.0
        %1168 = vmatprep.subr.mxu0 0.0
        %1169 = vmatpush1.msra.mxu0 0.0
        %1170 = vmatprep.subr.mxu0 0.0
        %1171 = vmatpush1.msra.mxu0 0.0
        %1172 = vmatprep.mubr.f32.mxu0 0.0
        %1173 = vmatmul.mubr.f32.gmra.mrb[0].mxu0 %v1103
        %v1174 = vpop.f32.mrb[0].mxu0
        %v1175 = vadd.f32 0.0, %v1174
        %v1176 = vpop.f32.mrb[0].mxu0
        %1177 = vmatprep.mubr.f32.mxu0 0.0
        %1178 = vmatmul.mubr.f32.gmra.mrb[0].mxu0 %v1106
        %v1179 = vpop.f32.mrb[0].mxu0
        %v1180 = vadd.f32 0.0, %v1179
        %v1181 = vpop.f32.mrb[0].mxu0
        %1182 = vdwg.mxu0
        %v1183 = vmul.f32 %v1175, %v1092
        %v1184 = vmul.f32 %v1180, %v1093
        %1187 = vrot.lane.b32.xlu0 %v1183, 32
        %v1188 = vpop.permute.xlu0 %1187
        %1189 = vrot.lane.b32.xlu0 %v1184, 32
        %v1190 = vpop.permute.xlu0 %1189
        %vm1193 = vcmask 523520
        %1194 = vst.msk [vmem:[#allocation2] sm:$0xff] %vm1193, %v1188
        %1195 = vst.msk [vmem:[#allocation2 + $0x8] sm:$0xff] %vm1193, %v1190
        %1196 = vrot.lane.b32.xlu0 %v781, 64
        %v1197 = vpop.permute.xlu0 %1196
        %1198 = vrot.lane.b32.xlu0 %v782, 64
        %v1199 = vpop.permute.xlu0 %1198
        %1200 = vrot.lane.b32.xlu0 %v695, 64
        %v1201 = vpop.permute.xlu0 %1200
        %1202 = vrot.lane.b32.xlu0 %v701, 64
        %v1203 = vpop.permute.xlu0 %1202
        %v1204 = vsel %vm789, %v1197, 0
        %v1206 = vsel %vm789, %v1199, 0
        %v1208 = vsel %vm789, %v1201, 0
        %v1210 = vsel %vm789, %v1203, 0
        %1212 = vmatprep.subr.mxu0 0.0
        %1213 = vmatpush1.xpose.msra.mxu0 %v1208
        %1214 = vmatprep.subr.mxu0 0.0
        %1215 = vmatpush1.xpose.msra.mxu0 %v1210
        %1216 = vmatprep.subr.mxu0 0.0
        %1217 = vmatpush1.xpose.msra.mxu0 0.0
        %1218 = vmatprep.subr.mxu0 0.0
        %1219 = vmatpush1.xpose.msra.mxu0 0.0
        %1220 = vmatprep.subr.mxu0 0.0
        %1221 = vmatpush1.xpose.msra.mxu0 0.0
        %1222 = vmatprep.subr.mxu0 0.0
        %1223 = vmatpush1.xpose.msra.mxu0 0.0
        %1224 = vmatprep.subr.mxu0 0.0
        %1225 = vmatpush1.xpose.msra.mxu0 0.0
        %1226 = vmatprep.subr.mxu0 0.0
        %1227 = vmatpush1.xpose.msra.mxu0 0.0
        %1228 = vmatprep.subr.mxu0 0.0
        %1229 = vmatpush1.xpose.msra.mxu0 0.0
        %1230 = vmatprep.subr.mxu0 0.0
        %1231 = vmatpush1.xpose.msra.mxu0 0.0
        %1232 = vmatprep.subr.mxu0 0.0
        %1233 = vmatpush1.xpose.msra.mxu0 0.0
        %1234 = vmatprep.subr.mxu0 0.0
        %1235 = vmatpush1.xpose.msra.mxu0 0.0
        %1236 = vmatprep.subr.mxu0 0.0
        %1237 = vmatpush1.xpose.msra.mxu0 0.0
        %1238 = vmatprep.subr.mxu0 0.0
        %1239 = vmatpush1.xpose.msra.mxu0 0.0
        %1240 = vmatprep.subr.mxu0 0.0
        %1241 = vmatpush1.xpose.msra.mxu0 0.0
        %1242 = vmatprep.subr.mxu0 0.0
        %1243 = vmatpush1.xpose.msra.mxu0 0.0
        %1244 = vmatprep.subr.mxu0 0.0
        %1245 = vmatpush1.xpose.msra.mxu0 0.0
        %1246 = vmatprep.subr.mxu0 0.0
        %1247 = vmatpush1.xpose.msra.mxu0 0.0
        %1248 = vmatprep.subr.mxu0 0.0
        %1249 = vmatpush1.xpose.msra.mxu0 0.0
        %1250 = vmatprep.subr.mxu0 0.0
        %1251 = vmatpush1.xpose.msra.mxu0 0.0
        %1252 = vmatprep.subr.mxu0 0.0
        %1253 = vmatpush1.xpose.msra.mxu0 0.0
        %1254 = vmatprep.subr.mxu0 0.0
        %1255 = vmatpush1.xpose.msra.mxu0 0.0
        %1256 = vmatprep.subr.mxu0 0.0
        %1257 = vmatpush1.xpose.msra.mxu0 0.0
        %1258 = vmatprep.subr.mxu0 0.0
        %1259 = vmatpush1.xpose.msra.mxu0 0.0
        %1260 = vmatprep.subr.mxu0 0.0
        %1261 = vmatpush1.xpose.msra.mxu0 0.0
        %1262 = vmatprep.subr.mxu0 0.0
        %1263 = vmatpush1.xpose.msra.mxu0 0.0
        %1264 = vmatprep.subr.mxu0 0.0
        %1265 = vmatpush1.xpose.msra.mxu0 0.0
        %1266 = vmatprep.subr.mxu0 0.0
        %1267 = vmatpush1.xpose.msra.mxu0 0.0
        %1268 = vmatprep.subr.mxu0 0.0
        %1269 = vmatpush1.xpose.msra.mxu0 0.0
        %1270 = vmatprep.subr.mxu0 0.0
        %1271 = vmatpush1.xpose.msra.mxu0 0.0
        %1272 = vmatprep.subr.mxu0 0.0
        %1273 = vmatpush1.xpose.msra.mxu0 0.0
        %1274 = vmatprep.subr.mxu0 0.0
        %1275 = vmatpush1.xpose.msra.mxu0 0.0
        %1276 = vmatprep.mubr.f32.mxu0 0.0
        %1277 = vmatmul.mubr.f32.gmra.mrb[0].mxu0 %v1204
        %v1278 = vpop.f32.mrb[0].mxu0
        %v1279 = vadd.f32 %v787, %v1278
        %v1280 = vpop.f32.mrb[0].mxu0
        %1281 = vmatprep.mubr.f32.mxu0 0.0
        %1282 = vmatmul.mubr.f32.gmra.mrb[0].mxu0 %v1206
        %v1283 = vpop.f32.mrb[0].mxu0
        %v1284 = vadd.f32 %v787, %v1283
        %v1285 = vpop.f32.mrb[0].mxu0
        %1286 = vdwg.mxu0
        %v1287 = vsel %vm877, %v1279, -inf
        %1288 = vmax.xlane.f32.xlu0 %v1287
        %v1289 = vpop.xlane.xlu0 %1288
        %v1290 = vsel %vm877, %v1284, -inf
        %1291 = vmax.xlane.f32.xlu0 %v1290
        %v1292 = vpop.xlane.xlu0 %1291
        %v1293 = vsub.f32 %v1279, %v1289
        %v1294 = vsub.f32 %v1284, %v1292
        %v1295 = vmul.f32 %v1293, 1.442695
        %v1296 = vpow.pop %v1295
        %v1297 = vmul.f32 %v1294, 1.442695
        %v1298 = vpow.pop %v1297
        %v1299 = vsel %vm877, %v1296, 0.0
        %1300 = vadd.xlane.f32.xlu0 %v1299
        %v1301 = vpop.xlane.xlu0 %1300
        %v1302 = vsel %vm877, %v1298, 0.0
        %1303 = vadd.xlane.f32.xlu0 %v1302
        %v1304 = vpop.xlane.xlu0 %1303
        %v1305 = vrcp.pop %v1301
        %v1306 = vrcp.pop %v1304
        %1307 = vrot.lane.b32.xlu0 %v770, 64
        %v1308 = vpop.permute.xlu0 %1307
        %1309 = vrot.lane.b32.xlu0 %v775, 64
        %v1310 = vpop.permute.xlu0 %1309
        %v1314 = vsel %vm877, %v1296, 0
        %v1317 = vsel %vm877, %v1298, 0
        %1319 = vmatprep.subr.mxu0 0.0
        %1320 = vmatpush1.msra.mxu0 %v1308
        %1321 = vmatprep.subr.mxu0 0.0
        %1322 = vmatpush1.msra.mxu0 %v1310
        %1323 = vmatprep.subr.mxu0 0.0
        %1324 = vmatpush1.msra.mxu0 0.0
        %1325 = vmatprep.subr.mxu0 0.0
        %1326 = vmatpush1.msra.mxu0 0.0
        %1327 = vmatprep.subr.mxu0 0.0
        %1328 = vmatpush1.msra.mxu0 0.0
        %1329 = vmatprep.subr.mxu0 0.0
        %1330 = vmatpush1.msra.mxu0 0.0
        %1331 = vmatprep.subr.mxu0 0.0
        %1332 = vmatpush1.msra.mxu0 0.0
        %1333 = vmatprep.subr.mxu0 0.0
        %1334 = vmatpush1.msra.mxu0 0.0
        %1335 = vmatprep.subr.mxu0 0.0
        %1336 = vmatpush1.msra.mxu0 0.0
        %1337 = vmatprep.subr.mxu0 0.0
        %1338 = vmatpush1.msra.mxu0 0.0
        %1339 = vmatprep.subr.mxu0 0.0
        %1340 = vmatpush1.msra.mxu0 0.0
        %1341 = vmatprep.subr.mxu0 0.0
        %1342 = vmatpush1.msra.mxu0 0.0
        %1343 = vmatprep.subr.mxu0 0.0
        %1344 = vmatpush1.msra.mxu0 0.0
        %1345 = vmatprep.subr.mxu0 0.0
        %1346 = vmatpush1.msra.mxu0 0.0
        %1347 = vmatprep.subr.mxu0 0.0
        %1348 = vmatpush1.msra.mxu0 0.0
        %1349 = vmatprep.subr.mxu0 0.0
        %1350 = vmatpush1.msra.mxu0 0.0
        %1351 = vmatprep.subr.mxu0 0.0
        %1352 = vmatpush1.msra.mxu0 0.0
        %1353 = vmatprep.subr.mxu0 0.0
        %1354 = vmatpush1.msra.mxu0 0.0
        %1355 = vmatprep.subr.mxu0 0.0
        %1356 = vmatpush1.msra.mxu0 0.0
        %1357 = vmatprep.subr.mxu0 0.0
        %1358 = vmatpush1.msra.mxu0 0.0
        %1359 = vmatprep.subr.mxu0 0.0
        %1360 = vmatpush1.msra.mxu0 0.0
        %1361 = vmatprep.subr.mxu0 0.0
        %1362 = vmatpush1.msra.mxu0 0.0
        %1363 = vmatprep.subr.mxu0 0.0
        %1364 = vmatpush1.msra.mxu0 0.0
        %1365 = vmatprep.subr.mxu0 0.0
        %1366 = vmatpush1.msra.mxu0 0.0
        %1367 = vmatprep.subr.mxu0 0.0
        %1368 = vmatpush1.msra.mxu0 0.0
        %1369 = vmatprep.subr.mxu0 0.0
        %1370 = vmatpush1.msra.mxu0 0.0
        %1371 = vmatprep.subr.mxu0 0.0
        %1372 = vmatpush1.msra.mxu0 0.0
        %1373 = vmatprep.subr.mxu0 0.0
        %1374 = vmatpush1.msra.mxu0 0.0
        %1375 = vmatprep.subr.mxu0 0.0
        %1376 = vmatpush1.msra.mxu0 0.0
        %1377 = vmatprep.subr.mxu0 0.0
        %1378 = vmatpush1.msra.mxu0 0.0
        %1379 = vmatprep.subr.mxu0 0.0
        %1380 = vmatpush1.msra.mxu0 0.0
        %1381 = vmatprep.subr.mxu0 0.0
        %1382 = vmatpush1.msra.mxu0 0.0
        %1383 = vmatprep.mubr.f32.mxu0 0.0
        %1384 = vmatmul.mubr.f32.gmra.mrb[0].mxu0 %v1314
        %v1385 = vpop.f32.mrb[0].mxu0
        %v1386 = vadd.f32 0.0, %v1385
        %v1387 = vpop.f32.mrb[0].mxu0
        %1388 = vmatprep.mubr.f32.mxu0 0.0
        %1389 = vmatmul.mubr.f32.gmra.mrb[0].mxu0 %v1317
        %v1390 = vpop.f32.mrb[0].mxu0
        %v1391 = vadd.f32 0.0, %v1390
        %v1392 = vpop.f32.mrb[0].mxu0
        %1393 = vdwg.mxu0
        %v1394 = vmul.f32 %v1386, %v1305
        %v1395 = vmul.f32 %v1391, %v1306
        %1398 = vrot.lane.b32.xlu0 %v1394, 64
        %v1399 = vpop.permute.xlu0 %1398
        %1400 = vrot.lane.b32.xlu0 %v1395, 64
        %v1401 = vpop.permute.xlu0 %1400
        %vm1404 = vcmask 785920
        %1405 = vst.msk [vmem:[#allocation2] sm:$0xff] %vm1404, %v1399
        %1406 = vst.msk [vmem:[#allocation2 + $0x8] sm:$0xff] %vm1404, %v1401
        %1407 = vrot.lane.b32.xlu0 %v781, 32
        %v1408 = vpop.permute.xlu0 %1407
        %1409 = vrot.lane.b32.xlu0 %v782, 32
        %v1410 = vpop.permute.xlu0 %1409
        %1411 = vrot.lane.b32.xlu0 %v695, 32
        %v1412 = vpop.permute.xlu0 %1411
        %1413 = vrot.lane.b32.xlu0 %v701, 32
        %v1414 = vpop.permute.xlu0 %1413
        %v1415 = vsel %vm789, %v1408, 0
        %v1417 = vsel %vm789, %v1410, 0
        %v1419 = vsel %vm789, %v1412, 0
        %v1421 = vsel %vm789, %v1414, 0
        %1423 = vmatprep.subr.mxu0 0.0
        %1424 = vmatpush1.xpose.msra.mxu0 %v1419
        %1425 = vmatprep.subr.mxu0 0.0
        %1426 = vmatpush1.xpose.msra.mxu0 %v1421
        %1427 = vmatprep.subr.mxu0 0.0
        %1428 = vmatpush1.xpose.msra.mxu0 0.0
        %1429 = vmatprep.subr.mxu0 0.0
        %1430 = vmatpush1.xpose.msra.mxu0 0.0
        %1431 = vmatprep.subr.mxu0 0.0
        %1432 = vmatpush1.xpose.msra.mxu0 0.0
        %1433 = vmatprep.subr.mxu0 0.0
        %1434 = vmatpush1.xpose.msra.mxu0 0.0
        %1435 = vmatprep.subr.mxu0 0.0
        %1436 = vmatpush1.xpose.msra.mxu0 0.0
        %1437 = vmatprep.subr.mxu0 0.0
        %1438 = vmatpush1.xpose.msra.mxu0 0.0
        %1439 = vmatprep.subr.mxu0 0.0
        %1440 = vmatpush1.xpose.msra.mxu0 0.0
        %1441 = vmatprep.subr.mxu0 0.0
        %1442 = vmatpush1.xpose.msra.mxu0 0.0
        %1443 = vmatprep.subr.mxu0 0.0
        %1444 = vmatpush1.xpose.msra.mxu0 0.0
        %1445 = vmatprep.subr.mxu0 0.0
        %1446 = vmatpush1.xpose.msra.mxu0 0.0
        %1447 = vmatprep.subr.mxu0 0.0
        %1448 = vmatpush1.xpose.msra.mxu0 0.0
        %1449 = vmatprep.subr.mxu0 0.0
        %1450 = vmatpush1.xpose.msra.mxu0 0.0
        %1451 = vmatprep.subr.mxu0 0.0
        %1452 = vmatpush1.xpose.msra.mxu0 0.0
        %1453 = vmatprep.subr.mxu0 0.0
        %1454 = vmatpush1.xpose.msra.mxu0 0.0
        %1455 = vmatprep.subr.mxu0 0.0
        %1456 = vmatpush1.xpose.msra.mxu0 0.0
        %1457 = vmatprep.subr.mxu0 0.0
        %1458 = vmatpush1.xpose.msra.mxu0 0.0
        %1459 = vmatprep.subr.mxu0 0.0
        %1460 = vmatpush1.xpose.msra.mxu0 0.0
        %1461 = vmatprep.subr.mxu0 0.0
        %1462 = vmatpush1.xpose.msra.mxu0 0.0
        %1463 = vmatprep.subr.mxu0 0.0
        %1464 = vmatpush1.xpose.msra.mxu0 0.0
        %1465 = vmatprep.subr.mxu0 0.0
        %1466 = vmatpush1.xpose.msra.mxu0 0.0
        %1467 = vmatprep.subr.mxu0 0.0
        %1468 = vmatpush1.xpose.msra.mxu0 0.0
        %1469 = vmatprep.subr.mxu0 0.0
        %1470 = vmatpush1.xpose.msra.mxu0 0.0
        %1471 = vmatprep.subr.mxu0 0.0
        %1472 = vmatpush1.xpose.msra.mxu0 0.0
        %1473 = vmatprep.subr.mxu0 0.0
        %1474 = vmatpush1.xpose.msra.mxu0 0.0
        %1475 = vmatprep.subr.mxu0 0.0
        %1476 = vmatpush1.xpose.msra.mxu0 0.0
        %1477 = vmatprep.subr.mxu0 0.0
        %1478 = vmatpush1.xpose.msra.mxu0 0.0
        %1479 = vmatprep.subr.mxu0 0.0
        %1480 = vmatpush1.xpose.msra.mxu0 0.0
        %1481 = vmatprep.subr.mxu0 0.0
        %1482 = vmatpush1.xpose.msra.mxu0 0.0
        %1483 = vmatprep.subr.mxu0 0.0
        %1484 = vmatpush1.xpose.msra.mxu0 0.0
        %1485 = vmatprep.subr.mxu0 0.0
        %1486 = vmatpush1.xpose.msra.mxu0 0.0
        %1487 = vmatprep.mubr.f32.mxu0 0.0
        %1488 = vmatmul.mubr.f32.gmra.mrb[0].mxu0 %v1415
        %v1489 = vpop.f32.mrb[0].mxu0
        %v1490 = vadd.f32 %v787, %v1489
        %v1491 = vpop.f32.mrb[0].mxu0
        %1492 = vmatprep.mubr.f32.mxu0 0.0
        %1493 = vmatmul.mubr.f32.gmra.mrb[0].mxu0 %v1417
        %v1494 = vpop.f32.mrb[0].mxu0
        %v1495 = vadd.f32 %v787, %v1494
        %v1496 = vpop.f32.mrb[0].mxu0
        %1497 = vdwg.mxu0
        %v1498 = vsel %vm877, %v1490, -inf
        %1499 = vmax.xlane.f32.xlu0 %v1498
        %v1500 = vpop.xlane.xlu0 %1499
        %v1501 = vsel %vm877, %v1495, -inf
        %1502 = vmax.xlane.f32.xlu0 %v1501
        %v1503 = vpop.xlane.xlu0 %1502
        %v1504 = vsub.f32 %v1490, %v1500
        %v1505 = vsub.f32 %v1495, %v1503
        %v1506 = vmul.f32 %v1504, 1.442695
        %v1507 = vpow.pop %v1506
        %v1508 = vmul.f32 %v1505, 1.442695
        %v1509 = vpow.pop %v1508
        %v1510 = vsel %vm877, %v1507, 0.0
        %1511 = vadd.xlane.f32.xlu0 %v1510
        %v1512 = vpop.xlane.xlu0 %1511
        %v1513 = vsel %vm877, %v1509, 0.0
        %1514 = vadd.xlane.f32.xlu0 %v1513
        %v1515 = vpop.xlane.xlu0 %1514
        %v1516 = vrcp.pop %v1512
        %v1517 = vrcp.pop %v1515
        %1518 = vrot.lane.b32.xlu0 %v770, 32
        %v1519 = vpop.permute.xlu0 %1518
        %1520 = vrot.lane.b32.xlu0 %v775, 32
        %v1521 = vpop.permute.xlu0 %1520
        %v1525 = vsel %vm877, %v1507, 0
        %v1528 = vsel %vm877, %v1509, 0
        %1530 = vmatprep.subr.mxu0 0.0
        %1531 = vmatpush1.msra.mxu0 %v1519
        %1532 = vmatprep.subr.mxu0 0.0
        %1533 = vmatpush1.msra.mxu0 %v1521
        %1534 = vmatprep.subr.mxu0 0.0
        %1535 = vmatpush1.msra.mxu0 0.0
        %1536 = vmatprep.subr.mxu0 0.0
        %1537 = vmatpush1.msra.mxu0 0.0
        %1538 = vmatprep.subr.mxu0 0.0
        %1539 = vmatpush1.msra.mxu0 0.0
        %1540 = vmatprep.subr.mxu0 0.0
        %1541 = vmatpush1.msra.mxu0 0.0
        %1542 = vmatprep.subr.mxu0 0.0
        %1543 = vmatpush1.msra.mxu0 0.0
        %1544 = vmatprep.subr.mxu0 0.0
        %1545 = vmatpush1.msra.mxu0 0.0
        %1546 = vmatprep.subr.mxu0 0.0
        %1547 = vmatpush1.msra.mxu0 0.0
        %1548 = vmatprep.subr.mxu0 0.0
        %1549 = vmatpush1.msra.mxu0 0.0
        %1550 = vmatprep.subr.mxu0 0.0
        %1551 = vmatpush1.msra.mxu0 0.0
        %1552 = vmatprep.subr.mxu0 0.0
        %1553 = vmatpush1.msra.mxu0 0.0
        %1554 = vmatprep.subr.mxu0 0.0
        %1555 = vmatpush1.msra.mxu0 0.0
        %1556 = vmatprep.subr.mxu0 0.0
        %1557 = vmatpush1.msra.mxu0 0.0
        %1558 = vmatprep.subr.mxu0 0.0
        %1559 = vmatpush1.msra.mxu0 0.0
        %1560 = vmatprep.subr.mxu0 0.0
        %1561 = vmatpush1.msra.mxu0 0.0
        %1562 = vmatprep.subr.mxu0 0.0
        %1563 = vmatpush1.msra.mxu0 0.0
        %1564 = vmatprep.subr.mxu0 0.0
        %1565 = vmatpush1.msra.mxu0 0.0
        %1566 = vmatprep.subr.mxu0 0.0
        %1567 = vmatpush1.msra.mxu0 0.0
        %1568 = vmatprep.subr.mxu0 0.0
        %1569 = vmatpush1.msra.mxu0 0.0
        %1570 = vmatprep.subr.mxu0 0.0
        %1571 = vmatpush1.msra.mxu0 0.0
        %1572 = vmatprep.subr.mxu0 0.0
        %1573 = vmatpush1.msra.mxu0 0.0
        %1574 = vmatprep.subr.mxu0 0.0
        %1575 = vmatpush1.msra.mxu0 0.0
        %1576 = vmatprep.subr.mxu0 0.0
        %1577 = vmatpush1.msra.mxu0 0.0
        %1578 = vmatprep.subr.mxu0 0.0
        %1579 = vmatpush1.msra.mxu0 0.0
        %1580 = vmatprep.subr.mxu0 0.0
        %1581 = vmatpush1.msra.mxu0 0.0
        %1582 = vmatprep.subr.mxu0 0.0
        %1583 = vmatpush1.msra.mxu0 0.0
        %1584 = vmatprep.subr.mxu0 0.0
        %1585 = vmatpush1.msra.mxu0 0.0
        %1586 = vmatprep.subr.mxu0 0.0
        %1587 = vmatpush1.msra.mxu0 0.0
        %1588 = vmatprep.subr.mxu0 0.0
        %1589 = vmatpush1.msra.mxu0 0.0
        %1590 = vmatprep.subr.mxu0 0.0
        %1591 = vmatpush1.msra.mxu0 0.0
        %1592 = vmatprep.subr.mxu0 0.0
        %1593 = vmatpush1.msra.mxu0 0.0
        %1594 = vmatprep.mubr.f32.mxu0 0.0
        %1595 = vmatmul.mubr.f32.gmra.mrb[0].mxu0 %v1525
        %v1596 = vpop.f32.mrb[0].mxu0
        %v1597 = vadd.f32 0.0, %v1596
        %v1598 = vpop.f32.mrb[0].mxu0
        %1599 = vmatprep.mubr.f32.mxu0 0.0
        %1600 = vmatmul.mubr.f32.gmra.mrb[0].mxu0 %v1528
        %v1601 = vpop.f32.mrb[0].mxu0
        %v1602 = vadd.f32 0.0, %v1601
        %v1603 = vpop.f32.mrb[0].mxu0
        %1604 = vdwg.mxu0
        %v1605 = vmul.f32 %v1597, %v1516
        %v1606 = vmul.f32 %v1602, %v1517
        %1609 = vrot.lane.b32.xlu0 %v1605, 96
        %v1610 = vpop.permute.xlu0 %1609
        %1611 = vrot.lane.b32.xlu0 %v1606, 96
        %v1612 = vpop.permute.xlu0 %1611
        %vm1615 = vcmask 1048320
        %1616 = vst.msk [vmem:[#allocation2] sm:$0xff] %vm1615, %v1610
        %1617 = vst.msk [vmem:[#allocation2 + $0x8] sm:$0xff] %vm1615, %v1612
        %v1618 = vld [vmem:[#allocation2] sm:$0xff]
        %v1619 = vld [vmem:[#allocation2 + $0x8] sm:$0xff]
        %v1620 = vld [vmem:[#allocation8] sm:$0xff]
        %v1621 = vld [vmem:[#allocation8 + $0x8] sm:$0xff]
        %v1622 = vld [vmem:[#allocation8 + $0x10] sm:$0xff]
        %v1623 = vld [vmem:[#allocation8 + $0x18] sm:$0xff]
        %v1624 = vld [vmem:[#allocation8 + $0x20] sm:$0xff]
        %v1625 = vld [vmem:[#allocation8 + $0x28] sm:$0xff]
        %v1626 = vld [vmem:[#allocation8 + $0x30] sm:$0xff]
        %v1627 = vld [vmem:[#allocation8 + $0x38] sm:$0xff]
        %v1628 = vld [vmem:[#allocation8 + $0x40] sm:$0xff]
        %v1629 = vld [vmem:[#allocation8 + $0x48] sm:$0xff]
        %v1630 = vld [vmem:[#allocation8 + $0x50] sm:$0xff]
        %v1631 = vld [vmem:[#allocation8 + $0x58] sm:$0xff]
        %v1632 = vld [vmem:[#allocation8 + $0x60] sm:$0xff]
        %v1633 = vld [vmem:[#allocation8 + $0x68] sm:$0xff]
        %v1634 = vld [vmem:[#allocation8 + $0x70] sm:$0xff]
        %v1635 = vld [vmem:[#allocation8 + $0x78] sm:$0xff]
        %1636 = vmatprep.subr.mxu0 0.0
        %1637 = vmatpush1.msra.mxu0 %v1620
        %1638 = vmatprep.subr.mxu0 0.0
        %1639 = vmatpush1.msra.mxu0 %v1621
        %1640 = vmatprep.subr.mxu0 0.0
        %1641 = vmatpush1.msra.mxu0 %v1622
        %1642 = vmatprep.subr.mxu0 0.0
        %1643 = vmatpush1.msra.mxu0 %v1623
        %1644 = vmatprep.subr.mxu0 0.0
        %1645 = vmatpush1.msra.mxu0 %v1624
        %1646 = vmatprep.subr.mxu0 0.0
        %1647 = vmatpush1.msra.mxu0 %v1625
        %1648 = vmatprep.subr.mxu0 0.0
        %1649 = vmatpush1.msra.mxu0 %v1626
        %1650 = vmatprep.subr.mxu0 0.0
        %1651 = vmatpush1.msra.mxu0 %v1627
        %1652 = vmatprep.subr.mxu0 0.0
        %1653 = vmatpush1.msra.mxu0 %v1628
        %1654 = vmatprep.subr.mxu0 0.0
        %1655 = vmatpush1.msra.mxu0 %v1629
        %1656 = vmatprep.subr.mxu0 0.0
        %1657 = vmatpush1.msra.mxu0 %v1630
        %1658 = vmatprep.subr.mxu0 0.0
        %1659 = vmatpush1.msra.mxu0 %v1631
        %1660 = vmatprep.subr.mxu0 0.0
        %1661 = vmatpush1.msra.mxu0 %v1632
        %1662 = vmatprep.subr.mxu0 0.0
        %1663 = vmatpush1.msra.mxu0 %v1633
        %1664 = vmatprep.subr.mxu0 0.0
        %1665 = vmatpush1.msra.mxu0 %v1634
        %1666 = vmatprep.subr.mxu0 0.0
        %1667 = vmatpush1.msra.mxu0 %v1635
        %1668 = vmatprep.subr.mxu0 0.0
        %1669 = vmatpush1.msra.mxu0 0.0
        %1670 = vmatprep.subr.mxu0 0.0
        %1671 = vmatpush1.msra.mxu0 0.0
        %1672 = vmatprep.subr.mxu0 0.0
        %1673 = vmatpush1.msra.mxu0 0.0
        %1674 = vmatprep.subr.mxu0 0.0
        %1675 = vmatpush1.msra.mxu0 0.0
        %1676 = vmatprep.subr.mxu0 0.0
        %1677 = vmatpush1.msra.mxu0 0.0
        %1678 = vmatprep.subr.mxu0 0.0
        %1679 = vmatpush1.msra.mxu0 0.0
        %1680 = vmatprep.subr.mxu0 0.0
        %1681 = vmatpush1.msra.mxu0 0.0
        %1682 = vmatprep.subr.mxu0 0.0
        %1683 = vmatpush1.msra.mxu0 0.0
        %1684 = vmatprep.subr.mxu0 0.0
        %1685 = vmatpush1.msra.mxu0 0.0
        %1686 = vmatprep.subr.mxu0 0.0
        %1687 = vmatpush1.msra.mxu0 0.0
        %1688 = vmatprep.subr.mxu0 0.0
        %1689 = vmatpush1.msra.mxu0 0.0
        %1690 = vmatprep.subr.mxu0 0.0
        %1691 = vmatpush1.msra.mxu0 0.0
        %1692 = vmatprep.subr.mxu0 0.0
        %1693 = vmatpush1.msra.mxu0 0.0
        %1694 = vmatprep.subr.mxu0 0.0
        %1695 = vmatpush1.msra.mxu0 0.0
        %1696 = vmatprep.subr.mxu0 0.0
        %1697 = vmatpush1.msra.mxu0 0.0
        %1698 = vmatprep.subr.mxu0 0.0
        %1699 = vmatpush1.msra.mxu0 0.0
        %1700 = vmatprep.mubr.f32.mxu0 0.0
        %1701 = vmatmul.mubr.f32.gmra.mrb[0].mxu0 %v1618
        %v1702 = vpop.f32.mrb[0].mxu0
        %v1703 = vadd.f32 0.0, %v1702
        %v1704 = vpop.f32.mrb[0].mxu0
        %1705 = vmatprep.mubr.f32.mxu0 0.0
        %1706 = vmatmul.mubr.f32.gmra.mrb[0].mxu0 %v1619
        %v1707 = vpop.f32.mrb[0].mxu0
        %v1708 = vadd.f32 0.0, %v1707
        %v1709 = vpop.f32.mrb[0].mxu0
        %1710 = vdwg.mxu0
        %v1711 = vadd.f32 %v559, %v1703
        %v1712 = vadd.f32 %v560, %v1708
        %v1713 = vld [vmem:[%s6] sm:$0x1]
        %v1714 = vld [vmem:[%s7] sm:$0x1]
        %1715 = vadd.xlane.f32.xlu0 %v1711
        %v1716 = vpop.xlane.xlu0 %1715
        %1717 = vadd.xlane.f32.xlu0 %v1712
        %v1718 = vpop.xlane.xlu0 %1717
        %v1719 = vrcp.pop 128.0
        %v1720 = vmul.f32 %v1716, %v1719
        %v1721 = vmul.f32 %v1718, %v1719
        %v1722 = vsub.f32 %v1711, %v1720
        %v1723 = vsub.f32 %v1712, %v1721
        %v1724 = vmul.f32 %v1722, %v1722
        %v1725 = vmul.f32 %v1723, %v1723
        %1726 = vadd.xlane.f32.xlu0 %v1724
        %v1727 = vpop.xlane.xlu0 %1726
        %1728 = vadd.xlane.f32.xlu0 %v1725
        %v1729 = vpop.xlane.xlu0 %1728
        %v1730 = vmul.f32 %v1727, %v1719
        %v1731 = vmul.f32 %v1729, %v1719
        %v1732 = vadd.f32 %v1730, 1e-05
        %v1733 = vadd.f32 %v1731, 1e-05
        %v1734 = vrsqrt.pop %v1732
        %v1735 = vrsqrt.pop %v1733
        %v1736 = vmul.f32 %v1722, %v1734
        %v1737 = vmul.f32 %v1723, %v1735
        %v1739 = vlaneseq
        %v1740 = vshrl.u32 %v1739, 7
        %v1741 = vsub.s32 0, %v1740
        %v1742 = vrot.slane %v1713, %v1741
        %v1744 = vmul.f32 %v1736, %v1742
        %v1745 = vmul.f32 %v1737, %v1742
        %v1747 = vlaneseq
        %v1748 = vshrl.u32 %v1747, 7
        %v1749 = vsub.s32 0, %v1748
        %v1750 = vrot.slane %v1714, %v1749
        %v1752 = vadd.f32 %v1744, %v1750
        %v1753 = vadd.f32 %v1745, %v1750
        %v1754 = vld [vmem:[%s558] sm:$0xff]
        %v1755 = vld [vmem:[%s558 + $0x8] sm:$0xff]
        %1757 = vset.pattern.permute.xlu0 0
        %1758 = vperm.xlu0 %1757, %v1754
        %v1759 = vpop.permute.xlu0 %1758
        %1762 = vset.pattern.permute.xlu0 0
        %1763 = vperm.xlu0 %1762, %v1755
        %v1764 = vpop.permute.xlu0 %1763
        %v1766 = vmul.f32 %v1752, %v1759
        %v1767 = vmul.f32 %v1753, %v1764
        %1768 = vst [vmem:[#allocation3 + $0x7] sm:$0x1] 0.0
        %1769 = vst [vmem:[#allocation3 + $0x18] sm:$0x1] 0.0
        %1770 = vst [vmem:[#allocation3 + $0x8] sm:$0xff] %v1766
        %1771 = vst [vmem:[#allocation3 + $0x10] sm:$0xff] %v1767
        %v1772 = vld [vmem:[#allocation3 + $0x7] sm:$0xff]
        %v1773 = vld [vmem:[#allocation3 + $0xf] sm:$0xff]
        %v1774 = vld [vmem:[#allocation10] sm:$0xff]
        %v1775 = vld [vmem:[#allocation10 + $0x8] sm:$0xff]
        %v1776 = vld [vmem:[#allocation10 + $0x10] sm:$0xff]
        %v1777 = vld [vmem:[#allocation10 + $0x18] sm:$0xff]
        %v1778 = vld [vmem:[#allocation10 + $0x20] sm:$0xff]
        %v1779 = vld [vmem:[#allocation10 + $0x28] sm:$0xff]
        %v1780 = vld [vmem:[#allocation10 + $0x30] sm:$0xff]
        %v1781 = vld [vmem:[#allocation10 + $0x38] sm:$0xff]
        %v1782 = vld [vmem:[#allocation10 + $0x40] sm:$0xff]
        %v1783 = vld [vmem:[#allocation10 + $0x48] sm:$0xff]
        %v1784 = vld [vmem:[#allocation10 + $0x50] sm:$0xff]
        %v1785 = vld [vmem:[#allocation10 + $0x58] sm:$0xff]
        %v1786 = vld [vmem:[#allocation10 + $0x60] sm:$0xff]
        %v1787 = vld [vmem:[#allocation10 + $0x68] sm:$0xff]
        %v1788 = vld [vmem:[#allocation10 + $0x70] sm:$0xff]
        %v1789 = vld [vmem:[#allocation10 + $0x78] sm:$0xff]
        %v1790 = vld [vmem:[#allocation10 + $0x80] sm:$0xff]
        %v1791 = vld [vmem:[#allocation10 + $0x88] sm:$0xff]
        %v1792 = vld [vmem:[#allocation10 + $0x90] sm:$0xff]
        %v1793 = vld [vmem:[#allocation10 + $0x98] sm:$0xff]
        %v1794 = vld [vmem:[#allocation10 + $0xa0] sm:$0xff]
        %v1795 = vld [vmem:[#allocation10 + $0xa8] sm:$0xff]
        %v1796 = vld [vmem:[#allocation10 + $0xb0] sm:$0xff]
        %v1797 = vld [vmem:[#allocation10 + $0xb8] sm:$0xff]
        %v1798 = vld [vmem:[#allocation10 + $0xc0] sm:$0xff]
        %v1799 = vld [vmem:[#allocation10 + $0xc8] sm:$0xff]
        %v1800 = vld [vmem:[#allocation10 + $0xd0] sm:$0xff]
        %v1801 = vld [vmem:[#allocation10 + $0xd8] sm:$0xff]
        %v1802 = vld [vmem:[#allocation10 + $0xe0] sm:$0xff]
        %v1803 = vld [vmem:[#allocation10 + $0xe8] sm:$0xff]
        %v1804 = vld [vmem:[#allocation10 + $0xf0] sm:$0xff]
        %v1805 = vld [vmem:[#allocation10 + $0xf8] sm:$0xff]
        %v1806 = vld [vmem:[#allocation3 + $0x8] sm:$0xff]
        %v1807 = vld [vmem:[#allocation3 + $0x10] sm:$0xff]
        %s1808 = scalar_lea.vmem [#allocation10], 256
        %v1809 = vld [vmem:[%s1808] sm:$0xff]
        %v1810 = vld [vmem:[%s1808 + $0x8] sm:$0xff]
        %v1811 = vld [vmem:[%s1808 + $0x10] sm:$0xff]
        %v1812 = vld [vmem:[%s1808 + $0x18] sm:$0xff]
        %v1813 = vld [vmem:[%s1808 + $0x20] sm:$0xff]
        %v1814 = vld [vmem:[%s1808 + $0x28] sm:$0xff]
        %v1815 = vld [vmem:[%s1808 + $0x30] sm:$0xff]
        %v1816 = vld [vmem:[%s1808 + $0x38] sm:$0xff]
        %v1817 = vld [vmem:[%s1808 + $0x40] sm:$0xff]
        %v1818 = vld [vmem:[%s1808 + $0x48] sm:$0xff]
        %v1819 = vld [vmem:[%s1808 + $0x50] sm:$0xff]
        %v1820 = vld [vmem:[%s1808 + $0x58] sm:$0xff]
        %v1821 = vld [vmem:[%s1808 + $0x60] sm:$0xff]
        %v1822 = vld [vmem:[%s1808 + $0x68] sm:$0xff]
        %v1823 = vld [vmem:[%s1808 + $0x70] sm:$0xff]
        %v1824 = vld [vmem:[%s1808 + $0x78] sm:$0xff]
        %v1825 = vld [vmem:[%s1808 + $0x80] sm:$0xff]
        %v1826 = vld [vmem:[%s1808 + $0x88] sm:$0xff]
        %v1827 = vld [vmem:[%s1808 + $0x90] sm:$0xff]
        %v1828 = vld [vmem:[%s1808 + $0x98] sm:$0xff]
        %v1829 = vld [vmem:[%s1808 + $0xa0] sm:$0xff]
        %v1830 = vld [vmem:[%s1808 + $0xa8] sm:$0xff]
        %v1831 = vld [vmem:[%s1808 + $0xb0] sm:$0xff]
        %v1832 = vld [vmem:[%s1808 + $0xb8] sm:$0xff]
        %v1833 = vld [vmem:[%s1808 + $0xc0] sm:$0xff]
        %v1834 = vld [vmem:[%s1808 + $0xc8] sm:$0xff]
        %v1835 = vld [vmem:[%s1808 + $0xd0] sm:$0xff]
        %v1836 = vld [vmem:[%s1808 + $0xd8] sm:$0xff]
        %v1837 = vld [vmem:[%s1808 + $0xe0] sm:$0xff]
        %v1838 = vld [vmem:[%s1808 + $0xe8] sm:$0xff]
        %v1839 = vld [vmem:[%s1808 + $0xf0] sm:$0xff]
        %v1840 = vld [vmem:[%s1808 + $0xf8] sm:$0xff]
        %1841 = vmatprep.subr.mxu0 %v1810
        %1842 = vmatpush1.msra.mxu0 %v1809
        %1843 = vmatprep.subr.mxu0 %v1812
        %1844 = vmatpush1.msra.mxu0 %v1811
        %1845 = vmatprep.subr.mxu0 %v1814
        %1846 = vmatpush1.msra.mxu0 %v1813
        %1847 = vmatprep.subr.mxu0 %v1816
        %1848 = vmatpush1.msra.mxu0 %v1815
        %1849 = vmatprep.subr.mxu0 %v1818
        %1850 = vmatpush1.msra.mxu0 %v1817
        %1851 = vmatprep.subr.mxu0 %v1820
        %1852 = vmatpush1.msra.mxu0 %v1819
        %1853 = vmatprep.subr.mxu0 %v1822
        %1854 = vmatpush1.msra.mxu0 %v1821
        %1855 = vmatprep.subr.mxu0 %v1824
        %1856 = vmatpush1.msra.mxu0 %v1823
        %1857 = vmatprep.subr.mxu0 %v1826
        %1858 = vmatpush1.msra.mxu0 %v1825
        %1859 = vmatprep.subr.mxu0 %v1828
        %1860 = vmatpush1.msra.mxu0 %v1827
        %1861 = vmatprep.subr.mxu0 %v1830
        %1862 = vmatpush1.msra.mxu0 %v1829
        %1863 = vmatprep.subr.mxu0 %v1832
        %1864 = vmatpush1.msra.mxu0 %v1831
        %1865 = vmatprep.subr.mxu0 %v1834
        %1866 = vmatpush1.msra.mxu0 %v1833
        %1867 = vmatprep.subr.mxu0 %v1836
        %1868 = vmatpush1.msra.mxu0 %v1835
        %1869 = vmatprep.subr.mxu0 %v1838
        %1870 = vmatpush1.msra.mxu0 %v1837
        %1871 = vmatprep.subr.mxu0 %v1840
        %1872 = vmatpush1.msra.mxu0 %v1839
        %1873 = vmatprep.subr.mxu0 0.0
        %1874 = vmatpush1.msra.mxu0 0.0
        %1875 = vmatprep.subr.mxu0 0.0
        %1876 = vmatpush1.msra.mxu0 0.0
        %1877 = vmatprep.subr.mxu0 0.0
        %1878 = vmatpush1.msra.mxu0 0.0
        %1879 = vmatprep.subr.mxu0 0.0
        %1880 = vmatpush1.msra.mxu0 0.0
        %1881 = vmatprep.subr.mxu0 0.0
        %1882 = vmatpush1.msra.mxu0 0.0
        %1883 = vmatprep.subr.mxu0 0.0
        %1884 = vmatpush1.msra.mxu0 0.0
        %1885 = vmatprep.subr.mxu0 0.0
        %1886 = vmatpush1.msra.mxu0 0.0
        %1887 = vmatprep.subr.mxu0 0.0
        %1888 = vmatpush1.msra.mxu0 0.0
        %1889 = vmatprep.subr.mxu0 0.0
        %1890 = vmatpush1.msra.mxu0 0.0
        %1891 = vmatprep.subr.mxu0 0.0
        %1892 = vmatpush1.msra.mxu0 0.0
        %1893 = vmatprep.subr.mxu0 0.0
        %1894 = vmatpush1.msra.mxu0 0.0
        %1895 = vmatprep.subr.mxu0 0.0
        %1896 = vmatpush1.msra.mxu0 0.0
        %1897 = vmatprep.subr.mxu0 0.0
        %1898 = vmatpush1.msra.mxu0 0.0
        %1899 = vmatprep.subr.mxu0 0.0
        %1900 = vmatpush1.msra.mxu0 0.0
        %1901 = vmatprep.subr.mxu0 0.0
        %1902 = vmatpush1.msra.mxu0 0.0
        %1903 = vmatprep.subr.mxu0 0.0
        %1904 = vmatpush1.msra.mxu0 0.0
        %1905 = vmatprep.mubr.f32.mxu0 0.0
        %1906 = vmatmul.mubr.f32.gmra.mrb[0].mxu0 %v1806
        %v1907 = vpop.f32.mrb[0].mxu0
        %v1908 = vadd.f32 0.0, %v1907
        %v1909 = vpop.f32.mrb[0].mxu0
        %v1910 = vadd.f32 0.0, %v1909
        %1911 = vmatprep.mubr.f32.mxu0 0.0
        %1912 = vmatmul.mubr.f32.gmra.mrb[0].mxu0 %v1807
        %v1913 = vpop.f32.mrb[0].mxu0
        %v1914 = vadd.f32 0.0, %v1913
        %v1915 = vpop.f32.mrb[0].mxu0
        %v1916 = vadd.f32 0.0, %v1915
        %1917 = vdwg.mxu0
        %1918 = vmatprep.subr.mxu0 %v1775
        %1919 = vmatpush1.msra.mxu0 %v1774
        %1920 = vmatprep.subr.mxu0 %v1777
        %1921 = vmatpush1.msra.mxu0 %v1776
        %1922 = vmatprep.subr.mxu0 %v1779
        %1923 = vmatpush1.msra.mxu0 %v1778
        %1924 = vmatprep.subr.mxu0 %v1781
        %1925 = vmatpush1.msra.mxu0 %v1780
        %1926 = vmatprep.subr.mxu0 %v1783
        %1927 = vmatpush1.msra.mxu0 %v1782
        %1928 = vmatprep.subr.mxu0 %v1785
        %1929 = vmatpush1.msra.mxu0 %v1784
        %1930 = vmatprep.subr.mxu0 %v1787
        %1931 = vmatpush1.msra.mxu0 %v1786
        %1932 = vmatprep.subr.mxu0 %v1789
        %1933 = vmatpush1.msra.mxu0 %v1788
        %1934 = vmatprep.subr.mxu0 %v1791
        %1935 = vmatpush1.msra.mxu0 %v1790
        %1936 = vmatprep.subr.mxu0 %v1793
        %1937 = vmatpush1.msra.mxu0 %v1792
        %1938 = vmatprep.subr.mxu0 %v1795
        %1939 = vmatpush1.msra.mxu0 %v1794
        %1940 = vmatprep.subr.mxu0 %v1797
        %1941 = vmatpush1.msra.mxu0 %v1796
        %1942 = vmatprep.subr.mxu0 %v1799
        %1943 = vmatpush1.msra.mxu0 %v1798
        %1944 = vmatprep.subr.mxu0 %v1801
        %1945 = vmatpush1.msra.mxu0 %v1800
        %1946 = vmatprep.subr.mxu0 %v1803
        %1947 = vmatpush1.msra.mxu0 %v1802
        %1948 = vmatprep.subr.mxu0 %v1805
        %1949 = vmatpush1.msra.mxu0 %v1804
        %1950 = vmatprep.subr.mxu0 0.0
        %1951 = vmatpush1.msra.mxu0 0.0
        %1952 = vmatprep.subr.mxu0 0.0
        %1953 = vmatpush1.msra.mxu0 0.0
        %1954 = vmatprep.subr.mxu0 0.0
        %1955 = vmatpush1.msra.mxu0 0.0
        %1956 = vmatprep.subr.mxu0 0.0
        %1957 = vmatpush1.msra.mxu0 0.0
        %1958 = vmatprep.subr.mxu0 0.0
        %1959 = vmatpush1.msra.mxu0 0.0
        %1960 = vmatprep.subr.mxu0 0.0
        %1961 = vmatpush1.msra.mxu0 0.0
        %1962 = vmatprep.subr.mxu0 0.0
        %1963 = vmatpush1.msra.mxu0 0.0
        %1964 = vmatprep.subr.mxu0 0.0
        %1965 = vmatpush1.msra.mxu0 0.0
        %1966 = vmatprep.subr.mxu0 0.0
        %1967 = vmatpush1.msra.mxu0 0.0
        %1968 = vmatprep.subr.mxu0 0.0
        %1969 = vmatpush1.msra.mxu0 0.0
        %1970 = vmatprep.subr.mxu0 0.0
        %1971 = vmatpush1.msra.mxu0 0.0
        %1972 = vmatprep.subr.mxu0 0.0
        %1973 = vmatpush1.msra.mxu0 0.0
        %1974 = vmatprep.subr.mxu0 0.0
        %1975 = vmatpush1.msra.mxu0 0.0
        %1976 = vmatprep.subr.mxu0 0.0
        %1977 = vmatpush1.msra.mxu0 0.0
        %1978 = vmatprep.subr.mxu0 0.0
        %1979 = vmatpush1.msra.mxu0 0.0
        %1980 = vmatprep.subr.mxu0 0.0
        %1981 = vmatpush1.msra.mxu0 0.0
        %1982 = vmatprep.mubr.f32.mxu0 0.0
        %1983 = vmatmul.mubr.f32.gmra.mrb[0].mxu0 %v1772
        %v1984 = vpop.f32.mrb[0].mxu0
        %v1985 = vadd.f32 %v1908, %v1984
        %v1986 = vpop.f32.mrb[0].mxu0
        %v1987 = vadd.f32 %v1910, %v1986
        %1988 = vmatprep.mubr.f32.mxu0 0.0
        %1989 = vmatmul.mubr.f32.gmra.mrb[0].mxu0 %v1773
        %v1990 = vpop.f32.mrb[0].mxu0
        %v1991 = vadd.f32 %v1914, %v1990
        %v1992 = vpop.f32.mrb[0].mxu0
        %v1993 = vadd.f32 %v1916, %v1992
        %1994 = vdwg.mxu0
        %v1995 = vld [vmem:[#allocation3 + $0x9] sm:$0xff]
        %v1996 = vld [vmem:[#allocation3 + $0x11] sm:$0xff]
        %s1997 = scalar_lea.vmem [#allocation10], 512
        %v1998 = vld [vmem:[%s1997] sm:$0xff]
        %v1999 = vld [vmem:[%s1997 + $0x8] sm:$0xff]
        %v2000 = vld [vmem:[%s1997 + $0x10] sm:$0xff]
        %v2001 = vld [vmem:[%s1997 + $0x18] sm:$0xff]
        %v2002 = vld [vmem:[%s1997 + $0x20] sm:$0xff]
        %v2003 = vld [vmem:[%s1997 + $0x28] sm:$0xff]
        %v2004 = vld [vmem:[%s1997 + $0x30] sm:$0xff]
        %v2005 = vld [vmem:[%s1997 + $0x38] sm:$0xff]
        %v2006 = vld [vmem:[%s1997 + $0x40] sm:$0xff]
        %v2007 = vld [vmem:[%s1997 + $0x48] sm:$0xff]
        %v2008 = vld [vmem:[%s1997 + $0x50] sm:$0xff]
        %v2009 = vld [vmem:[%s1997 + $0x58] sm:$0xff]
        %v2010 = vld [vmem:[%s1997 + $0x60] sm:$0xff]
        %v2011 = vld [vmem:[%s1997 + $0x68] sm:$0xff]
        %v2012 = vld [vmem:[%s1997 + $0x70] sm:$0xff]
        %v2013 = vld [vmem:[%s1997 + $0x78] sm:$0xff]
        %v2014 = vld [vmem:[%s1997 + $0x80] sm:$0xff]
        %v2015 = vld [vmem:[%s1997 + $0x88] sm:$0xff]
        %v2016 = vld [vmem:[%s1997 + $0x90] sm:$0xff]
        %v2017 = vld [vmem:[%s1997 + $0x98] sm:$0xff]
        %v2018 = vld [vmem:[%s1997 + $0xa0] sm:$0xff]
        %v2019 = vld [vmem:[%s1997 + $0xa8] sm:$0xff]
        %v2020 = vld [vmem:[%s1997 + $0xb0] sm:$0xff]
        %v2021 = vld [vmem:[%s1997 + $0xb8] sm:$0xff]
        %v2022 = vld [vmem:[%s1997 + $0xc0] sm:$0xff]
        %v2023 = vld [vmem:[%s1997 + $0xc8] sm:$0xff]
        %v2024 = vld [vmem:[%s1997 + $0xd0] sm:$0xff]
        %v2025 = vld [vmem:[%s1997 + $0xd8] sm:$0xff]
        %v2026 = vld [vmem:[%s1997 + $0xe0] sm:$0xff]
        %v2027 = vld [vmem:[%s1997 + $0xe8] sm:$0xff]
        %v2028 = vld [vmem:[%s1997 + $0xf0] sm:$0xff]
        %v2029 = vld [vmem:[%s1997 + $0xf8] sm:$0xff]
        %2030 = vmatprep.subr.mxu0 %v1999
        %2031 = vmatpush1.msra.mxu0 %v1998
        %2032 = vmatprep.subr.mxu0 %v2001
        %2033 = vmatpush1.msra.mxu0 %v2000
        %2034 = vmatprep.subr.mxu0 %v2003
        %2035 = vmatpush1.msra.mxu0 %v2002
        %2036 = vmatprep.subr.mxu0 %v2005
        %2037 = vmatpush1.msra.mxu0 %v2004
        %2038 = vmatprep.subr.mxu0 %v2007
        %2039 = vmatpush1.msra.mxu0 %v2006
        %2040 = vmatprep.subr.mxu0 %v2009
        %2041 = vmatpush1.msra.mxu0 %v2008
        %2042 = vmatprep.subr.mxu0 %v2011
        %2043 = vmatpush1.msra.mxu0 %v2010
        %2044 = vmatprep.subr.mxu0 %v2013
        %2045 = vmatpush1.msra.mxu0 %v2012
        %2046 = vmatprep.subr.mxu0 %v2015
        %2047 = vmatpush1.msra.mxu0 %v2014
        %2048 = vmatprep.subr.mxu0 %v2017
        %2049 = vmatpush1.msra.mxu0 %v2016
        %2050 = vmatprep.subr.mxu0 %v2019
        %2051 = vmatpush1.msra.mxu0 %v2018
        %2052 = vmatprep.subr.mxu0 %v2021
        %2053 = vmatpush1.msra.mxu0 %v2020
        %2054 = vmatprep.subr.mxu0 %v2023
        %2055 = vmatpush1.msra.mxu0 %v2022
        %2056 = vmatprep.subr.mxu0 %v2025
        %2057 = vmatpush1.msra.mxu0 %v2024
        %2058 = vmatprep.subr.mxu0 %v2027
        %2059 = vmatpush1.msra.mxu0 %v2026
        %2060 = vmatprep.subr.mxu0 %v2029
        %2061 = vmatpush1.msra.mxu0 %v2028
        %2062 = vmatprep.subr.mxu0 0.0
        %2063 = vmatpush1.msra.mxu0 0.0
        %2064 = vmatprep.subr.mxu0 0.0
        %2065 = vmatpush1.msra.mxu0 0.0
        %2066 = vmatprep.subr.mxu0 0.0
        %2067 = vmatpush1.msra.mxu0 0.0
        %2068 = vmatprep.subr.mxu0 0.0
        %2069 = vmatpush1.msra.mxu0 0.0
        %2070 = vmatprep.subr.mxu0 0.0
        %2071 = vmatpush1.msra.mxu0 0.0
        %2072 = vmatprep.subr.mxu0 0.0
        %2073 = vmatpush1.msra.mxu0 0.0
        %2074 = vmatprep.subr.mxu0 0.0
        %2075 = vmatpush1.msra.mxu0 0.0
        %2076 = vmatprep.subr.mxu0 0.0
        %2077 = vmatpush1.msra.mxu0 0.0
        %2078 = vmatprep.subr.mxu0 0.0
        %2079 = vmatpush1.msra.mxu0 0.0
        %2080 = vmatprep.subr.mxu0 0.0
        %2081 = vmatpush1.msra.mxu0 0.0
        %2082 = vmatprep.subr.mxu0 0.0
        %2083 = vmatpush1.msra.mxu0 0.0
        %2084 = vmatprep.subr.mxu0 0.0
        %2085 = vmatpush1.msra.mxu0 0.0
        %2086 = vmatprep.subr.mxu0 0.0
        %2087 = vmatpush1.msra.mxu0 0.0
        %2088 = vmatprep.subr.mxu0 0.0
        %2089 = vmatpush1.msra.mxu0 0.0
        %2090 = vmatprep.subr.mxu0 0.0
        %2091 = vmatpush1.msra.mxu0 0.0
        %2092 = vmatprep.subr.mxu0 0.0
        %2093 = vmatpush1.msra.mxu0 0.0
        %2094 = vmatprep.mubr.f32.mxu0 0.0
        %2095 = vmatmul.mubr.f32.gmra.mrb[0].mxu0 %v1995
        %v2096 = vpop.f32.mrb[0].mxu0
        %v2097 = vadd.f32 0.0, %v2096
        %v2098 = vpop.f32.mrb[0].mxu0
        %v2099 = vadd.f32 0.0, %v2098
        %2100 = vmatprep.mubr.f32.mxu0 0.0
        %2101 = vmatmul.mubr.f32.gmra.mrb[0].mxu0 %v1996
        %v2102 = vpop.f32.mrb[0].mxu0
        %v2103 = vadd.f32 0.0, %v2102
        %v2104 = vpop.f32.mrb[0].mxu0
        %v2105 = vadd.f32 0.0, %v2104
        %2106 = vdwg.mxu0
        %v2107 = vadd.f32 %v1985, %v2097
        %v2108 = vadd.f32 %v1987, %v2099
        %v2109 = vadd.f32 %v1991, %v2103
        %v2110 = vadd.f32 %v1993, %v2105
        %v2111 = vld [vmem:[%s9] sm:$0x3]
        %v2113 = vlaneseq
        %v2114 = vshrl.u32 %v2113, 7
        %v2115 = vsub.s32 0, %v2114
        %v2116 = vrot.slane %v2111, %v2115
        %v2117 = vlaneseq
        %v2118 = vshrl.u32 %v2117, 7
        %v2119 = vsub.s32 1, %v2118
        %v2120 = vrot.slane %v2111, %v2119
        %v2123 = vadd.f32 %v2107, %v2116
        %v2124 = vadd.f32 %v2108, %v2120
        %v2125 = vadd.f32 %v2109, %v2116
        %v2126 = vadd.f32 %v2110, %v2120
        %v2127 = vmax.f32 %v2123, 0.0
        %v2128 = vmax.f32 %v2124, 0.0
        %v2129 = vmax.f32 %v2125, 0.0
        %v2130 = vmax.f32 %v2126, 0.0
        %v2131 = vlaneseq
        %vm2132 = vcmp.ge.s32.totalorder %v2131, 0
        %vm2133 = vcmp.lt.s32.totalorder %v2131, 256
        %vm2134 = vmand %vm2132, %vm2133
        %s2135 = scalar_lea.vmem [#allocation4], 7
        %2136 = vst.msk [vmem:[%s2135] ss:$8 sm:$0x3] %vm2134, 0.0
        %2137 = vst.msk [vmem:[%s2135] ss:$8 sm:$0x0] %vm2134, 0.0
        %s2138 = scalar_lea.vmem [#allocation4], 48
        %2139 = vst.msk [vmem:[%s2138] ss:$8 sm:$0x3] %vm2134, 0.0
        %2140 = vst.msk [vmem:[%s2138] ss:$8 sm:$0x0] %vm2134, 0.0
        %2141 = vst [vmem:[#allocation4 + $0x10] sm:$0xff] %v2127
        %2142 = vst [vmem:[#allocation4 + $0x18] sm:$0xff] %v2128
        %2143 = vst [vmem:[#allocation4 + $0x20] sm:$0xff] %v2129
        %2144 = vst [vmem:[#allocation4 + $0x28] sm:$0xff] %v2130
        %v2145 = vld [vmem:[#allocation4] sm:$0x80]
        %v2146 = vld [vmem:[#allocation4 + $0x8] sm:$0x80]
        %v2147 = vld [vmem:[#allocation4 + $0x10] sm:$0xff]
        %v2148 = vld [vmem:[#allocation4 + $0x18] sm:$0xff]
        %v2149 = vld [vmem:[#allocation4 + $0x20] sm:$0x7f]
        %v2150 = vld [vmem:[#allocation4 + $0x28] sm:$0x7f]
        %v2151 = vld [vmem:[#allocation11] sm:$0xff]
        %v2152 = vld [vmem:[#allocation11 + $0x8] sm:$0xff]
        %v2153 = vld [vmem:[#allocation11 + $0x10] sm:$0xff]
        %v2154 = vld [vmem:[#allocation11 + $0x18] sm:$0xff]
        %v2155 = vld [vmem:[#allocation11 + $0x20] sm:$0xff]
        %v2156 = vld [vmem:[#allocation11 + $0x28] sm:$0xff]
        %v2157 = vld [vmem:[#allocation11 + $0x30] sm:$0xff]
        %v2158 = vld [vmem:[#allocation11 + $0x38] sm:$0xff]
        %v2159 = vld [vmem:[#allocation11 + $0x40] sm:$0xff]
        %v2160 = vld [vmem:[#allocation11 + $0x48] sm:$0xff]
        %v2161 = vld [vmem:[#allocation11 + $0x50] sm:$0xff]
        %v2162 = vld [vmem:[#allocation11 + $0x58] sm:$0xff]
        %v2163 = vld [vmem:[#allocation11 + $0x60] sm:$0xff]
        %v2164 = vld [vmem:[#allocation11 + $0x68] sm:$0xff]
        %v2165 = vld [vmem:[#allocation11 + $0x70] sm:$0xff]
        %v2166 = vld [vmem:[#allocation11 + $0x78] sm:$0xff]
        %v2167 = vld [vmem:[#allocation11 + $0x80] sm:$0xff]
        %v2168 = vld [vmem:[#allocation11 + $0x88] sm:$0xff]
        %v2169 = vld [vmem:[#allocation11 + $0x90] sm:$0xff]
        %v2170 = vld [vmem:[#allocation11 + $0x98] sm:$0xff]
        %v2171 = vld [vmem:[#allocation11 + $0xa0] sm:$0xff]
        %v2172 = vld [vmem:[#allocation11 + $0xa8] sm:$0xff]
        %v2173 = vld [vmem:[#allocation11 + $0xb0] sm:$0xff]
        %v2174 = vld [vmem:[#allocation11 + $0xb8] sm:$0xff]
        %v2175 = vld [vmem:[#allocation11 + $0xc0] sm:$0xff]
        %v2176 = vld [vmem:[#allocation11 + $0xc8] sm:$0xff]
        %v2177 = vld [vmem:[#allocation11 + $0xd0] sm:$0xff]
        %v2178 = vld [vmem:[#allocation11 + $0xd8] sm:$0xff]
        %v2179 = vld [vmem:[#allocation11 + $0xe0] sm:$0xff]
        %v2180 = vld [vmem:[#allocation11 + $0xe8] sm:$0xff]
        %v2181 = vld [vmem:[#allocation11 + $0xf0] sm:$0xff]
        %v2182 = vld [vmem:[#allocation11 + $0xf8] sm:$0xff]
        %v2183 = vld [vmem:[#allocation4 + $0x20] sm:$0xff]
        %v2184 = vld [vmem:[#allocation4 + $0x28] sm:$0xff]
        %s2185 = scalar_lea.vmem [#allocation11], 256
        %v2186 = vld [vmem:[%s2185] sm:$0xff]
        %v2187 = vld [vmem:[%s2185 + $0x8] sm:$0xff]
        %v2188 = vld [vmem:[%s2185 + $0x10] sm:$0xff]
        %v2189 = vld [vmem:[%s2185 + $0x18] sm:$0xff]
        %v2190 = vld [vmem:[%s2185 + $0x20] sm:$0xff]
        %v2191 = vld [vmem:[%s2185 + $0x28] sm:$0xff]
        %v2192 = vld [vmem:[%s2185 + $0x30] sm:$0xff]
        %v2193 = vld [vmem:[%s2185 + $0x38] sm:$0xff]
        %v2194 = vld [vmem:[%s2185 + $0x40] sm:$0xff]
        %v2195 = vld [vmem:[%s2185 + $0x48] sm:$0xff]
        %v2196 = vld [vmem:[%s2185 + $0x50] sm:$0xff]
        %v2197 = vld [vmem:[%s2185 + $0x58] sm:$0xff]
        %v2198 = vld [vmem:[%s2185 + $0x60] sm:$0xff]
        %v2199 = vld [vmem:[%s2185 + $0x68] sm:$0xff]
        %v2200 = vld [vmem:[%s2185 + $0x70] sm:$0xff]
        %v2201 = vld [vmem:[%s2185 + $0x78] sm:$0xff]
        %v2202 = vld [vmem:[%s2185 + $0x80] sm:$0xff]
        %v2203 = vld [vmem:[%s2185 + $0x88] sm:$0xff]
        %v2204 = vld [vmem:[%s2185 + $0x90] sm:$0xff]
        %v2205 = vld [vmem:[%s2185 + $0x98] sm:$0xff]
        %v2206 = vld [vmem:[%s2185 + $0xa0] sm:$0xff]
        %v2207 = vld [vmem:[%s2185 + $0xa8] sm:$0xff]
        %v2208 = vld [vmem:[%s2185 + $0xb0] sm:$0xff]
        %v2209 = vld [vmem:[%s2185 + $0xb8] sm:$0xff]
        %v2210 = vld [vmem:[%s2185 + $0xc0] sm:$0xff]
        %v2211 = vld [vmem:[%s2185 + $0xc8] sm:$0xff]
        %v2212 = vld [vmem:[%s2185 + $0xd0] sm:$0xff]
        %v2213 = vld [vmem:[%s2185 + $0xd8] sm:$0xff]
        %v2214 = vld [vmem:[%s2185 + $0xe0] sm:$0xff]
        %v2215 = vld [vmem:[%s2185 + $0xe8] sm:$0xff]
        %v2216 = vld [vmem:[%s2185 + $0xf0] sm:$0xff]
        %v2217 = vld [vmem:[%s2185 + $0xf8] sm:$0xff]
        %2218 = vmatprep.subr.mxu0 0.0
        %2219 = vmatpush1.msra.mxu0 %v2186
        %2220 = vmatprep.subr.mxu0 0.0
        %2221 = vmatpush1.msra.mxu0 %v2187
        %2222 = vmatprep.subr.mxu0 0.0
        %2223 = vmatpush1.msra.mxu0 %v2188
        %2224 = vmatprep.subr.mxu0 0.0
        %2225 = vmatpush1.msra.mxu0 %v2189
        %2226 = vmatprep.subr.mxu0 0.0
        %2227 = vmatpush1.msra.mxu0 %v2190
        %2228 = vmatprep.subr.mxu0 0.0
        %2229 = vmatpush1.msra.mxu0 %v2191
        %2230 = vmatprep.subr.mxu0 0.0
        %2231 = vmatpush1.msra.mxu0 %v2192
        %2232 = vmatprep.subr.mxu0 0.0
        %2233 = vmatpush1.msra.mxu0 %v2193
        %2234 = vmatprep.subr.mxu0 0.0
        %2235 = vmatpush1.msra.mxu0 %v2194
        %2236 = vmatprep.subr.mxu0 0.0
        %2237 = vmatpush1.msra.mxu0 %v2195
        %2238 = vmatprep.subr.mxu0 0.0
        %2239 = vmatpush1.msra.mxu0 %v2196
        %2240 = vmatprep.subr.mxu0 0.0
        %2241 = vmatpush1.msra.mxu0 %v2197
        %2242 = vmatprep.subr.mxu0 0.0
        %2243 = vmatpush1.msra.mxu0 %v2198
        %2244 = vmatprep.subr.mxu0 0.0
        %2245 = vmatpush1.msra.mxu0 %v2199
        %2246 = vmatprep.subr.mxu0 0.0
        %2247 = vmatpush1.msra.mxu0 %v2200
        %2248 = vmatprep.subr.mxu0 0.0
        %2249 = vmatpush1.msra.mxu0 %v2201
        %2250 = vmatprep.subr.mxu0 0.0
        %2251 = vmatpush1.msra.mxu0 %v2202
        %2252 = vmatprep.subr.mxu0 0.0
        %2253 = vmatpush1.msra.mxu0 %v2203
        %2254 = vmatprep.subr.mxu0 0.0
        %2255 = vmatpush1.msra.mxu0 %v2204
        %2256 = vmatprep.subr.mxu0 0.0
        %2257 = vmatpush1.msra.mxu0 %v2205
        %2258 = vmatprep.subr.mxu0 0.0
        %2259 = vmatpush1.msra.mxu0 %v2206
        %2260 = vmatprep.subr.mxu0 0.0
        %2261 = vmatpush1.msra.mxu0 %v2207
        %2262 = vmatprep.subr.mxu0 0.0
        %2263 = vmatpush1.msra.mxu0 %v2208
        %2264 = vmatprep.subr.mxu0 0.0
        %2265 = vmatpush1.msra.mxu0 %v2209
        %2266 = vmatprep.subr.mxu0 0.0
        %2267 = vmatpush1.msra.mxu0 %v2210
        %2268 = vmatprep.subr.mxu0 0.0
        %2269 = vmatpush1.msra.mxu0 %v2211
        %2270 = vmatprep.subr.mxu0 0.0
        %2271 = vmatpush1.msra.mxu0 %v2212
        %2272 = vmatprep.subr.mxu0 0.0
        %2273 = vmatpush1.msra.mxu0 %v2213
        %2274 = vmatprep.subr.mxu0 0.0
        %2275 = vmatpush1.msra.mxu0 %v2214
        %2276 = vmatprep.subr.mxu0 0.0
        %2277 = vmatpush1.msra.mxu0 %v2215
        %2278 = vmatprep.subr.mxu0 0.0
        %2279 = vmatpush1.msra.mxu0 %v2216
        %2280 = vmatprep.subr.mxu0 0.0
        %2281 = vmatpush1.msra.mxu0 %v2217
        %2282 = vmatprep.mubr.f32.mxu0 %v2148
        %2283 = vmatmul.mubr.f32.gmra.mrb[0].mxu0 %v2147
        %v2284 = vpop.f32.mrb[0].mxu0
        %v2285 = vadd.f32 0.0, %v2284
        %v2286 = vpop.f32.mrb[0].mxu0
        %2287 = vmatprep.mubr.f32.mxu0 %v2184
        %2288 = vmatmul.mubr.f32.gmra.mrb[0].mxu0 %v2183
        %v2289 = vpop.f32.mrb[0].mxu0
        %v2290 = vadd.f32 0.0, %v2289
        %v2291 = vpop.f32.mrb[0].mxu0
        %2292 = vdwg.mxu0
        %vm2299 = vcmask 1040384
        %v2300 = vrot.slane %v2145, 7
        %v2301 = vrot.slane %v2147, 7
        %v2302 = vsel %vm2299, %v2300, %v2301
        %v2303 = vrot.slane %v2146, 7
        %v2304 = vrot.slane %v2148, 7
        %v2305 = vsel %vm2299, %v2303, %v2304
        %v2306 = vrot.slane %v2149, 7
        %v2307 = vsel %vm2299, %v2301, %v2306
        %v2308 = vrot.slane %v2150, 7
        %v2309 = vsel %vm2299, %v2304, %v2308
        %2314 = vmatprep.subr.mxu0 0.0
        %2315 = vmatpush1.msra.mxu0 %v2151
        %2316 = vmatprep.subr.mxu0 0.0
        %2317 = vmatpush1.msra.mxu0 %v2152
        %2318 = vmatprep.subr.mxu0 0.0
        %2319 = vmatpush1.msra.mxu0 %v2153
        %2320 = vmatprep.subr.mxu0 0.0
        %2321 = vmatpush1.msra.mxu0 %v2154
        %2322 = vmatprep.subr.mxu0 0.0
        %2323 = vmatpush1.msra.mxu0 %v2155
        %2324 = vmatprep.subr.mxu0 0.0
        %2325 = vmatpush1.msra.mxu0 %v2156
        %2326 = vmatprep.subr.mxu0 0.0
        %2327 = vmatpush1.msra.mxu0 %v2157
        %2328 = vmatprep.subr.mxu0 0.0
        %2329 = vmatpush1.msra.mxu0 %v2158
        %2330 = vmatprep.subr.mxu0 0.0
        %2331 = vmatpush1.msra.mxu0 %v2159
        %2332 = vmatprep.subr.mxu0 0.0
        %2333 = vmatpush1.msra.mxu0 %v2160
        %2334 = vmatprep.subr.mxu0 0.0
        %2335 = vmatpush1.msra.mxu0 %v2161
        %2336 = vmatprep.subr.mxu0 0.0
        %2337 = vmatpush1.msra.mxu0 %v2162
        %2338 = vmatprep.subr.mxu0 0.0
        %2339 = vmatpush1.msra.mxu0 %v2163
        %2340 = vmatprep.subr.mxu0 0.0
        %2341 = vmatpush1.msra.mxu0 %v2164
        %2342 = vmatprep.subr.mxu0 0.0
        %2343 = vmatpush1.msra.mxu0 %v2165
        %2344 = vmatprep.subr.mxu0 0.0
        %2345 = vmatpush1.msra.mxu0 %v2166
        %2346 = vmatprep.subr.mxu0 0.0
        %2347 = vmatpush1.msra.mxu0 %v2167
        %2348 = vmatprep.subr.mxu0 0.0
        %2349 = vmatpush1.msra.mxu0 %v2168
        %2350 = vmatprep.subr.mxu0 0.0
        %2351 = vmatpush1.msra.mxu0 %v2169
        %2352 = vmatprep.subr.mxu0 0.0
        %2353 = vmatpush1.msra.mxu0 %v2170
        %2354 = vmatprep.subr.mxu0 0.0
        %2355 = vmatpush1.msra.mxu0 %v2171
        %2356 = vmatprep.subr.mxu0 0.0
        %2357 = vmatpush1.msra.mxu0 %v2172
        %2358 = vmatprep.subr.mxu0 0.0
        %2359 = vmatpush1.msra.mxu0 %v2173
        %2360 = vmatprep.subr.mxu0 0.0
        %2361 = vmatpush1.msra.mxu0 %v2174
        %2362 = vmatprep.subr.mxu0 0.0
        %2363 = vmatpush1.msra.mxu0 %v2175
        %2364 = vmatprep.subr.mxu0 0.0
        %2365 = vmatpush1.msra.mxu0 %v2176
        %2366 = vmatprep.subr.mxu0 0.0
        %2367 = vmatpush1.msra.mxu0 %v2177
        %2368 = vmatprep.subr.mxu0 0.0
        %2369 = vmatpush1.msra.mxu0 %v2178
        %2370 = vmatprep.subr.mxu0 0.0
        %2371 = vmatpush1.msra.mxu0 %v2179
        %2372 = vmatprep.subr.mxu0 0.0
        %2373 = vmatpush1.msra.mxu0 %v2180
        %2374 = vmatprep.subr.mxu0 0.0
        %2375 = vmatpush1.msra.mxu0 %v2181
        %2376 = vmatprep.subr.mxu0 0.0
        %2377 = vmatpush1.msra.mxu0 %v2182
        %2378 = vmatprep.mubr.f32.mxu0 %v2305
        %2379 = vmatmul.mubr.f32.gmra.mrb[0].mxu0 %v2302
        %v2380 = vpop.f32.mrb[0].mxu0
        %v2381 = vadd.f32 %v2285, %v2380
        %v2382 = vpop.f32.mrb[0].mxu0
        %2383 = vmatprep.mubr.f32.mxu0 %v2309
        %2384 = vmatmul.mubr.f32.gmra.mrb[0].mxu0 %v2307
        %v2385 = vpop.f32.mrb[0].mxu0
        %v2386 = vadd.f32 %v2290, %v2385
        %v2387 = vpop.f32.mrb[0].mxu0
        %2388 = vdwg.mxu0
        %v2389 = vld [vmem:[#allocation4 + $0x10] sm:$0xfe]
        %v2390 = vld [vmem:[#allocation4 + $0x18] sm:$0xfe]
        %v2391 = vld [vmem:[#allocation4 + $0x20] sm:$0xff]
        %v2392 = vld [vmem:[#allocation4 + $0x28] sm:$0xff]
        %v2393 = vld [vmem:[#allocation4 + $0x30] sm:$0x1]
        %v2394 = vld [vmem:[#allocation4 + $0x38] sm:$0x1]
        %s2395 = scalar_lea.vmem [#allocation11], 512
        %v2396 = vld [vmem:[%s2395] sm:$0xff]
        %v2397 = vld [vmem:[%s2395 + $0x8] sm:$0xff]
        %v2398 = vld [vmem:[%s2395 + $0x10] sm:$0xff]
        %v2399 = vld [vmem:[%s2395 + $0x18] sm:$0xff]
        %v2400 = vld [vmem:[%s2395 + $0x20] sm:$0xff]
        %v2401 = vld [vmem:[%s2395 + $0x28] sm:$0xff]
        %v2402 = vld [vmem:[%s2395 + $0x30] sm:$0xff]
        %v2403 = vld [vmem:[%s2395 + $0x38] sm:$0xff]
        %v2404 = vld [vmem:[%s2395 + $0x40] sm:$0xff]
        %v2405 = vld [vmem:[%s2395 + $0x48] sm:$0xff]
        %v2406 = vld [vmem:[%s2395 + $0x50] sm:$0xff]
        %v2407 = vld [vmem:[%s2395 + $0x58] sm:$0xff]
        %v2408 = vld [vmem:[%s2395 + $0x60] sm:$0xff]
        %v2409 = vld [vmem:[%s2395 + $0x68] sm:$0xff]
        %v2410 = vld [vmem:[%s2395 + $0x70] sm:$0xff]
        %v2411 = vld [vmem:[%s2395 + $0x78] sm:$0xff]
        %v2412 = vld [vmem:[%s2395 + $0x80] sm:$0xff]
        %v2413 = vld [vmem:[%s2395 + $0x88] sm:$0xff]
        %v2414 = vld [vmem:[%s2395 + $0x90] sm:$0xff]
        %v2415 = vld [vmem:[%s2395 + $0x98] sm:$0xff]
        %v2416 = vld [vmem:[%s2395 + $0xa0] sm:$0xff]
        %v2417 = vld [vmem:[%s2395 + $0xa8] sm:$0xff]
        %v2418 = vld [vmem:[%s2395 + $0xb0] sm:$0xff]
        %v2419 = vld [vmem:[%s2395 + $0xb8] sm:$0xff]
        %v2420 = vld [vmem:[%s2395 + $0xc0] sm:$0xff]
        %v2421 = vld [vmem:[%s2395 + $0xc8] sm:$0xff]
        %v2422 = vld [vmem:[%s2395 + $0xd0] sm:$0xff]
        %v2423 = vld [vmem:[%s2395 + $0xd8] sm:$0xff]
        %v2424 = vld [vmem:[%s2395 + $0xe0] sm:$0xff]
        %v2425 = vld [vmem:[%s2395 + $0xe8] sm:$0xff]
        %v2426 = vld [vmem:[%s2395 + $0xf0] sm:$0xff]
        %v2427 = vld [vmem:[%s2395 + $0xf8] sm:$0xff]
        %vm2434 = vcmask 1046528
        %v2435 = vrot.slane %v2389, 1
        %v2436 = vrot.slane %v2391, 1
        %v2437 = vsel %vm2434, %v2435, %v2436
        %v2438 = vrot.slane %v2390, 1
        %v2439 = vrot.slane %v2392, 1
        %v2440 = vsel %vm2434, %v2438, %v2439
        %v2441 = vrot.slane %v2393, 1
        %v2442 = vsel %vm2434, %v2436, %v2441
        %v2443 = vrot.slane %v2394, 1
        %v2444 = vsel %vm2434, %v2439, %v2443
        %2449 = vmatprep.subr.mxu0 0.0
        %2450 = vmatpush1.msra.mxu0 %v2396
        %2451 = vmatprep.subr.mxu0 0.0
        %2452 = vmatpush1.msra.mxu0 %v2397
        %2453 = vmatprep.subr.mxu0 0.0
        %2454 = vmatpush1.msra.mxu0 %v2398
        %2455 = vmatprep.subr.mxu0 0.0
        %2456 = vmatpush1.msra.mxu0 %v2399
        %2457 = vmatprep.subr.mxu0 0.0
        %2458 = vmatpush1.msra.mxu0 %v2400
        %2459 = vmatprep.subr.mxu0 0.0
        %2460 = vmatpush1.msra.mxu0 %v2401
        %2461 = vmatprep.subr.mxu0 0.0
        %2462 = vmatpush1.msra.mxu0 %v2402
        %2463 = vmatprep.subr.mxu0 0.0
        %2464 = vmatpush1.msra.mxu0 %v2403
        %2465 = vmatprep.subr.mxu0 0.0
        %2466 = vmatpush1.msra.mxu0 %v2404
        %2467 = vmatprep.subr.mxu0 0.0
        %2468 = vmatpush1.msra.mxu0 %v2405
        %2469 = vmatprep.subr.mxu0 0.0
        %2470 = vmatpush1.msra.mxu0 %v2406
        %2471 = vmatprep.subr.mxu0 0.0
        %2472 = vmatpush1.msra.mxu0 %v2407
        %2473 = vmatprep.subr.mxu0 0.0
        %2474 = vmatpush1.msra.mxu0 %v2408
        %2475 = vmatprep.subr.mxu0 0.0
        %2476 = vmatpush1.msra.mxu0 %v2409
        %2477 = vmatprep.subr.mxu0 0.0
        %2478 = vmatpush1.msra.mxu0 %v2410
        %2479 = vmatprep.subr.mxu0 0.0
        %2480 = vmatpush1.msra.mxu0 %v2411
        %2481 = vmatprep.subr.mxu0 0.0
        %2482 = vmatpush1.msra.mxu0 %v2412
        %2483 = vmatprep.subr.mxu0 0.0
        %2484 = vmatpush1.msra.mxu0 %v2413
        %2485 = vmatprep.subr.mxu0 0.0
        %2486 = vmatpush1.msra.mxu0 %v2414
        %2487 = vmatprep.subr.mxu0 0.0
        %2488 = vmatpush1.msra.mxu0 %v2415
        %2489 = vmatprep.subr.mxu0 0.0
        %2490 = vmatpush1.msra.mxu0 %v2416
        %2491 = vmatprep.subr.mxu0 0.0
        %2492 = vmatpush1.msra.mxu0 %v2417
        %2493 = vmatprep.subr.mxu0 0.0
        %2494 = vmatpush1.msra.mxu0 %v2418
        %2495 = vmatprep.subr.mxu0 0.0
        %2496 = vmatpush1.msra.mxu0 %v2419
        %2497 = vmatprep.subr.mxu0 0.0
        %2498 = vmatpush1.msra.mxu0 %v2420
        %2499 = vmatprep.subr.mxu0 0.0
        %2500 = vmatpush1.msra.mxu0 %v2421
        %2501 = vmatprep.subr.mxu0 0.0
        %2502 = vmatpush1.msra.mxu0 %v2422
        %2503 = vmatprep.subr.mxu0 0.0
        %2504 = vmatpush1.msra.mxu0 %v2423
        %2505 = vmatprep.subr.mxu0 0.0
        %2506 = vmatpush1.msra.mxu0 %v2424
        %2507 = vmatprep.subr.mxu0 0.0
        %2508 = vmatpush1.msra.mxu0 %v2425
        %2509 = vmatprep.subr.mxu0 0.0
        %2510 = vmatpush1.msra.mxu0 %v2426
        %2511 = vmatprep.subr.mxu0 0.0
        %2512 = vmatpush1.msra.mxu0 %v2427
        %2513 = vmatprep.mubr.f32.mxu0 %v2440
        %2514 = vmatmul.mubr.f32.gmra.mrb[0].mxu0 %v2437
        %v2515 = vpop.f32.mrb[0].mxu0
        %v2516 = vadd.f32 0.0, %v2515
        %v2517 = vpop.f32.mrb[0].mxu0
        %2518 = vmatprep.mubr.f32.mxu0 %v2444
        %2519 = vmatmul.mubr.f32.gmra.mrb[0].mxu0 %v2442
        %v2520 = vpop.f32.mrb[0].mxu0
        %v2521 = vadd.f32 0.0, %v2520
        %v2522 = vpop.f32.mrb[0].mxu0
        %2523 = vdwg.mxu0
        %v2524 = vadd.f32 %v2381, %v2516
        %v2525 = vadd.f32 %v2386, %v2521
        %v2526 = vld [vmem:[%s11] sm:$0x1]
        %v2528 = vlaneseq
        %v2529 = vshrl.u32 %v2528, 7
        %v2530 = vsub.s32 0, %v2529
        %v2531 = vrot.slane %v2526, %v2530
        %v2533 = vadd.f32 %v2524, %v2531
        %v2534 = vadd.f32 %v2525, %v2531
        %v2535 = vadd.f32 %v1766, %v2533
        %v2536 = vadd.f32 %v1767, %v2534
        %v2537 = vld [vmem:[%s12] sm:$0x1]
        %v2538 = vld [vmem:[%s13] sm:$0x1]
        %2539 = vadd.xlane.f32.xlu0 %v2535
        %v2540 = vpop.xlane.xlu0 %2539
        %2541 = vadd.xlane.f32.xlu0 %v2536
        %v2542 = vpop.xlane.xlu0 %2541
        %v2543 = vmul.f32 %v2540, %v1719
        %v2544 = vmul.f32 %v2542, %v1719
        %v2545 = vsub.f32 %v2535, %v2543
        %v2546 = vsub.f32 %v2536, %v2544
        %v2547 = vmul.f32 %v2545, %v2545
        %v2548 = vmul.f32 %v2546, %v2546
        %2549 = vadd.xlane.f32.xlu0 %v2547
        %v2550 = vpop.xlane.xlu0 %2549
        %2551 = vadd.xlane.f32.xlu0 %v2548
        %v2552 = vpop.xlane.xlu0 %2551
        %v2553 = vmul.f32 %v2550, %v1719
        %v2554 = vmul.f32 %v2552, %v1719
        %v2555 = vadd.f32 %v2553, 1e-05
        %v2556 = vadd.f32 %v2554, 1e-05
        %v2557 = vrsqrt.pop %v2555
        %v2558 = vrsqrt.pop %v2556
        %v2559 = vmul.f32 %v2545, %v2557
        %v2560 = vmul.f32 %v2546, %v2558
        %v2562 = vlaneseq
        %v2563 = vshrl.u32 %v2562, 7
        %v2564 = vsub.s32 0, %v2563
        %v2565 = vrot.slane %v2537, %v2564
        %v2567 = vmul.f32 %v2559, %v2565
        %v2568 = vmul.f32 %v2560, %v2565
        %v2570 = vlaneseq
        %v2571 = vshrl.u32 %v2570, 7
        %v2572 = vsub.s32 0, %v2571
        %v2573 = vrot.slane %v2538, %v2572
        %v2575 = vadd.f32 %v2567, %v2573
        %v2576 = vadd.f32 %v2568, %v2573
        %v2577 = vld [vmem:[%s558] sm:$0xff]
        %v2578 = vld [vmem:[%s558 + $0x8] sm:$0xff]
        %2580 = vset.pattern.permute.xlu0 0
        %2581 = vperm.xlu0 %2580, %v2577
        %v2582 = vpop.permute.xlu0 %2581
        %2585 = vset.pattern.permute.xlu0 0
        %2586 = vperm.xlu0 %2585, %v2578
        %v2587 = vpop.permute.xlu0 %2586
        %v2589 = vmul.f32 %v2575, %v2582
        %v2590 = vmul.f32 %v2576, %v2587
        %2591 = vst [vmem:[%s545] sm:$0xff] %v2589
        %2592 = vst [vmem:[%s545 + $0x8] sm:$0xff] %v2590
        %s2593 = sand.u32 %s348, 1
        %s2594 = scalar_lea.sflag [#allocation7], %s2593
        %s2595 = sand.u32 %s348, 1
        %s2596 = smul.addr %s2595, 16
        %s2597 = scalar_lea.vmem [#allocation13], %s2596
        // Predicated region
        $region93: #{transformer_layer_forward.1} parent=75 // pred_check
          %p2598 = pneg %p358
        $region94: #{transformer_layer_forward.1} parent=75 // pred_check_branch
          %2600 = sbr.rel (%p2598) target = $region96
        $region95: #{transformer_layer_forward.1} parent=75 // pred_region
          %s2602 = ssub.s32 256, 256
          %2603 = vsyncadd %s2594, %s2602
          %s2604 = smul.addr %s31, 2
          %s2605 = smul.addr %s2604, 128
          %s2606 = scalar_lea.hbm %s14, %s2605
          %s2607 = sshll.u32 %s2597, 4
          %s2608 = int_to_ptr.vmem [resolvable:$true] %s2607
          %2613 = dma.vmem_to_hbm [thread:$0]  %s2608, 256, %s2606, %s2594, 128, 128, 8
        $region96: #{transformer_layer_forward.1} parent=75 // pred_fallthru
          _
      $region76: #{transformer_layer_forward.1} parent=5 // pred_fallthru
        _
      %p2614 = scmp.le.s32.totalorder 2, %s26
      // Predicated region
      $region97: #{transformer_layer_forward.1} parent=5 // pred_check
        %p2615 = pneg %p2614
      $region98: #{transformer_layer_forward.1} parent=5 // pred_check_branch
        %2617 = sbr.rel (%p2615) target = $region100
      $region99: #{transformer_layer_forward.1} parent=5 // pred_region
        %s2618 = ssub.s32 %s26, 2
        // Predicated region
        $region101: #{transformer_layer_forward.1} parent=99 // pred_check
          %p2619 = pneg %p364
        $region102: #{transformer_layer_forward.1} parent=99 // pred_check_branch
          %2621 = sbr.rel (%p2619) target = $region104
        $region103: #{transformer_layer_forward.1} parent=99 // pred_region
          %s2622 = sand.u32 %s349, 1
          %s2623 = scalar_lea.sflag [#allocation7], %s2622
          %s2624 = sand.u32 %s349, 1
          %s2625 = smul.addr %s2624, 16
          %s2626 = scalar_lea.vmem [#allocation13], %s2625
          %2627 = dma.done %s2623, 256
        $region104: #{transformer_layer_forward.1} parent=99 // pred_fallthru
          _
      $region100: #{transformer_layer_forward.1} parent=5 // pred_fallthru
        _
    $region6: #{transformer_layer_forward.1} parent=1 // loop_footer
      %s30 = sadd.s32 1, %s26
    $region7: #{transformer_layer_forward.1} parent=1 // loop_footer_branch
      %25 = sbr.rel target = $region3
    $region8: #{transformer_layer_forward.1} parent=1 // loop_exit
      _
    %2628 = vsyncpa [#allocation6], 1
    %s2629 = scalar_lea.sflag [#allocation6], 1
    %2630 = vsyncpa %s2629, 1
    %2631 = vsyncpa [#allocation9], 1
    %2632 = vsyncpa [#allocation12], 1
    %2633 = vsyncpa [#allocation7], 1
    %s2634 = scalar_lea.sflag [#allocation7], 1
    %2635 = vsyncpa %s2634, 1

</llo_original>
